<compile_context>
chip_gen: v7x
topology: tpu7x:2x2x1
jax: 0.10.0
libtpu: 0.0.40
codegen_flags: <defaults>
</compile_context>

<pallas_src>
import functools

import jax
import jax.numpy as jnp
from jax import lax
from jax.experimental import pallas as pl
from jax.experimental.pallas import tpu as pltpu

LN_EPS = 1e-5                      # PyTorch nn.LayerNorm default
VMEM_LIMIT = 48 * 1024 * 1024      # explicit scoped-VMEM budget (fits v7x's 64 MiB physical)


# -----------------------------------------------------------------------------
# Small helpers
# -----------------------------------------------------------------------------
def _layer_norm(x, w, b, eps=LN_EPS):
    mean = jnp.mean(x, axis=-1, keepdims=True)
    var = jnp.mean(jnp.square(x - mean), axis=-1, keepdims=True)
    return (x - mean) * lax.rsqrt(var + eps) * w + b


def _pick_tile(n, candidates):
    """Largest candidate that properly divides n (so the axis really is tiled); else full n."""
    for c in candidates:
        if c < n and n % c == 0:
            return c
    return n


def _roll_lanes(t, shift):
    """Static roll along axis 1: result[:, c] = t[:, (c - shift) mod n]."""
    n = t.shape[1]
    i = (-shift) % n
    return jnp.concatenate([t[:, i:], t[:, :i]], axis=1)


def precompute_freqs(seq_len, n_elem, base=500000.0):
    """JAX port of precompute_freqs_cis; returns (cos, sin), each (seq_len, n_elem//2)."""
    idx = jnp.arange(0, n_elem, 2)[: n_elem // 2].astype(jnp.float32)
    freqs = 1.0 / (base ** (idx / n_elem))
    t = jnp.arange(seq_len, dtype=jnp.float32)
    angles = jnp.outer(t, freqs)
    return jnp.cos(angles), jnp.sin(angles)


def build_rope_tables(seq_len, d_head, n_heads, base=500000.0):
    """Full-width (seq, n_heads*d_head) RoPE tables so the kernel can rotate all heads at once:
         x_rot = x*cos_full + roll(x,+dh/2)*sin_fwd + roll(x,-dh/2)*sin_bwd
    which equals apply_rotary_emb's per-head split-half rotation."""
    cos, sin = precompute_freqs(seq_len, d_head, base)          # (seq, d_head//2) each
    zeros = jnp.zeros_like(sin)
    cos_full = jnp.tile(jnp.concatenate([cos, cos], axis=1), (1, n_heads))
    sin_fwd = jnp.tile(jnp.concatenate([zeros, sin], axis=1), (1, n_heads))   # 2nd half: +sin
    sin_bwd = jnp.tile(jnp.concatenate([-sin, zeros], axis=1), (1, n_heads))  # 1st half: -sin
    return cos_full, sin_fwd, sin_bwd


# -----------------------------------------------------------------------------
# Pallas kernels
# -----------------------------------------------------------------------------
def attention_block_kernel(x_ref, cosf_ref, sinf_ref, sinb_ref,
                           wqkv_ref, wo_ref, ln1w_ref, ln1b_ref,
                           out_ref, *, n_heads, d_head):
    """x + att_proj(causal_SDPA(RoPE(QKV(LN1(x))))) for one batch element."""
    S, D = x_ref.shape[1], x_ref.shape[2]
    dh2 = d_head // 2
    scale = 1.0 / (d_head ** 0.5)

    x = x_ref[0]                                        # (S, D) f32
    h1 = _layer_norm(x, ln1w_ref[0], ln1b_ref[0])       # f32 VPU math
    qkv = jnp.dot(h1.astype(jnp.bfloat16), wqkv_ref[...],
                  preferred_element_type=jnp.float32)   # bf16 MXU, f32 accumulation -> (S, 3D)
    q, k, v = qkv[:, :D], qkv[:, D:2 * D], qkv[:, 2 * D:]

    cosf, sinf, sinb = cosf_ref[...], sinf_ref[...], sinb_ref[...]

    def rope(t):   # rotates every head at once (no per-head RoPE), f32 math
        return (t * cosf
                + _roll_lanes(t, dh2) * sinf
                + _roll_lanes(t, -dh2) * sinb)

    qb = rope(q).astype(jnp.bfloat16)
    kb = rope(k).astype(jnp.bfloat16)
    vb = v.astype(jnp.bfloat16)

    # causal mask, built once (loop invariant)
    row = lax.broadcasted_iota(jnp.int32, (S, S), 0)
    col = lax.broadcasted_iota(jnp.int32, (S, S), 1)
    causal = col <= row

    dn = (((1,), (1,)), ((), ()))      # contract last dims: q @ k.T without an explicit transpose
    head_out = []
    for h in range(n_heads):
        lo = h * d_head
        sc = lax.dot_general(qb[:, lo:lo + d_head], kb[:, lo:lo + d_head], dn,
                             preferred_element_type=jnp.float32) * scale   # single K=d_head dot
        sc = jnp.where(causal, sc, -1e30)               # scores stay f32 (-1e30 is bf16-unsafe)
        m = jnp.max(sc, axis=-1, keepdims=True)
        p = jnp.exp(sc - m)
        p = p * pl.reciprocal(jnp.sum(p, axis=-1, keepdims=True), approx=True)
        head_out.append(jnp.dot(p.astype(jnp.bfloat16), vb[:, lo:lo + d_head],
                                preferred_element_type=jnp.float32))
    # head outputs stay in vregs; no VMEM scratch round-trip
    att = jnp.concatenate(head_out, axis=-1).astype(jnp.bfloat16)
    out_ref[0] = x + jnp.dot(att, wo_ref[...], preferred_element_type=jnp.float32)


def ffn_block_kernel(x_ref, ln2w_ref, ln2b_ref, wg_ref, wu_ref, wd_ref,
                     out_ref, h2_scratch):
    """x + ff_down(silu(ff_gate(LN2(x))) * ff_up(LN2(x))), tiled over (row tiles, ff tiles)."""
    fj = pl.program_id(1)

    @pl.when(fj == 0)
    def _():
        x = x_ref[...]                                   # (TR, D) f32
        h2 = _layer_norm(x, ln2w_ref[0], ln2b_ref[0])
        h2_scratch[...] = h2.astype(jnp.bfloat16)        # reused by every ff tile
        out_ref[...] = x                                 # residual-initialized f32 accumulator

    h2 = h2_scratch[...]
    g = jnp.dot(h2, wg_ref[...], preferred_element_type=jnp.float32)   # (TR, TF) f32
    u = jnp.dot(h2, wu_ref[...], preferred_element_type=jnp.float32)
    act = g * pl.reciprocal(1.0 + jnp.exp(-g), approx=True)            # SiLU, reciprocal on EUP
    out_ref[...] += jnp.dot((act * u).astype(jnp.bfloat16), wd_ref[...],
                            preferred_element_type=jnp.float32)


def lm_head_kernel(x_ref, lnw_ref, lnb_ref, w_ref, out_ref, h_scratch):
    """Final LayerNorm (computed once per batch element, cached) + vocab-tiled lm_head."""
    @pl.when(pl.program_id(1) == 0)
    def _():
        h = _layer_norm(x_ref[0], lnw_ref[0], lnb_ref[0])
        h_scratch[...] = h.astype(jnp.bfloat16)

    out_ref[0] = jnp.dot(h_scratch[...], w_ref[...], preferred_element_type=jnp.float32)


# -----------------------------------------------------------------------------
# Pallas wrappers
# -----------------------------------------------------------------------------
def attention_block(x, cos_full, sin_fwd, sin_bwd, wqkv, wo, ln1w, ln1b, n_heads):
    B, S, D = x.shape
    d_head = D // n_heads
    kernel = functools.partial(attention_block_kernel, n_heads=n_heads, d_head=d_head)
    cost = pl.CostEstimate(
        flops=int(B * (2 * S * D * 3 * D + 4 * S * S * D + 2 * S * D * D)),
        transcendentals=int(B * n_heads * S * S),
        bytes_accessed=int(2 * B * S * D * 4 + 4 * D * D * 2 + 3 * S * D * 4))
    return pl.pallas_call(
        kernel,
        out_shape=jax.ShapeDtypeStruct((B, S, D), jnp.float32),
        grid_spec=pltpu.PrefetchScalarGridSpec(
            num_scalar_prefetch=0,
            grid=(B,),
            in_specs=[
                pl.BlockSpec((1, S, D), lambda b: (b, 0, 0)),      # x
                pl.BlockSpec((S, D), lambda b: (0, 0)),            # cos_full
                pl.BlockSpec((S, D), lambda b: (0, 0)),            # sin_fwd
                pl.BlockSpec((S, D), lambda b: (0, 0)),            # sin_bwd
                pl.BlockSpec((D, 3 * D), lambda b: (0, 0)),        # Wqkv (bf16)
                pl.BlockSpec((D, D), lambda b: (0, 0)),            # Wo   (bf16)
                pl.BlockSpec((1, D), lambda b: (0, 0)),            # ln1 w
                pl.BlockSpec((1, D), lambda b: (0, 0)),            # ln1 b
            ],
            out_specs=pl.BlockSpec((1, S, D), lambda b: (b, 0, 0)),
        ),
        compiler_params=pltpu.CompilerParams(
            dimension_semantics=("parallel",),
            vmem_limit_bytes=VMEM_LIMIT),
        cost_estimate=cost,
    )(x, cos_full, sin_fwd, sin_bwd,
      wqkv.astype(jnp.bfloat16), wo.astype(jnp.bfloat16), ln1w, ln1b)


def ffn_block(x, ln2w, ln2b, wg, wu, wd):
    B, S, D = x.shape
    F = wg.shape[1]
    R = B * S
    TR = _pick_tile(R, (256, 128, 64, 32, 16, 8))     # row tile (parallel axis, >=2 tiles)
    TF = _pick_tile(F, (512, 256, 128))               # ff-dim tile (accumulated axis)
    x2 = x.reshape(R, D)
    cost = pl.CostEstimate(
        flops=int(6 * R * D * F),
        transcendentals=int(R * F),
        bytes_accessed=int(2 * R * D * 4 + 3 * D * F * 2))
    out = pl.pallas_call(
        ffn_block_kernel,
        out_shape=jax.ShapeDtypeStruct((R, D), jnp.float32),
        grid_spec=pltpu.PrefetchScalarGridSpec(
            num_scalar_prefetch=0,
            grid=(R // TR, F // TF),
            in_specs=[
                pl.BlockSpec((TR, D), lambda ri, fj: (ri, 0)),     # x rows
                pl.BlockSpec((1, D), lambda ri, fj: (0, 0)),       # ln2 w
                pl.BlockSpec((1, D), lambda ri, fj: (0, 0)),       # ln2 b
                pl.BlockSpec((D, TF), lambda ri, fj: (0, fj)),     # W gate tile (bf16)
                pl.BlockSpec((D, TF), lambda ri, fj: (0, fj)),     # W up tile   (bf16)
                pl.BlockSpec((TF, D), lambda ri, fj: (fj, 0)),     # W down tile (bf16)
            ],
            out_specs=pl.BlockSpec((TR, D), lambda ri, fj: (ri, 0)),
            scratch_shapes=[pltpu.VMEM((TR, D), jnp.bfloat16)],    # cached LN2(x) tile
        ),
        compiler_params=pltpu.CompilerParams(
            dimension_semantics=("parallel", "arbitrary"),
            vmem_limit_bytes=VMEM_LIMIT),
        cost_estimate=cost,
    )(x2, ln2w, ln2b,
      wg.astype(jnp.bfloat16), wu.astype(jnp.bfloat16), wd.astype(jnp.bfloat16))
    return out.reshape(B, S, D)


def lm_head(x, lnw, lnb, w_head):
    B, S, D = x.shape
    V = w_head.shape[1]
    TV = _pick_tile(V, (512, 256, 128))               # vocab tile
    cost = pl.CostEstimate(
        flops=int(2 * B * S * D * V),
        transcendentals=0,
        bytes_accessed=int(B * S * D * 4 + D * V * 2 + B * S * V * 4))
    return pl.pallas_call(
        lm_head_kernel,
        out_shape=jax.ShapeDtypeStruct((B, S, V), jnp.float32),
        grid_spec=pltpu.PrefetchScalarGridSpec(
            num_scalar_prefetch=0,
            grid=(B, V // TV),
            in_specs=[
                pl.BlockSpec((1, S, D), lambda b, vj: (b, 0, 0)),
                pl.BlockSpec((1, D), lambda b, vj: (0, 0)),
                pl.BlockSpec((1, D), lambda b, vj: (0, 0)),
                pl.BlockSpec((D, TV), lambda b, vj: (0, vj)),      # vocab-tiled head (bf16)
            ],
            out_specs=pl.BlockSpec((1, S, TV), lambda b, vj: (b, 0, vj)),
            scratch_shapes=[pltpu.VMEM((S, D), jnp.bfloat16)],     # cached final LN
        ),
        compiler_params=pltpu.CompilerParams(
            dimension_semantics=("parallel", "arbitrary"),
            vmem_limit_bytes=VMEM_LIMIT),
        cost_estimate=cost,
    )(x, lnw, lnb, w_head.astype(jnp.bfloat16))


# -----------------------------------------------------------------------------
# Full model forward (glue in plain JAX, hot path in Pallas)
# -----------------------------------------------------------------------------
def transformer_lm_cnd_forward(params, src, emb, cfg):
    B, S = src.shape
    D = cfg["d_model"]
    H = cfg["n_heads"]

    hidden = jnp.take(params["tok_emb"], src, axis=0)       # embedding gather (glue)
    if emb is not None:
        emb_adapted = emb @ params["w_adapter"]             # embedding_adapter (tiny glue matmul)
        hidden = jnp.concatenate([emb_adapted[:, None, :], hidden[:, :-1, :]], axis=1)

    cos_full, sin_fwd, sin_bwd = build_rope_tables(cfg["max_seq_len"], D // H, H)
    cos_full, sin_fwd, sin_bwd = cos_full[:S], sin_fwd[:S], sin_bwd[:S]

    for lp in params["layers"]:
        hidden = attention_block(hidden, cos_full, sin_fwd, sin_bwd,
                                 lp["wqkv"], lp["wo"], lp["ln1w"], lp["ln1b"], H)
        hidden = ffn_block(hidden, lp["ln2w"], lp["ln2b"], lp["wg"], lp["wu"], lp["wd"])

    logits = lm_head(hidden, params["out_lnw"], params["out_lnb"], params["lm_head"])

    if emb is not None:
        return logits[:, 1:, :]
    # dummy_loss in the reference is 0.0 * sum(adapter(zeros)) and is numerically a no-op.
    return logits


# -----------------------------------------------------------------------------
# Deterministic parameter init (shapes match the PyTorch module's __init__)
# -----------------------------------------------------------------------------
def init_params(key, cfg):
    D = cfg["d_model"]
    F = D * cfg["ff_mult"]
    V = cfg["vocab_size"]
    E = cfg["emb_size"]
    keys = iter(jax.random.split(key, 3 + 5 * cfg["n_layers"]))

    def w(shape, scale=0.02):
        return (scale * jax.random.normal(next(keys), shape)).astype(jnp.float32)

    layers = []
    for _ in range(cfg["n_layers"]):
        layers.append(dict(
            wqkv=w((D, 3 * D)), wo=w((D, D)),
            wg=w((D, F)), wu=w((D, F)), wd=w((F, D)),
            ln1w=jnp.ones((1, D), jnp.float32), ln1b=jnp.zeros((1, D), jnp.float32),
            ln2w=jnp.ones((1, D), jnp.float32), ln2b=jnp.zeros((1, D), jnp.float32),
        ))
    return dict(
        tok_emb=w((V, D)),
        w_adapter=w((E, D)),
        layers=layers,
        out_lnw=jnp.ones((1, D), jnp.float32),
        out_lnb=jnp.zeros((1, D), jnp.float32),
        lm_head=w((D, V)),
    )


# -----------------------------------------------------------------------------
# Pure-JAX reference with the same bf16-matmul / f32-accumulation semantics
# -----------------------------------------------------------------------------
def _mm(a, w):
    return jnp.dot(a.astype(jnp.bfloat16), w.astype(jnp.bfloat16),
                   preferred_element_type=jnp.float32)


def reference_forward(params, src, emb, cfg):
    B, S = src.shape
    D = cfg["d_model"]
    H = cfg["n_heads"]
    dh = D // H
    dh2 = dh // 2

    hidden = jnp.take(params["tok_emb"], src, axis=0)
    if emb is not None:
        e = emb @ params["w_adapter"]
        hidden = jnp.concatenate([e[:, None, :], hidden[:, :-1, :]], axis=1)
    cos, sin = precompute_freqs(cfg["max_seq_len"], dh)
    cos, sin = cos[:S], sin[:S]

    def rope(t):  # (B, S, H, dh)
        c = cos[None, :, None, :]
        s = sin[None, :, None, :]
        t1, t2 = t[..., :dh2], t[..., dh2:]
        return jnp.concatenate([t1 * c - t2 * s, t2 * c + t1 * s], axis=-1)

    x = hidden
    mask = jnp.tril(jnp.ones((S, S), bool))
    for lp in params["layers"]:
        h1 = _layer_norm(x, lp["ln1w"][0], lp["ln1b"][0])
        qkv = _mm(h1, lp["wqkv"])
        q, k, v = qkv[..., :D], qkv[..., D:2 * D], qkv[..., 2 * D:]
        q = rope(q.reshape(B, S, H, dh))
        k = rope(k.reshape(B, S, H, dh))
        v = v.reshape(B, S, H, dh)
        scores = jnp.einsum("bqhd,bkhd->bhqk",
                            q.astype(jnp.bfloat16), k.astype(jnp.bfloat16),
                            preferred_element_type=jnp.float32) / (dh ** 0.5)
        scores = jnp.where(mask, scores, -1e30)
        p = jax.nn.softmax(scores, axis=-1)
        att = jnp.einsum("bhqk,bkhd->bqhd",
                         p.astype(jnp.bfloat16), v.astype(jnp.bfloat16),
                         preferred_element_type=jnp.float32).reshape(B, S, D)
        x = x + _mm(att, lp["wo"])
        h2 = _layer_norm(x, lp["ln2w"][0], lp["ln2b"][0])
        g = _mm(h2, lp["wg"])
        u = _mm(h2, lp["wu"])
        x = x + _mm(g * jax.nn.sigmoid(g) * u, lp["wd"])
    logits = _mm(_layer_norm(x, params["out_lnw"][0], params["out_lnb"][0]), params["lm_head"])
    return logits[:, 1:, :] if emb is not None else logits


if __name__ == "__main__":
    cfg = dict(d_model=128, n_heads=4, n_layers=2, ff_mult=2,
               max_seq_len=16, vocab_size=256, emb_size=32)
    B, S = 2, 8

    key = jax.random.PRNGKey(0)
    kp, ks, ke = jax.random.split(key, 3)
    params = init_params(kp, cfg)
    src = jax.random.randint(ks, (B, S), 0, cfg["vocab_size"], dtype=jnp.int32)
    emb = jax.random.normal(ke, (B, cfg["emb_size"]), dtype=jnp.float32)

    fwd = jax.jit(functools.partial(transformer_lm_cnd_forward, cfg=cfg))
    logits = jax.block_until_ready(fwd(params, src, emb))
    assert logits.shape == (B, S - 1, cfg["vocab_size"]), logits.shape

    ref = reference_forward(params, src, emb, cfg)
    err = float(jnp.max(jnp.abs(logits - ref)))
    # bf16 matmul inputs + EUP approx reciprocals vs exact divides => small tolerance needed
    assert jnp.allclose(logits, ref, atol=2e-2, rtol=2e-2), f"max abs err {err}"

    print("KERNEL_OK")
</pallas_src>

<mosaic_0001>
module attributes {stable_mosaic.version = 11 : i64} {
  func.func @attention_block_kernel(%arg0: i32, %arg1: memref<1x8x128xf32, #tpu.memory_space<vmem>>, %arg2: memref<8x128xf32, #tpu.memory_space<vmem>>, %arg3: memref<8x128xf32, #tpu.memory_space<vmem>>, %arg4: memref<8x128xf32, #tpu.memory_space<vmem>>, %arg5: memref<128x384xbf16, #tpu.memory_space<vmem>>, %arg6: memref<128x128xbf16, #tpu.memory_space<vmem>>, %arg7: memref<1x128xf32, #tpu.memory_space<vmem>>, %arg8: memref<1x128xf32, #tpu.memory_space<vmem>>, %arg9: memref<1x8x128xf32, #tpu.memory_space<vmem>>) attributes {dimension_semantics = [#tpu.dimension_semantics<parallel>], iteration_bounds = array<i64: 2>, scalar_prefetch = 0 : i64, scratch_operands = 0 : i64, tpu.core_type = #tpu.core_type<tc>, window_params = [{transform_indices = @transform_0, window_bounds = array<i64: 1, 8, 128>}, {pipeline_mode = #tpu.pipeline_mode<synchronous>, transform_indices = @transform_1, window_bounds = array<i64: 8, 128>}, {pipeline_mode = #tpu.pipeline_mode<synchronous>, transform_indices = @transform_2, window_bounds = array<i64: 8, 128>}, {pipeline_mode = #tpu.pipeline_mode<synchronous>, transform_indices = @transform_3, window_bounds = array<i64: 8, 128>}, {pipeline_mode = #tpu.pipeline_mode<synchronous>, transform_indices = @transform_4, window_bounds = array<i64: 128, 384>}, {pipeline_mode = #tpu.pipeline_mode<synchronous>, transform_indices = @transform_5, window_bounds = array<i64: 128, 128>}, {pipeline_mode = #tpu.pipeline_mode<synchronous>, transform_indices = @transform_6, window_bounds = array<i64: 1, 128>}, {pipeline_mode = #tpu.pipeline_mode<synchronous>, transform_indices = @transform_7, window_bounds = array<i64: 1, 128>}, {transform_indices = @transform_8, window_bounds = array<i64: 1, 8, 128>}]} {
    %c0 = arith.constant 0 : index
    %c0_0 = arith.constant 0 : index
    %c0_1 = arith.constant 0 : index
    %0 = vector.load %arg1[%c0, %c0_0, %c0_1] : memref<1x8x128xf32, #tpu.memory_space<vmem>>, vector<1x8x128xf32>
    %1 = vector.shape_cast %0 : vector<1x8x128xf32> to vector<8x128xf32>
    %c0_2 = arith.constant 0 : index
    %c0_3 = arith.constant 0 : index
    %2 = vector.load %arg7[%c0_2, %c0_3] : memref<1x128xf32, #tpu.memory_space<vmem>>, vector<1x128xf32>
    %3 = vector.shape_cast %2 : vector<1x128xf32> to vector<128xf32>
    %c0_4 = arith.constant 0 : index
    %c0_5 = arith.constant 0 : index
    %4 = vector.load %arg8[%c0_4, %c0_5] : memref<1x128xf32, #tpu.memory_space<vmem>>, vector<1x128xf32>
    %5 = vector.shape_cast %4 : vector<1x128xf32> to vector<128xf32>
    %cst = arith.constant dense<0.000000e+00> : vector<8xf32>
    %6 = vector.multi_reduction <add>, %1, %cst [1] : vector<8x128xf32> to vector<8xf32>
    %7 = vector.shape_cast %6 : vector<8xf32> to vector<8x1xf32>
    %cst_6 = arith.constant 1.280000e+02 : f32
    %8 = vector.broadcast %cst_6 : f32 to vector<8x1xf32>
    %9 = arith.divf %7, %8 : vector<8x1xf32>
    %10 = vector.broadcast %9 : vector<8x1xf32> to vector<8x128xf32>
    %11 = arith.subf %1, %10 : vector<8x128xf32>
    %12 = arith.mulf %11, %11 : vector<8x128xf32>
    %cst_7 = arith.constant dense<0.000000e+00> : vector<8xf32>
    %13 = vector.multi_reduction <add>, %12, %cst_7 [1] : vector<8x128xf32> to vector<8xf32>
    %14 = vector.shape_cast %13 : vector<8xf32> to vector<8x1xf32>
    %cst_8 = arith.constant 1.280000e+02 : f32
    %15 = vector.broadcast %cst_8 : f32 to vector<8x1xf32>
    %16 = arith.divf %14, %15 : vector<8x1xf32>
    %17 = vector.broadcast %9 : vector<8x1xf32> to vector<8x128xf32>
    %18 = arith.subf %1, %17 : vector<8x128xf32>
    %cst_9 = arith.constant 9.99999974E-6 : f32
    %19 = vector.broadcast %cst_9 : f32 to vector<8x1xf32>
    %20 = arith.addf %16, %19 : vector<8x1xf32>
    %21 = math.rsqrt %20 : vector<8x1xf32>
    %22 = vector.broadcast %21 : vector<8x1xf32> to vector<8x128xf32>
    %23 = arith.mulf %18, %22 : vector<8x128xf32>
    %24 = vector.shape_cast %3 : vector<128xf32> to vector<1x128xf32>
    %25 = vector.broadcast %24 : vector<1x128xf32> to vector<8x128xf32>
    %26 = arith.mulf %23, %25 : vector<8x128xf32>
    %27 = vector.shape_cast %5 : vector<128xf32> to vector<1x128xf32>
    %28 = vector.broadcast %27 : vector<1x128xf32> to vector<8x128xf32>
    %29 = arith.addf %26, %28 : vector<8x128xf32>
    %30 = arith.truncf %29 : vector<8x128xf32> to vector<8x128xbf16>
    %c0_10 = arith.constant 0 : index
    %c0_11 = arith.constant 0 : index
    %31 = vector.load %arg5[%c0_10, %c0_11] : memref<128x384xbf16, #tpu.memory_space<vmem>>, vector<128x384xbf16>
    %cst_12 = arith.constant dense<0.000000e+00> : vector<8x384xf32>
    %32 = tpu.matmul %30, %31, %cst_12 {dimension_numbers = #tpu.dot_dimension_numbers<[1], [0], [0], [1], [0, 0, 1, 1], [], []>} : vector<8x128xbf16>, vector<128x384xbf16>, vector<8x384xf32> -> vector<8x384xf32>
    %33 = vector.extract_strided_slice %32 {offsets = [0, 0], sizes = [8, 128], strides = [1, 1]} : vector<8x384xf32> to vector<8x128xf32>
    %34 = vector.extract_strided_slice %32 {offsets = [0, 128], sizes = [8, 128], strides = [1, 1]} : vector<8x384xf32> to vector<8x128xf32>
    %35 = vector.extract_strided_slice %32 {offsets = [0, 256], sizes = [8, 128], strides = [1, 1]} : vector<8x384xf32> to vector<8x128xf32>
    %c0_13 = arith.constant 0 : index
    %c0_14 = arith.constant 0 : index
    %36 = vector.load %arg2[%c0_13, %c0_14] : memref<8x128xf32, #tpu.memory_space<vmem>>, vector<8x128xf32>
    %c0_15 = arith.constant 0 : index
    %c0_16 = arith.constant 0 : index
    %37 = vector.load %arg3[%c0_15, %c0_16] : memref<8x128xf32, #tpu.memory_space<vmem>>, vector<8x128xf32>
    %c0_17 = arith.constant 0 : index
    %c0_18 = arith.constant 0 : index
    %38 = vector.load %arg4[%c0_17, %c0_18] : memref<8x128xf32, #tpu.memory_space<vmem>>, vector<8x128xf32>
    %39 = arith.mulf %33, %36 : vector<8x128xf32>
    %40 = vector.extract_strided_slice %33 {offsets = [0, 112], sizes = [8, 16], strides = [1, 1]} : vector<8x128xf32> to vector<8x16xf32>
    %41 = vector.extract_strided_slice %33 {offsets = [0, 0], sizes = [8, 112], strides = [1, 1]} : vector<8x128xf32> to vector<8x112xf32>
    %42 = tpu.concatenate %40, %41 in 1 : vector<8x16xf32>, vector<8x112xf32> -> vector<8x128xf32>
    %43 = arith.mulf %42, %37 : vector<8x128xf32>
    %44 = arith.addf %39, %43 : vector<8x128xf32>
    %45 = vector.extract_strided_slice %33 {offsets = [0, 16], sizes = [8, 112], strides = [1, 1]} : vector<8x128xf32> to vector<8x112xf32>
    %46 = vector.extract_strided_slice %33 {offsets = [0, 0], sizes = [8, 16], strides = [1, 1]} : vector<8x128xf32> to vector<8x16xf32>
    %47 = tpu.concatenate %45, %46 in 1 : vector<8x112xf32>, vector<8x16xf32> -> vector<8x128xf32>
    %48 = arith.mulf %47, %38 : vector<8x128xf32>
    %49 = arith.addf %44, %48 : vector<8x128xf32>
    %50 = arith.truncf %49 : vector<8x128xf32> to vector<8x128xbf16>
    %51 = arith.mulf %34, %36 : vector<8x128xf32>
    %52 = vector.extract_strided_slice %34 {offsets = [0, 112], sizes = [8, 16], strides = [1, 1]} : vector<8x128xf32> to vector<8x16xf32>
    %53 = vector.extract_strided_slice %34 {offsets = [0, 0], sizes = [8, 112], strides = [1, 1]} : vector<8x128xf32> to vector<8x112xf32>
    %54 = tpu.concatenate %52, %53 in 1 : vector<8x16xf32>, vector<8x112xf32> -> vector<8x128xf32>
    %55 = arith.mulf %54, %37 : vector<8x128xf32>
    %56 = arith.addf %51, %55 : vector<8x128xf32>
    %57 = vector.extract_strided_slice %34 {offsets = [0, 16], sizes = [8, 112], strides = [1, 1]} : vector<8x128xf32> to vector<8x112xf32>
    %58 = vector.extract_strided_slice %34 {offsets = [0, 0], sizes = [8, 16], strides = [1, 1]} : vector<8x128xf32> to vector<8x16xf32>
    %59 = tpu.concatenate %57, %58 in 1 : vector<8x112xf32>, vector<8x16xf32> -> vector<8x128xf32>
    %60 = arith.mulf %59, %38 : vector<8x128xf32>
    %61 = arith.addf %56, %60 : vector<8x128xf32>
    %62 = arith.truncf %61 : vector<8x128xf32> to vector<8x128xbf16>
    %63 = arith.truncf %35 : vector<8x128xf32> to vector<8x128xbf16>
    %64 = tpu.iota {dimensions = array<i32: 0>} : vector<8x8xi32>
    %65 = tpu.iota {dimensions = array<i32: 1>} : vector<8x8xi32>
    %66 = arith.cmpi sle, %65, %64 : vector<8x8xi32>
    %67 = vector.extract_strided_slice %50 {offsets = [0, 0], sizes = [8, 32], strides = [1, 1]} : vector<8x128xbf16> to vector<8x32xbf16>
    %68 = vector.extract_strided_slice %62 {offsets = [0, 0], sizes = [8, 32], strides = [1, 1]} : vector<8x128xbf16> to vector<8x32xbf16>
    %cst_19 = arith.constant dense<0.000000e+00> : vector<8x8xf32>
    %69 = tpu.matmul %67, %68, %cst_19 {dimension_numbers = #tpu.dot_dimension_numbers<[1], [1], [0], [0], [0, 0, 1, 0], [], []>} : vector<8x32xbf16>, vector<8x32xbf16>, vector<8x8xf32> -> vector<8x8xf32>
    %cst_20 = arith.constant 0.176776692 : f32
    %70 = vector.broadcast %cst_20 : f32 to vector<8x8xf32>
    %71 = arith.mulf %69, %70 : vector<8x8xf32>
    %cst_21 = arith.constant -1.000000e+30 : f32
    %72 = vector.broadcast %cst_21 : f32 to vector<8x8xf32>
    %73 = arith.select %66, %71, %72 : vector<8x8xi1>, vector<8x8xf32>
    %cst_22 = arith.constant dense<0xFF800000> : vector<8xf32>
    %74 = vector.multi_reduction <maximumf>, %73, %cst_22 [1] : vector<8x8xf32> to vector<8xf32>
    %75 = vector.shape_cast %74 : vector<8xf32> to vector<8x1xf32>
    %76 = vector.broadcast %75 : vector<8x1xf32> to vector<8x8xf32>
    %77 = arith.subf %73, %76 : vector<8x8xf32>
    %78 = math.exp %77 : vector<8x8xf32>
    %cst_23 = arith.constant dense<0.000000e+00> : vector<8xf32>
    %79 = vector.multi_reduction <add>, %78, %cst_23 [1] : vector<8x8xf32> to vector<8xf32>
    %80 = vector.shape_cast %79 : vector<8xf32> to vector<8x1xf32>
    %81 = tpu.reciprocal %80 {approx = true} : vector<8x1xf32> -> vector<8x1xf32>
    %82 = vector.broadcast %81 : vector<8x1xf32> to vector<8x8xf32>
    %83 = arith.mulf %78, %82 : vector<8x8xf32>
    %84 = arith.truncf %83 : vector<8x8xf32> to vector<8x8xbf16>
    %85 = vector.extract_strided_slice %63 {offsets = [0, 0], sizes = [8, 32], strides = [1, 1]} : vector<8x128xbf16> to vector<8x32xbf16>
    %cst_24 = arith.constant dense<0.000000e+00> : vector<8x32xf32>
    %86 = tpu.matmul %84, %85, %cst_24 {dimension_numbers = #tpu.dot_dimension_numbers<[1], [0], [0], [1], [0, 0, 1, 1], [], []>} : vector<8x8xbf16>, vector<8x32xbf16>, vector<8x32xf32> -> vector<8x32xf32>
    %87 = vector.extract_strided_slice %50 {offsets = [0, 32], sizes = [8, 32], strides = [1, 1]} : vector<8x128xbf16> to vector<8x32xbf16>
    %88 = vector.extract_strided_slice %62 {offsets = [0, 32], sizes = [8, 32], strides = [1, 1]} : vector<8x128xbf16> to vector<8x32xbf16>
    %cst_25 = arith.constant dense<0.000000e+00> : vector<8x8xf32>
    %89 = tpu.matmul %87, %88, %cst_25 {dimension_numbers = #tpu.dot_dimension_numbers<[1], [1], [0], [0], [0, 0, 1, 0], [], []>} : vector<8x32xbf16>, vector<8x32xbf16>, vector<8x8xf32> -> vector<8x8xf32>
    %cst_26 = arith.constant 0.176776692 : f32
    %90 = vector.broadcast %cst_26 : f32 to vector<8x8xf32>
    %91 = arith.mulf %89, %90 : vector<8x8xf32>
    %cst_27 = arith.constant -1.000000e+30 : f32
    %92 = vector.broadcast %cst_27 : f32 to vector<8x8xf32>
    %93 = arith.select %66, %91, %92 : vector<8x8xi1>, vector<8x8xf32>
    %cst_28 = arith.constant dense<0xFF800000> : vector<8xf32>
    %94 = vector.multi_reduction <maximumf>, %93, %cst_28 [1] : vector<8x8xf32> to vector<8xf32>
    %95 = vector.shape_cast %94 : vector<8xf32> to vector<8x1xf32>
    %96 = vector.broadcast %95 : vector<8x1xf32> to vector<8x8xf32>
    %97 = arith.subf %93, %96 : vector<8x8xf32>
    %98 = math.exp %97 : vector<8x8xf32>
    %cst_29 = arith.constant dense<0.000000e+00> : vector<8xf32>
    %99 = vector.multi_reduction <add>, %98, %cst_29 [1] : vector<8x8xf32> to vector<8xf32>
    %100 = vector.shape_cast %99 : vector<8xf32> to vector<8x1xf32>
    %101 = tpu.reciprocal %100 {approx = true} : vector<8x1xf32> -> vector<8x1xf32>
    %102 = vector.broadcast %101 : vector<8x1xf32> to vector<8x8xf32>
    %103 = arith.mulf %98, %102 : vector<8x8xf32>
    %104 = arith.truncf %103 : vector<8x8xf32> to vector<8x8xbf16>
    %105 = vector.extract_strided_slice %63 {offsets = [0, 32], sizes = [8, 32], strides = [1, 1]} : vector<8x128xbf16> to vector<8x32xbf16>
    %cst_30 = arith.constant dense<0.000000e+00> : vector<8x32xf32>
    %106 = tpu.matmul %104, %105, %cst_30 {dimension_numbers = #tpu.dot_dimension_numbers<[1], [0], [0], [1], [0, 0, 1, 1], [], []>} : vector<8x8xbf16>, vector<8x32xbf16>, vector<8x32xf32> -> vector<8x32xf32>
    %107 = vector.extract_strided_slice %50 {offsets = [0, 64], sizes = [8, 32], strides = [1, 1]} : vector<8x128xbf16> to vector<8x32xbf16>
    %108 = vector.extract_strided_slice %62 {offsets = [0, 64], sizes = [8, 32], strides = [1, 1]} : vector<8x128xbf16> to vector<8x32xbf16>
    %cst_31 = arith.constant dense<0.000000e+00> : vector<8x8xf32>
    %109 = tpu.matmul %107, %108, %cst_31 {dimension_numbers = #tpu.dot_dimension_numbers<[1], [1], [0], [0], [0, 0, 1, 0], [], []>} : vector<8x32xbf16>, vector<8x32xbf16>, vector<8x8xf32> -> vector<8x8xf32>
    %cst_32 = arith.constant 0.176776692 : f32
    %110 = vector.broadcast %cst_32 : f32 to vector<8x8xf32>
    %111 = arith.mulf %109, %110 : vector<8x8xf32>
    %cst_33 = arith.constant -1.000000e+30 : f32
    %112 = vector.broadcast %cst_33 : f32 to vector<8x8xf32>
    %113 = arith.select %66, %111, %112 : vector<8x8xi1>, vector<8x8xf32>
    %cst_34 = arith.constant dense<0xFF800000> : vector<8xf32>
    %114 = vector.multi_reduction <maximumf>, %113, %cst_34 [1] : vector<8x8xf32> to vector<8xf32>
    %115 = vector.shape_cast %114 : vector<8xf32> to vector<8x1xf32>
    %116 = vector.broadcast %115 : vector<8x1xf32> to vector<8x8xf32>
    %117 = arith.subf %113, %116 : vector<8x8xf32>
    %118 = math.exp %117 : vector<8x8xf32>
    %cst_35 = arith.constant dense<0.000000e+00> : vector<8xf32>
    %119 = vector.multi_reduction <add>, %118, %cst_35 [1] : vector<8x8xf32> to vector<8xf32>
    %120 = vector.shape_cast %119 : vector<8xf32> to vector<8x1xf32>
    %121 = tpu.reciprocal %120 {approx = true} : vector<8x1xf32> -> vector<8x1xf32>
    %122 = vector.broadcast %121 : vector<8x1xf32> to vector<8x8xf32>
    %123 = arith.mulf %118, %122 : vector<8x8xf32>
    %124 = arith.truncf %123 : vector<8x8xf32> to vector<8x8xbf16>
    %125 = vector.extract_strided_slice %63 {offsets = [0, 64], sizes = [8, 32], strides = [1, 1]} : vector<8x128xbf16> to vector<8x32xbf16>
    %cst_36 = arith.constant dense<0.000000e+00> : vector<8x32xf32>
    %126 = tpu.matmul %124, %125, %cst_36 {dimension_numbers = #tpu.dot_dimension_numbers<[1], [0], [0], [1], [0, 0, 1, 1], [], []>} : vector<8x8xbf16>, vector<8x32xbf16>, vector<8x32xf32> -> vector<8x32xf32>
    %127 = vector.extract_strided_slice %50 {offsets = [0, 96], sizes = [8, 32], strides = [1, 1]} : vector<8x128xbf16> to vector<8x32xbf16>
    %128 = vector.extract_strided_slice %62 {offsets = [0, 96], sizes = [8, 32], strides = [1, 1]} : vector<8x128xbf16> to vector<8x32xbf16>
    %cst_37 = arith.constant dense<0.000000e+00> : vector<8x8xf32>
    %129 = tpu.matmul %127, %128, %cst_37 {dimension_numbers = #tpu.dot_dimension_numbers<[1], [1], [0], [0], [0, 0, 1, 0], [], []>} : vector<8x32xbf16>, vector<8x32xbf16>, vector<8x8xf32> -> vector<8x8xf32>
    %cst_38 = arith.constant 0.176776692 : f32
    %130 = vector.broadcast %cst_38 : f32 to vector<8x8xf32>
    %131 = arith.mulf %129, %130 : vector<8x8xf32>
    %cst_39 = arith.constant -1.000000e+30 : f32
    %132 = vector.broadcast %cst_39 : f32 to vector<8x8xf32>
    %133 = arith.select %66, %131, %132 : vector<8x8xi1>, vector<8x8xf32>
    %cst_40 = arith.constant dense<0xFF800000> : vector<8xf32>
    %134 = vector.multi_reduction <maximumf>, %133, %cst_40 [1] : vector<8x8xf32> to vector<8xf32>
    %135 = vector.shape_cast %134 : vector<8xf32> to vector<8x1xf32>
    %136 = vector.broadcast %135 : vector<8x1xf32> to vector<8x8xf32>
    %137 = arith.subf %133, %136 : vector<8x8xf32>
    %138 = math.exp %137 : vector<8x8xf32>
    %cst_41 = arith.constant dense<0.000000e+00> : vector<8xf32>
    %139 = vector.multi_reduction <add>, %138, %cst_41 [1] : vector<8x8xf32> to vector<8xf32>
    %140 = vector.shape_cast %139 : vector<8xf32> to vector<8x1xf32>
    %141 = tpu.reciprocal %140 {approx = true} : vector<8x1xf32> -> vector<8x1xf32>
    %142 = vector.broadcast %141 : vector<8x1xf32> to vector<8x8xf32>
    %143 = arith.mulf %138, %142 : vector<8x8xf32>
    %144 = arith.truncf %143 : vector<8x8xf32> to vector<8x8xbf16>
    %145 = vector.extract_strided_slice %63 {offsets = [0, 96], sizes = [8, 32], strides = [1, 1]} : vector<8x128xbf16> to vector<8x32xbf16>
    %cst_42 = arith.constant dense<0.000000e+00> : vector<8x32xf32>
    %146 = tpu.matmul %144, %145, %cst_42 {dimension_numbers = #tpu.dot_dimension_numbers<[1], [0], [0], [1], [0, 0, 1, 1], [], []>} : vector<8x8xbf16>, vector<8x32xbf16>, vector<8x32xf32> -> vector<8x32xf32>
    %147 = tpu.concatenate %86, %106, %126, %146 in 1 : vector<8x32xf32>, vector<8x32xf32>, vector<8x32xf32>, vector<8x32xf32> -> vector<8x128xf32>
    %148 = arith.truncf %147 : vector<8x128xf32> to vector<8x128xbf16>
    %c0_43 = arith.constant 0 : index
    %c0_44 = arith.constant 0 : index
    %149 = vector.load %arg6[%c0_43, %c0_44] : memref<128x128xbf16, #tpu.memory_space<vmem>>, vector<128x128xbf16>
    %cst_45 = arith.constant dense<0.000000e+00> : vector<8x128xf32>
    %150 = tpu.matmul %148, %149, %cst_45 {dimension_numbers = #tpu.dot_dimension_numbers<[1], [0], [0], [1], [0, 0, 1, 1], [], []>} : vector<8x128xbf16>, vector<128x128xbf16>, vector<8x128xf32> -> vector<8x128xf32>
    %151 = arith.addf %1, %150 : vector<8x128xf32>
    %c0_46 = arith.constant 0 : index
    %c0_47 = arith.constant 0 : index
    %c0_48 = arith.constant 0 : index
    %152 = vector.load %arg9[%c0_46, %c0_47, %c0_48] : memref<1x8x128xf32, #tpu.memory_space<vmem>>, vector<1x8x128xf32>
    %153 = vector.shape_cast %152 : vector<1x8x128xf32> to vector<8x128xf32>
    %154 = vector.shape_cast %151 : vector<8x128xf32> to vector<1x8x128xf32>
    tpu.vector_store %arg9[%c0_46, %c0_47, %c0_48], %154 {strides = array<i32>} : memref<1x8x128xf32, #tpu.memory_space<vmem>>, vector<1x8x128xf32>,
    return
  }
  func.func @transform_0(%arg0: i32) -> (i32, i32, i32) {
    %c0_i32 = arith.constant 0 : i32
    %c0_i32_0 = arith.constant 0 : i32
    %c0_i32_1 = arith.constant 0 : i32
    return %arg0, %c0_i32, %c0_i32_0 : i32, i32, i32
  }
  func.func @transform_1(%arg0: i32) -> (i32, i32) {
    %c0_i32 = arith.constant 0 : i32
    %c0_i32_0 = arith.constant 0 : i32
    %c0_i32_1 = arith.constant 0 : i32
    return %c0_i32, %c0_i32_0 : i32, i32
  }
  func.func @transform_2(%arg0: i32) -> (i32, i32) {
    %c0_i32 = arith.constant 0 : i32
    %c0_i32_0 = arith.constant 0 : i32
    %c0_i32_1 = arith.constant 0 : i32
    return %c0_i32, %c0_i32_0 : i32, i32
  }
  func.func @transform_3(%arg0: i32) -> (i32, i32) {
    %c0_i32 = arith.constant 0 : i32
    %c0_i32_0 = arith.constant 0 : i32
    %c0_i32_1 = arith.constant 0 : i32
    return %c0_i32, %c0_i32_0 : i32, i32
  }
  func.func @transform_4(%arg0: i32) -> (i32, i32) {
    %c0_i32 = arith.constant 0 : i32
    %c0_i32_0 = arith.constant 0 : i32
    %c0_i32_1 = arith.constant 0 : i32
    return %c0_i32, %c0_i32_0 : i32, i32
  }
  func.func @transform_5(%arg0: i32) -> (i32, i32) {
    %c0_i32 = arith.constant 0 : i32
    %c0_i32_0 = arith.constant 0 : i32
    %c0_i32_1 = arith.constant 0 : i32
    return %c0_i32, %c0_i32_0 : i32, i32
  }
  func.func @transform_6(%arg0: i32) -> (i32, i32) {
    %c0_i32 = arith.constant 0 : i32
    %c0_i32_0 = arith.constant 0 : i32
    %c0_i32_1 = arith.constant 0 : i32
    return %c0_i32, %c0_i32_0 : i32, i32
  }
  func.func @transform_7(%arg0: i32) -> (i32, i32) {
    %c0_i32 = arith.constant 0 : i32
    %c0_i32_0 = arith.constant 0 : i32
    %c0_i32_1 = arith.constant 0 : i32
    return %c0_i32, %c0_i32_0 : i32, i32
  }
  func.func @transform_8(%arg0: i32) -> (i32, i32, i32) {
    %c0_i32 = arith.constant 0 : i32
    %c0_i32_0 = arith.constant 0 : i32
    %c0_i32_1 = arith.constant 0 : i32
    return %arg0, %c0_i32, %c0_i32_0 : i32, i32, i32
  }
}

module attributes {stable_mosaic.version = 11 : i64} {
  func.func @lm_head_kernel(%arg0: i32, %arg1: i32, %arg2: memref<1x8x128xf32, #tpu.memory_space<vmem>>, %arg3: memref<1x128xf32, #tpu.memory_space<vmem>>, %arg4: memref<1x128xf32, #tpu.memory_space<vmem>>, %arg5: memref<128x128xbf16, #tpu.memory_space<vmem>>, %arg6: memref<1x8x128xf32, #tpu.memory_space<vmem>>, %arg7: memref<8x128xbf16, #tpu.memory_space<vmem>>) attributes {dimension_semantics = [#tpu.dimension_semantics<parallel>, #tpu.dimension_semantics<arbitrary>], iteration_bounds = array<i64: 2, 2>, scalar_prefetch = 0 : i64, scratch_operands = 1 : i64, tpu.core_type = #tpu.core_type<tc>, window_params = [{transform_indices = @transform_0, window_bounds = array<i64: 1, 8, 128>}, {pipeline_mode = #tpu.pipeline_mode<synchronous>, transform_indices = @transform_1, window_bounds = array<i64: 1, 128>}, {pipeline_mode = #tpu.pipeline_mode<synchronous>, transform_indices = @transform_2, window_bounds = array<i64: 1, 128>}, {transform_indices = @transform_3, window_bounds = array<i64: 128, 128>}, {transform_indices = @transform_4, window_bounds = array<i64: 1, 8, 128>}]} {
    %c0_i32 = arith.constant 0 : i32
    %0 = arith.cmpi eq, %arg1, %c0_i32 : i32
    %1 = arith.extui %0 : i1 to i32
    %c0_i32_0 = arith.constant 0 : i32
    %2 = arith.cmpi ne, %1, %c0_i32_0 : i32
    scf.if %2 {
      %c0_7 = arith.constant 0 : index
      %c0_8 = arith.constant 0 : index
      %c0_9 = arith.constant 0 : index
      %9 = vector.load %arg2[%c0_7, %c0_8, %c0_9] : memref<1x8x128xf32, #tpu.memory_space<vmem>>, vector<1x8x128xf32>
      %10 = vector.shape_cast %9 : vector<1x8x128xf32> to vector<8x128xf32>
      %c0_10 = arith.constant 0 : index
      %c0_11 = arith.constant 0 : index
      %11 = vector.load %arg3[%c0_10, %c0_11] : memref<1x128xf32, #tpu.memory_space<vmem>>, vector<1x128xf32>
      %12 = vector.shape_cast %11 : vector<1x128xf32> to vector<128xf32>
      %c0_12 = arith.constant 0 : index
      %c0_13 = arith.constant 0 : index
      %13 = vector.load %arg4[%c0_12, %c0_13] : memref<1x128xf32, #tpu.memory_space<vmem>>, vector<1x128xf32>
      %14 = vector.shape_cast %13 : vector<1x128xf32> to vector<128xf32>
      %cst_14 = arith.constant dense<0.000000e+00> : vector<8xf32>
      %15 = vector.multi_reduction <add>, %10, %cst_14 [1] : vector<8x128xf32> to vector<8xf32>
      %16 = vector.shape_cast %15 : vector<8xf32> to vector<8x1xf32>
      %cst_15 = arith.constant 1.280000e+02 : f32
      %17 = vector.broadcast %cst_15 : f32 to vector<8x1xf32>
      %18 = arith.divf %16, %17 : vector<8x1xf32>
      %19 = vector.broadcast %18 : vector<8x1xf32> to vector<8x128xf32>
      %20 = arith.subf %10, %19 : vector<8x128xf32>
      %21 = arith.mulf %20, %20 : vector<8x128xf32>
      %cst_16 = arith.constant dense<0.000000e+00> : vector<8xf32>
      %22 = vector.multi_reduction <add>, %21, %cst_16 [1] : vector<8x128xf32> to vector<8xf32>
      %23 = vector.shape_cast %22 : vector<8xf32> to vector<8x1xf32>
      %cst_17 = arith.constant 1.280000e+02 : f32
      %24 = vector.broadcast %cst_17 : f32 to vector<8x1xf32>
      %25 = arith.divf %23, %24 : vector<8x1xf32>
      %26 = vector.broadcast %18 : vector<8x1xf32> to vector<8x128xf32>
      %27 = arith.subf %10, %26 : vector<8x128xf32>
      %cst_18 = arith.constant 9.99999974E-6 : f32
      %28 = vector.broadcast %cst_18 : f32 to vector<8x1xf32>
      %29 = arith.addf %25, %28 : vector<8x1xf32>
      %30 = math.rsqrt %29 : vector<8x1xf32>
      %31 = vector.broadcast %30 : vector<8x1xf32> to vector<8x128xf32>
      %32 = arith.mulf %27, %31 : vector<8x128xf32>
      %33 = vector.shape_cast %12 : vector<128xf32> to vector<1x128xf32>
      %34 = vector.broadcast %33 : vector<1x128xf32> to vector<8x128xf32>
      %35 = arith.mulf %32, %34 : vector<8x128xf32>
      %36 = vector.shape_cast %14 : vector<128xf32> to vector<1x128xf32>
      %37 = vector.broadcast %36 : vector<1x128xf32> to vector<8x128xf32>
      %38 = arith.addf %35, %37 : vector<8x128xf32>
      %39 = arith.truncf %38 : vector<8x128xf32> to vector<8x128xbf16>
      %c0_19 = arith.constant 0 : index
      %c0_20 = arith.constant 0 : index
      %40 = vector.load %arg7[%c0_19, %c0_20] : memref<8x128xbf16, #tpu.memory_space<vmem>>, vector<8x128xbf16>
      tpu.vector_store %arg7[%c0_19, %c0_20], %39 {strides = array<i32>} : memref<8x128xbf16, #tpu.memory_space<vmem>>, vector<8x128xbf16>,
    } else {
    }
    %c0 = arith.constant 0 : index
    %c0_1 = arith.constant 0 : index
    %3 = vector.load %arg7[%c0, %c0_1] : memref<8x128xbf16, #tpu.memory_space<vmem>>, vector<8x128xbf16>
    %c0_2 = arith.constant 0 : index
    %c0_3 = arith.constant 0 : index
    %4 = vector.load %arg5[%c0_2, %c0_3] : memref<128x128xbf16, #tpu.memory_space<vmem>>, vector<128x128xbf16>
    %cst = arith.constant dense<0.000000e+00> : vector<8x128xf32>
    %5 = tpu.matmul %3, %4, %cst {dimension_numbers = #tpu.dot_dimension_numbers<[1], [0], [0], [1], [0, 0, 1, 1], [], []>} : vector<8x128xbf16>, vector<128x128xbf16>, vector<8x128xf32> -> vector<8x128xf32>
    %c0_4 = arith.constant 0 : index
    %c0_5 = arith.constant 0 : index
    %c0_6 = arith.constant 0 : index
    %6 = vector.load %arg6[%c0_4, %c0_5, %c0_6] : memref<1x8x128xf32, #tpu.memory_space<vmem>>, vector<1x8x128xf32>
    %7 = vector.shape_cast %6 : vector<1x8x128xf32> to vector<8x128xf32>
    %8 = vector.shape_cast %5 : vector<8x128xf32> to vector<1x8x128xf32>
    tpu.vector_store %arg6[%c0_4, %c0_5, %c0_6], %8 {strides = array<i32>} : memref<1x8x128xf32, #tpu.memory_space<vmem>>, vector<1x8x128xf32>,
    return
  }
  func.func @transform_0(%arg0: i32, %arg1: i32) -> (i32, i32, i32) {
    %c0_i32 = arith.constant 0 : i32
    %c0_i32_0 = arith.constant 0 : i32
    %c0_i32_1 = arith.constant 0 : i32
    return %arg0, %c0_i32, %c0_i32_0 : i32, i32, i32
  }
  func.func @transform_1(%arg0: i32, %arg1: i32) -> (i32, i32) {
    %c0_i32 = arith.constant 0 : i32
    %c0_i32_0 = arith.constant 0 : i32
    %c0_i32_1 = arith.constant 0 : i32
    return %c0_i32, %c0_i32_0 : i32, i32
  }
  func.func @transform_2(%arg0: i32, %arg1: i32) -> (i32, i32) {
    %c0_i32 = arith.constant 0 : i32
    %c0_i32_0 = arith.constant 0 : i32
    %c0_i32_1 = arith.constant 0 : i32
    return %c0_i32, %c0_i32_0 : i32, i32
  }
  func.func @transform_3(%arg0: i32, %arg1: i32) -> (i32, i32) {
    %c0_i32 = arith.constant 0 : i32
    %c0_i32_0 = arith.constant 0 : i32
    return %c0_i32, %arg1 : i32, i32
  }
  func.func @transform_4(%arg0: i32, %arg1: i32) -> (i32, i32, i32) {
    %c0_i32 = arith.constant 0 : i32
    %c0_i32_0 = arith.constant 0 : i32
    return %arg0, %c0_i32, %arg1 : i32, i32, i32
  }
}

module attributes {stable_mosaic.version = 11 : i64} {
  func.func @ffn_block_kernel(%arg0: i32, %arg1: i32, %arg2: memref<8x128xf32, #tpu.memory_space<vmem>>, %arg3: memref<1x128xf32, #tpu.memory_space<vmem>>, %arg4: memref<1x128xf32, #tpu.memory_space<vmem>>, %arg5: memref<128x128xbf16, #tpu.memory_space<vmem>>, %arg6: memref<128x128xbf16, #tpu.memory_space<vmem>>, %arg7: memref<128x128xbf16, #tpu.memory_space<vmem>>, %arg8: memref<8x128xf32, #tpu.memory_space<vmem>>, %arg9: memref<8x128xbf16, #tpu.memory_space<vmem>>) attributes {dimension_semantics = [#tpu.dimension_semantics<parallel>, #tpu.dimension_semantics<arbitrary>], iteration_bounds = array<i64: 2, 2>, scalar_prefetch = 0 : i64, scratch_operands = 1 : i64, tpu.core_type = #tpu.core_type<tc>, window_params = [{transform_indices = @transform_0, window_bounds = array<i64: 8, 128>}, {pipeline_mode = #tpu.pipeline_mode<synchronous>, transform_indices = @transform_1, window_bounds = array<i64: 1, 128>}, {pipeline_mode = #tpu.pipeline_mode<synchronous>, transform_indices = @transform_2, window_bounds = array<i64: 1, 128>}, {transform_indices = @transform_3, window_bounds = array<i64: 128, 128>}, {transform_indices = @transform_4, window_bounds = array<i64: 128, 128>}, {transform_indices = @transform_5, window_bounds = array<i64: 128, 128>}, {transform_indices = @transform_6, window_bounds = array<i64: 8, 128>}]} {
    %c0_i32 = arith.constant 0 : i32
    %0 = arith.cmpi eq, %arg1, %c0_i32 : i32
    %1 = arith.extui %0 : i1 to i32
    %c0_i32_0 = arith.constant 0 : i32
    %2 = arith.cmpi ne, %1, %c0_i32_0 : i32
    scf.if %2 {
      %c0_16 = arith.constant 0 : index
      %c0_17 = arith.constant 0 : index
      %22 = vector.load %arg2[%c0_16, %c0_17] : memref<8x128xf32, #tpu.memory_space<vmem>>, vector<8x128xf32>
      %c0_18 = arith.constant 0 : index
      %c0_19 = arith.constant 0 : index
      %23 = vector.load %arg3[%c0_18, %c0_19] : memref<1x128xf32, #tpu.memory_space<vmem>>, vector<1x128xf32>
      %24 = vector.shape_cast %23 : vector<1x128xf32> to vector<128xf32>
      %c0_20 = arith.constant 0 : index
      %c0_21 = arith.constant 0 : index
      %25 = vector.load %arg4[%c0_20, %c0_21] : memref<1x128xf32, #tpu.memory_space<vmem>>, vector<1x128xf32>
      %26 = vector.shape_cast %25 : vector<1x128xf32> to vector<128xf32>
      %cst_22 = arith.constant dense<0.000000e+00> : vector<8xf32>
      %27 = vector.multi_reduction <add>, %22, %cst_22 [1] : vector<8x128xf32> to vector<8xf32>
      %28 = vector.shape_cast %27 : vector<8xf32> to vector<8x1xf32>
      %cst_23 = arith.constant 1.280000e+02 : f32
      %29 = vector.broadcast %cst_23 : f32 to vector<8x1xf32>
      %30 = arith.divf %28, %29 : vector<8x1xf32>
      %31 = vector.broadcast %30 : vector<8x1xf32> to vector<8x128xf32>
      %32 = arith.subf %22, %31 : vector<8x128xf32>
      %33 = arith.mulf %32, %32 : vector<8x128xf32>
      %cst_24 = arith.constant dense<0.000000e+00> : vector<8xf32>
      %34 = vector.multi_reduction <add>, %33, %cst_24 [1] : vector<8x128xf32> to vector<8xf32>
      %35 = vector.shape_cast %34 : vector<8xf32> to vector<8x1xf32>
      %cst_25 = arith.constant 1.280000e+02 : f32
      %36 = vector.broadcast %cst_25 : f32 to vector<8x1xf32>
      %37 = arith.divf %35, %36 : vector<8x1xf32>
      %38 = vector.broadcast %30 : vector<8x1xf32> to vector<8x128xf32>
      %39 = arith.subf %22, %38 : vector<8x128xf32>
      %cst_26 = arith.constant 9.99999974E-6 : f32
      %40 = vector.broadcast %cst_26 : f32 to vector<8x1xf32>
      %41 = arith.addf %37, %40 : vector<8x1xf32>
      %42 = math.rsqrt %41 : vector<8x1xf32>
      %43 = vector.broadcast %42 : vector<8x1xf32> to vector<8x128xf32>
      %44 = arith.mulf %39, %43 : vector<8x128xf32>
      %45 = vector.shape_cast %24 : vector<128xf32> to vector<1x128xf32>
      %46 = vector.broadcast %45 : vector<1x128xf32> to vector<8x128xf32>
      %47 = arith.mulf %44, %46 : vector<8x128xf32>
      %48 = vector.shape_cast %26 : vector<128xf32> to vector<1x128xf32>
      %49 = vector.broadcast %48 : vector<1x128xf32> to vector<8x128xf32>
      %50 = arith.addf %47, %49 : vector<8x128xf32>
      %51 = arith.truncf %50 : vector<8x128xf32> to vector<8x128xbf16>
      %c0_27 = arith.constant 0 : index
      %c0_28 = arith.constant 0 : index
      %52 = vector.load %arg9[%c0_27, %c0_28] : memref<8x128xbf16, #tpu.memory_space<vmem>>, vector<8x128xbf16>
      tpu.vector_store %arg9[%c0_27, %c0_28], %51 {strides = array<i32>} : memref<8x128xbf16, #tpu.memory_space<vmem>>, vector<8x128xbf16>,
      %c0_29 = arith.constant 0 : index
      %c0_30 = arith.constant 0 : index
      %53 = vector.load %arg8[%c0_29, %c0_30] : memref<8x128xf32, #tpu.memory_space<vmem>>, vector<8x128xf32>
      tpu.vector_store %arg8[%c0_29, %c0_30], %22 {strides = array<i32>} : memref<8x128xf32, #tpu.memory_space<vmem>>, vector<8x128xf32>,
    } else {
    }
    %c0 = arith.constant 0 : index
    %c0_1 = arith.constant 0 : index
    %3 = vector.load %arg9[%c0, %c0_1] : memref<8x128xbf16, #tpu.memory_space<vmem>>, vector<8x128xbf16>
    %c0_2 = arith.constant 0 : index
    %c0_3 = arith.constant 0 : index
    %4 = vector.load %arg5[%c0_2, %c0_3] : memref<128x128xbf16, #tpu.memory_space<vmem>>, vector<128x128xbf16>
    %cst = arith.constant dense<0.000000e+00> : vector<8x128xf32>
    %5 = tpu.matmul %3, %4, %cst {dimension_numbers = #tpu.dot_dimension_numbers<[1], [0], [0], [1], [0, 0, 1, 1], [], []>} : vector<8x128xbf16>, vector<128x128xbf16>, vector<8x128xf32> -> vector<8x128xf32>
    %c0_4 = arith.constant 0 : index
    %c0_5 = arith.constant 0 : index
    %6 = vector.load %arg6[%c0_4, %c0_5] : memref<128x128xbf16, #tpu.memory_space<vmem>>, vector<128x128xbf16>
    %cst_6 = arith.constant dense<0.000000e+00> : vector<8x128xf32>
    %7 = tpu.matmul %3, %6, %cst_6 {dimension_numbers = #tpu.dot_dimension_numbers<[1], [0], [0], [1], [0, 0, 1, 1], [], []>} : vector<8x128xbf16>, vector<128x128xbf16>, vector<8x128xf32> -> vector<8x128xf32>
    %cst_7 = arith.constant 0.000000e+00 : f32
    %8 = vector.broadcast %cst_7 : f32 to vector<8x128xf32>
    %9 = arith.subf %8, %5 : vector<8x128xf32>
    %10 = math.exp %9 : vector<8x128xf32>
    %cst_8 = arith.constant 1.000000e+00 : f32
    %11 = vector.broadcast %cst_8 : f32 to vector<8x128xf32>
    %12 = arith.addf %11, %10 : vector<8x128xf32>
    %13 = tpu.reciprocal %12 {approx = true} : vector<8x128xf32> -> vector<8x128xf32>
    %14 = arith.mulf %5, %13 : vector<8x128xf32>
    %c0_9 = arith.constant 0 : index
    %c0_10 = arith.constant 0 : index
    %15 = vector.load %arg8[%c0_9, %c0_10] : memref<8x128xf32, #tpu.memory_space<vmem>>, vector<8x128xf32>
    %16 = arith.mulf %14, %7 : vector<8x128xf32>
    %17 = arith.truncf %16 : vector<8x128xf32> to vector<8x128xbf16>
    %c0_11 = arith.constant 0 : index
    %c0_12 = arith.constant 0 : index
    %18 = vector.load %arg7[%c0_11, %c0_12] : memref<128x128xbf16, #tpu.memory_space<vmem>>, vector<128x128xbf16>
    %cst_13 = arith.constant dense<0.000000e+00> : vector<8x128xf32>
    %19 = tpu.matmul %17, %18, %cst_13 {dimension_numbers = #tpu.dot_dimension_numbers<[1], [0], [0], [1], [0, 0, 1, 1], [], []>} : vector<8x128xbf16>, vector<128x128xbf16>, vector<8x128xf32> -> vector<8x128xf32>
    %20 = arith.addf %15, %19 : vector<8x128xf32>
    %c0_14 = arith.constant 0 : index
    %c0_15 = arith.constant 0 : index
    %21 = vector.load %arg8[%c0_14, %c0_15] : memref<8x128xf32, #tpu.memory_space<vmem>>, vector<8x128xf32>
    tpu.vector_store %arg8[%c0_14, %c0_15], %20 {strides = array<i32>} : memref<8x128xf32, #tpu.memory_space<vmem>>, vector<8x128xf32>,
    return
  }
  func.func @transform_0(%arg0: i32, %arg1: i32) -> (i32, i32) {
    %c0_i32 = arith.constant 0 : i32
    %c0_i32_0 = arith.constant 0 : i32
    return %arg0, %c0_i32 : i32, i32
  }
  func.func @transform_1(%arg0: i32, %arg1: i32) -> (i32, i32) {
    %c0_i32 = arith.constant 0 : i32
    %c0_i32_0 = arith.constant 0 : i32
    %c0_i32_1 = arith.constant 0 : i32
    return %c0_i32, %c0_i32_0 : i32, i32
  }
  func.func @transform_2(%arg0: i32, %arg1: i32) -> (i32, i32) {
    %c0_i32 = arith.constant 0 : i32
    %c0_i32_0 = arith.constant 0 : i32
    %c0_i32_1 = arith.constant 0 : i32
    return %c0_i32, %c0_i32_0 : i32, i32
  }
  func.func @transform_3(%arg0: i32, %arg1: i32) -> (i32, i32) {
    %c0_i32 = arith.constant 0 : i32
    %c0_i32_0 = arith.constant 0 : i32
    return %c0_i32, %arg1 : i32, i32
  }
  func.func @transform_4(%arg0: i32, %arg1: i32) -> (i32, i32) {
    %c0_i32 = arith.constant 0 : i32
    %c0_i32_0 = arith.constant 0 : i32
    return %c0_i32, %arg1 : i32, i32
  }
  func.func @transform_5(%arg0: i32, %arg1: i32) -> (i32, i32) {
    %c0_i32 = arith.constant 0 : i32
    %c0_i32_0 = arith.constant 0 : i32
    return %arg1, %c0_i32 : i32, i32
  }
  func.func @transform_6(%arg0: i32, %arg1: i32) -> (i32, i32) {
    %c0_i32 = arith.constant 0 : i32
    %c0_i32_0 = arith.constant 0 : i32
    return %arg0, %c0_i32 : i32, i32
  }
}

</mosaic_0001>

<llo_original>
// kernel: transformer_lm_cnd_forward.9
$region0: #{transformer_lm_cnd_forward.9}
  #allocation0 [shape = 'u32[]', space=smem, size = 0x4, offset = 0x4, fixed_abs, tag = 'smem constant byte address 0x4 - core index']
  #allocation1 [shape = 'u32[144,128]{1,0:T(1,128)}', space=vmem, size = 0x12000, scoped, tag = 'internal scratch']
  #allocation2 [shape = 'bf16[8,128]{1,0:T(8,128)(2,1)}', space=vmem, size = 0x800, scoped, tag = 'scratch operand']
  %s0 = inlined_call_operand.vmem [shape: f32[2,8,128], index: 0, kind: input, shape index: {}]
  %s1 = inlined_call_operand.vmem [shape: f32[1,128], index: 1, kind: input, shape index: {}]
  %s2 = inlined_call_operand.vmem [shape: f32[1,128], index: 2, kind: input, shape index: {}]
  %s3 = inlined_call_operand.vmem [shape: bf16[128,256], index: 3, kind: input, shape index: {}]
  %s4 = inlined_call_operand.vmem [shape: f32[2,8,256], index: 4, kind: output, shape index: {}]
  %s5 = sld [smem:[#allocation0]]
  $region94: #{transformer_lm_cnd_forward.9} parent=0
    _
  %s7 = ssub.s32 1, %s5
  %s8 = scalar_select 0, %s7, %s5
  $region1: #{transformer_lm_cnd_forward.9} parent=0
    #allocation3 [shape = 'u8[65536]{0}', space=vmem, size = 0x10000, scoped, tag = 'input window, operand 3']
    loop: start=0, step=1, limit=6
    $region2: #{transformer_lm_cnd_forward.9} parent=1 // loop_pre_header
      _
    $region3: #{transformer_lm_cnd_forward.9} parent=1 // loop_header
      %s10 = sphi 0, %s14
      %p11 = scmp.ge.s32.totalorder %s10, 6
      %s17 = sphi 0, %s29
      %s18 = sphi 0, %s25
      %s19 = sphi 0, %s17
      %s20 = sphi 0, %s18
      %s21 = sphi 0, %s19
      %s22 = sphi 0, %s20
      %s32 = sphi 0, %s34
      %s35 = sphi 0, %s32
      %s36 = sphi 0, %s35
      %s52 = sphi 0, %s36
      %s56 = sphi 0, %s56
      %s58 = sphi 0, %s56
      %s59 = sphi 0, %s58
      %s73 = sphi 0, %s59
      %s77 = sphi 0, %s77
      %s79 = sphi 0, %s77
      %s80 = sphi 0, %s79
      %s94 = sphi 0, %s80
      %s100 = sphi 0, %s102
      %s103 = sphi 0, %s100
      %s104 = sphi 0, %s103
      %s120 = sphi 0, %s104
      %s128 = sphi 0, %s130
      %s131 = sphi 0, %s128
      %s132 = sphi 0, %s131
      %s148 = sphi 0, %s132
    $region4: #{transformer_lm_cnd_forward.9} parent=1 // loop_header_branch
      %13 = sbr.rel (%p11) target = $region8
    $region5: #{transformer_lm_cnd_forward.9} parent=1 // loop_body
      %s15 = ssub.s32 %s10, 1
      %s16 = ssub.s32 %s10, 2
      %s23 = sadd.s32 1, %s18
      %p24 = scmp.ge.s32.totalorder %s23, 2
      %s25 = scalar_select %p24, 0, %s23
      %s26 = sadd.s32 1, %s17
      %s27 = scalar_select %p24, %s26, %s17
      %p28 = scmp.ge.s32.totalorder %s27, 2
      %s29 = scalar_select %p28, 0, %s27
      %s30 = ssub.s32 %s17, %s29
      %p31 = scmp.eq.s32.totalorder %s30, 0
      %s33 = sadd.s32 %s32, 1
      %s34 = scalar_select %p31, %s32, %s33
      %p37 = pneg %p31
      %p38 = scmp.eq.s32.totalorder %s10, 3
      %p39 = por %p37, %p38
      %p40 = scmp.ne.s32.totalorder %s32, %s35
      %p41 = scmp.eq.s32.totalorder %s10, 0
      %p42 = por %p40, %p41
      %p43 = scmp.ne.s32.totalorder %s32, %s35
      %p44 = scmp.eq.s32.totalorder %s15, 3
      %p45 = por %p43, %p44
      %p46 = scmp.ne.s32.totalorder %s35, %s36
      %p47 = scmp.eq.s32.totalorder %s15, 0
      %p48 = por %p46, %p47
      %p49 = scmp.ne.s32.totalorder %s35, %s36
      %p50 = scmp.eq.s32.totalorder %s16, 3
      %p51 = por %p49, %p50
      %p53 = scmp.ne.s32.totalorder %s36, %s52
      %p54 = scmp.eq.s32.totalorder %s16, 0
      %p55 = por %p53, %p54
      %s57 = sadd.s32 %s56, 1
      %p60 = scmp.eq.s32.totalorder %s10, 3
      %p61 = scmp.ne.s32.totalorder %s56, %s58
      %p62 = scmp.eq.s32.totalorder %s10, 0
      %p63 = por %p61, %p62
      %p64 = scmp.ne.s32.totalorder %s56, %s58
      %p65 = scmp.eq.s32.totalorder %s15, 3
      %p66 = por %p64, %p65
      %p67 = scmp.ne.s32.totalorder %s58, %s59
      %p68 = scmp.eq.s32.totalorder %s15, 0
      %p69 = por %p67, %p68
      %p70 = scmp.ne.s32.totalorder %s58, %s59
      %p71 = scmp.eq.s32.totalorder %s16, 3
      %p72 = por %p70, %p71
      %p74 = scmp.ne.s32.totalorder %s59, %s73
      %p75 = scmp.eq.s32.totalorder %s16, 0
      %p76 = por %p74, %p75
      %s78 = sadd.s32 %s77, 1
      %p81 = scmp.eq.s32.totalorder %s10, 3
      %p82 = scmp.ne.s32.totalorder %s77, %s79
      %p83 = scmp.eq.s32.totalorder %s10, 0
      %p84 = por %p82, %p83
      %p85 = scmp.ne.s32.totalorder %s77, %s79
      %p86 = scmp.eq.s32.totalorder %s15, 3
      %p87 = por %p85, %p86
      %p88 = scmp.ne.s32.totalorder %s79, %s80
      %p89 = scmp.eq.s32.totalorder %s15, 0
      %p90 = por %p88, %p89
      %p91 = scmp.ne.s32.totalorder %s79, %s80
      %p92 = scmp.eq.s32.totalorder %s16, 3
      %p93 = por %p91, %p92
      %p95 = scmp.ne.s32.totalorder %s80, %s94
      %p96 = scmp.eq.s32.totalorder %s16, 0
      %p97 = por %p95, %p96
      %s98 = ssub.s32 %s18, %s25
      %p99 = scmp.eq.s32.totalorder %s98, 0
      %s101 = sadd.s32 %s100, 1
      %s102 = scalar_select %p99, %s100, %s101
      %p105 = pneg %p99
      %p106 = scmp.eq.s32.totalorder %s10, 3
      %p107 = por %p105, %p106
      %p108 = scmp.ne.s32.totalorder %s100, %s103
      %p109 = scmp.eq.s32.totalorder %s10, 0
      %p110 = por %p108, %p109
      %p111 = scmp.ne.s32.totalorder %s100, %s103
      %p112 = scmp.eq.s32.totalorder %s15, 3
      %p113 = por %p111, %p112
      %p114 = scmp.ne.s32.totalorder %s103, %s104
      %p115 = scmp.eq.s32.totalorder %s15, 0
      %p116 = por %p114, %p115
      %p117 = scmp.ne.s32.totalorder %s103, %s104
      %p118 = scmp.eq.s32.totalorder %s16, 3
      %p119 = por %p117, %p118
      %p121 = scmp.ne.s32.totalorder %s104, %s120
      %p122 = scmp.eq.s32.totalorder %s16, 0
      %p123 = por %p121, %p122
      %s124 = ssub.s32 %s17, %s29
      %s125 = ssub.s32 %s18, %s25
      %s126 = sor.u32 %s124, %s125
      %p127 = scmp.eq.s32.totalorder %s126, 0
      %s129 = sadd.s32 %s128, 1
      %s130 = scalar_select %p127, %s128, %s129
      %p133 = pneg %p127
      %p134 = scmp.eq.s32.totalorder %s10, 3
      %p135 = por %p133, %p134
      %p136 = scmp.ne.s32.totalorder %s128, %s131
      %p137 = scmp.eq.s32.totalorder %s10, 0
      %p138 = por %p136, %p137
      %p139 = scmp.ne.s32.totalorder %s128, %s131
      %p140 = scmp.eq.s32.totalorder %s15, 3
      %p141 = por %p139, %p140
      %p142 = scmp.ne.s32.totalorder %s131, %s132
      %p143 = scmp.eq.s32.totalorder %s15, 0
      %p144 = por %p142, %p143
      %p145 = scmp.ne.s32.totalorder %s131, %s132
      %p146 = scmp.eq.s32.totalorder %s16, 3
      %p147 = por %p145, %p146
      %p149 = scmp.ne.s32.totalorder %s132, %s148
      %p150 = scmp.eq.s32.totalorder %s16, 0
      %p151 = por %p149, %p150
      %p152 = scmp.le.s32.totalorder 1, %s10
      %p153 = scmp.lt.s32.totalorder %s10, 5
      %p154 = pnand %p152, %p153
      %p155 = pneg %p154
      // Predicated region
      $region9: #{transformer_lm_cnd_forward.9} parent=5 // pred_check
        _
      $region10: #{transformer_lm_cnd_forward.9} parent=5 // pred_check_branch
        %157 = sbr.rel (%p154) target = $region12
      $region11: #{transformer_lm_cnd_forward.9} parent=5 // pred_region
        %s158 = ssub.s32 %s10, 1
        // Predicated region
        $region13: #{transformer_lm_cnd_forward.9} parent=11 // pred_check
          %p159 = pneg %p69
        $region14: #{transformer_lm_cnd_forward.9} parent=11 // pred_check_branch
          %161 = sbr.rel (%p159) target = $region16
        $region15: #{transformer_lm_cnd_forward.9} parent=11 // pred_region
          _
        $region16: #{transformer_lm_cnd_forward.9} parent=11 // pred_fallthru
          _
        // Predicated region
        $region17: #{transformer_lm_cnd_forward.9} parent=11 // pred_check
          %p162 = pneg %p90
        $region18: #{transformer_lm_cnd_forward.9} parent=11 // pred_check_branch
          %164 = sbr.rel (%p162) target = $region20
        $region19: #{transformer_lm_cnd_forward.9} parent=11 // pred_region
          _
        $region20: #{transformer_lm_cnd_forward.9} parent=11 // pred_fallthru
          _
      $region12: #{transformer_lm_cnd_forward.9} parent=5 // pred_fallthru
        _
      %p165 = scmp.lt.s32.totalorder %s10, 4
      // Predicated region
      $region21: #{transformer_lm_cnd_forward.9} parent=5 // pred_check
        %p166 = pneg %p165
      $region22: #{transformer_lm_cnd_forward.9} parent=5 // pred_check_branch
        %168 = sbr.rel (%p166) target = $region24
      $region23: #{transformer_lm_cnd_forward.9} parent=5 // pred_region
        // Predicated region
        $region25: #{transformer_lm_cnd_forward.9} parent=23 // pred_check
          %p169 = pneg %p42
        $region26: #{transformer_lm_cnd_forward.9} parent=23 // pred_check_branch
          %171 = sbr.rel (%p169) target = $region28
        $region27: #{transformer_lm_cnd_forward.9} parent=23 // pred_region
          %p172 = scmp.lt.s32.totalorder %s17, 1
          %s173 = scalar_select %p172, %s17, 1
          %s174 = smul.addr %s173, 8
          %s175 = scalar_lea.vmem %s0, %s174
        $region28: #{transformer_lm_cnd_forward.9} parent=23 // pred_fallthru
          _
        // Predicated region
        $region29: #{transformer_lm_cnd_forward.9} parent=23 // pred_check
          %p176 = pneg %p110
        $region30: #{transformer_lm_cnd_forward.9} parent=23 // pred_check_branch
          %178 = sbr.rel (%p176) target = $region32
        $region31: #{transformer_lm_cnd_forward.9} parent=23 // pred_region
          %s179 = sand.u32 %s100, 1
          %s180 = sand.u32 %s100, 1
          %s181 = smul.addr %s180, 64
          %s182 = scalar_lea.vmem [#allocation3], %s181
          %s183 = smul.addr %s18, 4
          %s184 = scalar_lea.vmem %s3, %s183
          // Predicated region
          $region33: #{transformer_lm_cnd_forward.9} parent=31 // pred_check
            _
          $region34: #{transformer_lm_cnd_forward.9} parent=31 // pred_check_branch
            %186 = sbr.rel (0) target = $region36
          $region35: #{transformer_lm_cnd_forward.9} parent=31 // pred_region
            // Predicated region
            $region37: #{transformer_lm_cnd_forward.9} parent=35 // pred_check
              _
            $region38: #{transformer_lm_cnd_forward.9} parent=35 // pred_check_branch
              %188 = sbr.rel target = $region40
            $region39: #{transformer_lm_cnd_forward.9} parent=35 // pred_region
              // Predicated region
              $region52: #{transformer_lm_cnd_forward.9} parent=39 // pred_check
                _
              $region53: #{transformer_lm_cnd_forward.9} parent=39 // pred_check_branch
                %233 = sbr.rel (0) target = $region55
              $region54: #{transformer_lm_cnd_forward.9} parent=39 // pred_region
                loop: start=0, step=1, limit=1
                $region56: #{transformer_lm_cnd_forward.9} parent=54 // loop_pre_header
                  _
                $region57: #{transformer_lm_cnd_forward.9} parent=54 // loop_header
                  %s235 = sphi 0, %s239
                  %p236 = scmp.ge.s32.totalorder %s235, 1
                  %s240 = sphi %s184, %s184
                  %s241 = sphi %s182, %s182
                $region58: #{transformer_lm_cnd_forward.9} parent=54 // loop_header_branch
                  %238 = sbr.rel (%p236) target = $region62
                $region59: #{transformer_lm_cnd_forward.9} parent=54 // loop_body
                  _
                $region60: #{transformer_lm_cnd_forward.9} parent=54 // loop_footer
                  %s239 = sadd.s32 1, %s235
                $region61: #{transformer_lm_cnd_forward.9} parent=54 // loop_footer_branch
                  %234 = sbr.rel target = $region57
                $region62: #{transformer_lm_cnd_forward.9} parent=54 // loop_exit
                  _
                loop: start=0, step=1, limit=1
                $region63: #{transformer_lm_cnd_forward.9} parent=54 // loop_pre_header
                  _
                $region64: #{transformer_lm_cnd_forward.9} parent=54 // loop_header
                  %s244 = sphi 0, %s248
                  %p245 = scmp.ge.s32.totalorder %s244, 1
                  %s249 = sphi %s184, %s184
                  %s250 = sphi %s182, %s182
                $region65: #{transformer_lm_cnd_forward.9} parent=54 // loop_header_branch
                  %247 = sbr.rel (%p245) target = $region69
                $region66: #{transformer_lm_cnd_forward.9} parent=54 // loop_body
                  %v251 = vld [vmem:[%s249] sm:$0xf]
                  %252 = vst [vmem:[%s250] sm:$0xf] %v251
                  %v253 = vld [vmem:[%s249 + $0x8] sm:$0xf]
                  %254 = vst [vmem:[%s250 + $0x4] sm:$0xf] %v253
                  %v255 = vld [vmem:[%s249 + $0x10] sm:$0xf]
                  %256 = vst [vmem:[%s250 + $0x8] sm:$0xf] %v255
                  %v257 = vld [vmem:[%s249 + $0x18] sm:$0xf]
                  %258 = vst [vmem:[%s250 + $0xc] sm:$0xf] %v257
                  %v259 = vld [vmem:[%s249 + $0x20] sm:$0xf]
                  %260 = vst [vmem:[%s250 + $0x10] sm:$0xf] %v259
                  %v261 = vld [vmem:[%s249 + $0x28] sm:$0xf]
                  %262 = vst [vmem:[%s250 + $0x14] sm:$0xf] %v261
                  %v263 = vld [vmem:[%s249 + $0x30] sm:$0xf]
                  %264 = vst [vmem:[%s250 + $0x18] sm:$0xf] %v263
                  %v265 = vld [vmem:[%s249 + $0x38] sm:$0xf]
                  %266 = vst [vmem:[%s250 + $0x1c] sm:$0xf] %v265
                  %v267 = vld [vmem:[%s249 + $0x40] sm:$0xf]
                  %268 = vst [vmem:[%s250 + $0x20] sm:$0xf] %v267
                  %v269 = vld [vmem:[%s249 + $0x48] sm:$0xf]
                  %270 = vst [vmem:[%s250 + $0x24] sm:$0xf] %v269
                  %v271 = vld [vmem:[%s249 + $0x50] sm:$0xf]
                  %272 = vst [vmem:[%s250 + $0x28] sm:$0xf] %v271
                  %v273 = vld [vmem:[%s249 + $0x58] sm:$0xf]
                  %274 = vst [vmem:[%s250 + $0x2c] sm:$0xf] %v273
                  %v275 = vld [vmem:[%s249 + $0x60] sm:$0xf]
                  %276 = vst [vmem:[%s250 + $0x30] sm:$0xf] %v275
                  %v277 = vld [vmem:[%s249 + $0x68] sm:$0xf]
                  %278 = vst [vmem:[%s250 + $0x34] sm:$0xf] %v277
                  %v279 = vld [vmem:[%s249 + $0x70] sm:$0xf]
                  %280 = vst [vmem:[%s250 + $0x38] sm:$0xf] %v279
                  %v281 = vld [vmem:[%s249 + $0x78] sm:$0xf]
                  %282 = vst [vmem:[%s250 + $0x3c] sm:$0xf] %v281
                $region67: #{transformer_lm_cnd_forward.9} parent=54 // loop_footer
                  %s248 = sadd.s32 1, %s244
                $region68: #{transformer_lm_cnd_forward.9} parent=54 // loop_footer_branch
                  %243 = sbr.rel target = $region64
                $region69: #{transformer_lm_cnd_forward.9} parent=54 // loop_exit
                  _
              $region55: #{transformer_lm_cnd_forward.9} parent=39 // pred_fallthru
                _
            $region40: #{transformer_lm_cnd_forward.9} parent=35 // pred_fallthru
              _
            // Predicated region
            $region41: #{transformer_lm_cnd_forward.9} parent=35 // pred_check
              _
            $region42: #{transformer_lm_cnd_forward.9} parent=35 // pred_check_branch
              %190 = sbr.rel (0) target = $region44
            $region43: #{transformer_lm_cnd_forward.9} parent=35 // pred_region
              loop: start=0, step=1, limit=1
              $region45: #{transformer_lm_cnd_forward.9} parent=43 // loop_pre_header
                _
              $region46: #{transformer_lm_cnd_forward.9} parent=43 // loop_header
                %s193 = sphi 0, %s197
                %p194 = scmp.ge.s32.totalorder %s193, 1
                %s198 = sphi %s184, %s184
                %s199 = sphi %s182, %s182
              $region47: #{transformer_lm_cnd_forward.9} parent=43 // loop_header_branch
                %196 = sbr.rel (%p194) target = $region51
              $region48: #{transformer_lm_cnd_forward.9} parent=43 // loop_body
                %v200 = vld [vmem:[%s198] sm:$0xf]
                %201 = vst [vmem:[%s199] sm:$0xf] %v200
                %v202 = vld [vmem:[%s198 + $0x8] sm:$0xf]
                %203 = vst [vmem:[%s199 + $0x4] sm:$0xf] %v202
                %v204 = vld [vmem:[%s198 + $0x10] sm:$0xf]
                %205 = vst [vmem:[%s199 + $0x8] sm:$0xf] %v204
                %v206 = vld [vmem:[%s198 + $0x18] sm:$0xf]
                %207 = vst [vmem:[%s199 + $0xc] sm:$0xf] %v206
                %v208 = vld [vmem:[%s198 + $0x20] sm:$0xf]
                %209 = vst [vmem:[%s199 + $0x10] sm:$0xf] %v208
                %v210 = vld [vmem:[%s198 + $0x28] sm:$0xf]
                %211 = vst [vmem:[%s199 + $0x14] sm:$0xf] %v210
                %v212 = vld [vmem:[%s198 + $0x30] sm:$0xf]
                %213 = vst [vmem:[%s199 + $0x18] sm:$0xf] %v212
                %v214 = vld [vmem:[%s198 + $0x38] sm:$0xf]
                %215 = vst [vmem:[%s199 + $0x1c] sm:$0xf] %v214
                %v216 = vld [vmem:[%s198 + $0x40] sm:$0xf]
                %217 = vst [vmem:[%s199 + $0x20] sm:$0xf] %v216
                %v218 = vld [vmem:[%s198 + $0x48] sm:$0xf]
                %219 = vst [vmem:[%s199 + $0x24] sm:$0xf] %v218
                %v220 = vld [vmem:[%s198 + $0x50] sm:$0xf]
                %221 = vst [vmem:[%s199 + $0x28] sm:$0xf] %v220
                %v222 = vld [vmem:[%s198 + $0x58] sm:$0xf]
                %223 = vst [vmem:[%s199 + $0x2c] sm:$0xf] %v222
                %v224 = vld [vmem:[%s198 + $0x60] sm:$0xf]
                %225 = vst [vmem:[%s199 + $0x30] sm:$0xf] %v224
                %v226 = vld [vmem:[%s198 + $0x68] sm:$0xf]
                %227 = vst [vmem:[%s199 + $0x34] sm:$0xf] %v226
                %v228 = vld [vmem:[%s198 + $0x70] sm:$0xf]
                %229 = vst [vmem:[%s199 + $0x38] sm:$0xf] %v228
                %v230 = vld [vmem:[%s198 + $0x78] sm:$0xf]
                %231 = vst [vmem:[%s199 + $0x3c] sm:$0xf] %v230
              $region49: #{transformer_lm_cnd_forward.9} parent=43 // loop_footer
                %s197 = sadd.s32 1, %s193
              $region50: #{transformer_lm_cnd_forward.9} parent=43 // loop_footer_branch
                %192 = sbr.rel target = $region46
              $region51: #{transformer_lm_cnd_forward.9} parent=43 // loop_exit
                _
            $region44: #{transformer_lm_cnd_forward.9} parent=35 // pred_fallthru
              _
          $region36: #{transformer_lm_cnd_forward.9} parent=31 // pred_fallthru
            _
          %283 = vnop
        $region32: #{transformer_lm_cnd_forward.9} parent=23 // pred_fallthru
          _
      $region24: #{transformer_lm_cnd_forward.9} parent=5 // pred_fallthru
        _
      %p284 = scmp.le.s32.totalorder 1, %s10
      %p285 = scmp.lt.s32.totalorder %s10, 5
      %p286 = pnand %p284, %p285
      %p287 = pneg %p286
      // Predicated region
      $region70: #{transformer_lm_cnd_forward.9} parent=5 // pred_check
        _
      $region71: #{transformer_lm_cnd_forward.9} parent=5 // pred_check_branch
        %289 = sbr.rel (%p286) target = $region73
      $region72: #{transformer_lm_cnd_forward.9} parent=5 // pred_region
        %s290 = ssub.s32 %s10, 1
        %s291 = sand.u32 %s103, 1
        %s292 = sand.u32 %s103, 1
        %s293 = smul.addr %s292, 64
        %s294 = scalar_lea.vmem [#allocation3], %s293
        // Predicated region
        $region74: #{transformer_lm_cnd_forward.9} parent=72 // pred_check
          %p295 = pneg %p116
        $region75: #{transformer_lm_cnd_forward.9} parent=72 // pred_check_branch
          %297 = sbr.rel (%p295) target = $region77
        $region76: #{transformer_lm_cnd_forward.9} parent=72 // pred_region
          _
        $region77: #{transformer_lm_cnd_forward.9} parent=72 // pred_fallthru
          _
        %p298 = scmp.lt.s32.totalorder %s19, 1
        %s299 = scalar_select %p298, %s19, 1
        %s300 = smul.addr %s299, 8
        %s301 = scalar_lea.vmem %s0, %s300
        %p302 = pneg %p48
        %p303 = pneg %p45
        %p304 = pneg %p69
        %p305 = pneg %p66
        %p306 = pneg %p90
        %p307 = pneg %p87
        %s308 = sand.u32 %s103, 1
        %s309 = sand.u32 %s103, 1
        %s310 = smul.addr %s309, 64
        %s311 = scalar_lea.vmem [#allocation3], %s310
        %p312 = pneg %p116
        %p313 = pneg %p113
        %p314 = pneg %p144
        %p315 = pneg %p141
        %p316 = scmp.lt.s32.totalorder %s19, 1
        %s317 = scalar_select %p316, %s19, 1
        %p318 = scmp.lt.s32.totalorder %s20, 1
        %s319 = scalar_select %p318, %s20, 1
        %s320 = smul.addr %s317, 2
        %s321 = sadd.s32 %s319, %s320
        %s322 = smul.addr %s321, 8
        %s323 = scalar_lea.vmem %s4, %s322
        %p324 = scmp.lt.s32.totalorder %s19, 1
        %s325 = scalar_select %p324, %s19, 1
        %s326 = smul.addr %s325, 8
        %s327 = scalar_lea.vmem %s0, %s326
        %p328 = scmp.lt.s32.totalorder %s19, 1
        %s329 = scalar_select %p328, %s19, 1
        %p330 = scmp.lt.s32.totalorder %s20, 1
        %s331 = scalar_select %p330, %s20, 1
        %s332 = smul.addr %s329, 2
        %s333 = sadd.s32 %s331, %s332
        %s334 = smul.addr %s333, 8
        %s335 = scalar_lea.vmem %s4, %s334
        %p337 = scmp.eq.s32.totalorder %s20, 0
        // Predicated region
        $region78: #{transformer_lm_cnd_forward.9} parent=72 // pred_check
          %p338 = pneg %p337
        $region79: #{transformer_lm_cnd_forward.9} parent=72 // pred_check_branch
          %340 = sbr.rel (%p338) target = $region81
        $region80: #{transformer_lm_cnd_forward.9} parent=72 // pred_region
          %v341 = vld [vmem:[%s327] sm:$0xff]
          %v342 = vld [vmem:[%s1] sm:$0x1]
          %v343 = vld [vmem:[%s2] sm:$0x1]
          %344 = vadd.xlane.f32.xlu0 %v341
          %v345 = vpop.xlane.xlu0 %344
          %v346 = vrcp.pop 128.0
          %v347 = vmul.f32 %v345, %v346
          %v348 = vsub.f32 %v341, %v347
          %v349 = vmul.f32 %v348, %v348
          %350 = vadd.xlane.f32.xlu0 %v349
          %v351 = vpop.xlane.xlu0 %350
          %v352 = vmul.f32 %v351, %v346
          %v353 = vadd.f32 %v352, 1e-05
          %v354 = vrsqrt.pop %v353
          %v355 = vmul.f32 %v348, %v354
          %v357 = vlaneseq
          %v358 = vshrl.u32 %v357, 7
          %v359 = vsub.s32 0, %v358
          %v360 = vrot.slane %v342, %v359
          %v362 = vmul.f32 %v355, %v360
          %v364 = vlaneseq
          %v365 = vshrl.u32 %v364, 7
          %v366 = vsub.s32 0, %v365
          %v367 = vrot.slane %v343, %v366
          %v369 = vadd.f32 %v362, %v367
          %v370 = vpack.c.bf16 %v369, %v369
          %371 = vst [vmem:[#allocation2] sm:$0xf] %v370
        $region81: #{transformer_lm_cnd_forward.9} parent=72 // pred_fallthru
          _
        %v372 = vld [vmem:[#allocation2] sm:$0xf]
        %v373 = vld [vmem:[%s294] sm:$0xf]
        %v374 = vld [vmem:[%s294 + $0x4] sm:$0xf]
        %v375 = vld [vmem:[%s294 + $0x8] sm:$0xf]
        %v376 = vld [vmem:[%s294 + $0xc] sm:$0xf]
        %v377 = vld [vmem:[%s294 + $0x10] sm:$0xf]
        %v378 = vld [vmem:[%s294 + $0x14] sm:$0xf]
        %v379 = vld [vmem:[%s294 + $0x18] sm:$0xf]
        %v380 = vld [vmem:[%s294 + $0x1c] sm:$0xf]
        %v381 = vld [vmem:[%s294 + $0x20] sm:$0xf]
        %v382 = vld [vmem:[%s294 + $0x24] sm:$0xf]
        %v383 = vld [vmem:[%s294 + $0x28] sm:$0xf]
        %v384 = vld [vmem:[%s294 + $0x2c] sm:$0xf]
        %v385 = vld [vmem:[%s294 + $0x30] sm:$0xf]
        %v386 = vld [vmem:[%s294 + $0x34] sm:$0xf]
        %v387 = vld [vmem:[%s294 + $0x38] sm:$0xf]
        %v388 = vld [vmem:[%s294 + $0x3c] sm:$0xf]
        %v405 = vunpack.c.l.b16 %v373
        %v406 = vunpack.c.l.b16 %v374
        %v407 = vunpack.c.l.b16 %v375
        %v408 = vunpack.c.l.b16 %v376
        %v409 = vunpack.c.l.b16 %v377
        %v410 = vunpack.c.l.b16 %v378
        %v411 = vunpack.c.l.b16 %v379
        %v412 = vunpack.c.l.b16 %v380
        %v413 = vunpack.c.l.b16 %v381
        %v414 = vunpack.c.l.b16 %v382
        %v415 = vunpack.c.l.b16 %v383
        %v416 = vunpack.c.l.b16 %v384
        %v417 = vunpack.c.l.b16 %v385
        %v418 = vunpack.c.l.b16 %v386
        %v419 = vunpack.c.l.b16 %v387
        %v420 = vunpack.c.l.b16 %v388
        %v421 = vpack.c.b16 %v406, %v405
        %v422 = vpack.c.b16 %v408, %v407
        %v423 = vpack.c.b16 %v410, %v409
        %v424 = vpack.c.b16 %v412, %v411
        %v425 = vpack.c.b16 %v414, %v413
        %v426 = vpack.c.b16 %v416, %v415
        %v427 = vpack.c.b16 %v418, %v417
        %v428 = vpack.c.b16 %v420, %v419
        %437 = vmatprep.subr.bf16.mxu0 0
        %438 = vmatpush1.bf16.msra.mxu0 %v421
        %439 = vmatprep.subr.bf16.mxu0 0
        %440 = vmatpush1.bf16.msra.mxu0 %v422
        %441 = vmatprep.subr.bf16.mxu0 0
        %442 = vmatpush1.bf16.msra.mxu0 %v423
        %443 = vmatprep.subr.bf16.mxu0 0
        %444 = vmatpush1.bf16.msra.mxu0 %v424
        %445 = vmatprep.subr.bf16.mxu0 0
        %446 = vmatpush1.bf16.msra.mxu0 %v425
        %447 = vmatprep.subr.bf16.mxu0 0
        %448 = vmatpush1.bf16.msra.mxu0 %v426
        %449 = vmatprep.subr.bf16.mxu0 0
        %450 = vmatpush1.bf16.msra.mxu0 %v427
        %451 = vmatprep.subr.bf16.mxu0 0
        %452 = vmatpush1.bf16.msra.mxu0 %v428
        %453 = vmatprep.subr.bf16.mxu0 0
        %454 = vmatpush1.bf16.msra.mxu0 0
        %455 = vmatprep.subr.bf16.mxu0 0
        %456 = vmatpush1.bf16.msra.mxu0 0
        %457 = vmatprep.subr.bf16.mxu0 0
        %458 = vmatpush1.bf16.msra.mxu0 0
        %459 = vmatprep.subr.bf16.mxu0 0
        %460 = vmatpush1.bf16.msra.mxu0 0
        %461 = vmatprep.subr.bf16.mxu0 0
        %462 = vmatpush1.bf16.msra.mxu0 0
        %463 = vmatprep.subr.bf16.mxu0 0
        %464 = vmatpush1.bf16.msra.mxu0 0
        %465 = vmatprep.subr.bf16.mxu0 0
        %466 = vmatpush1.bf16.msra.mxu0 0
        %467 = vmatprep.subr.bf16.mxu0 0
        %468 = vmatpush1.bf16.msra.mxu0 0
        %469 = vmatprep.mubr.bf16.mxu0 0
        %470 = vmatmul.mubr.bf16.gmra.mrb[0].mxu0 %v372
        %v471 = vpop.f32.mrb[0].mxu0
        %v472 = vadd.f32 0.0, %v471
        %v473 = vpop.f32.mrb[0].mxu0
        %v474 = vpop.f32.mrb[0].mxu0
        %v475 = vpop.f32.mrb[0].mxu0
        %476 = vdwg.mxu0
        %477 = vst [vmem:[%s335] sm:$0xff] %v472
        %p478 = scmp.lt.s32.totalorder %s19, 1
        %s479 = scalar_select %p478, %s19, 1
        %p480 = scmp.lt.s32.totalorder %s20, 1
        %s481 = scalar_select %p480, %s20, 1
        %s482 = smul.addr %s479, 2
        %s483 = sadd.s32 %s481, %s482
        %s484 = smul.addr %s483, 8
        %s485 = scalar_lea.vmem %s4, %s484
        // Predicated region
        $region82: #{transformer_lm_cnd_forward.9} parent=72 // pred_check
          %p486 = pneg %p141
        $region83: #{transformer_lm_cnd_forward.9} parent=72 // pred_check_branch
          %488 = sbr.rel (%p486) target = $region85
        $region84: #{transformer_lm_cnd_forward.9} parent=72 // pred_region
          _
        $region85: #{transformer_lm_cnd_forward.9} parent=72 // pred_fallthru
          _
      $region73: #{transformer_lm_cnd_forward.9} parent=5 // pred_fallthru
        _
      %p489 = scmp.le.s32.totalorder 2, %s10
      // Predicated region
      $region86: #{transformer_lm_cnd_forward.9} parent=5 // pred_check
        %p490 = pneg %p489
      $region87: #{transformer_lm_cnd_forward.9} parent=5 // pred_check_branch
        %492 = sbr.rel (%p490) target = $region89
      $region88: #{transformer_lm_cnd_forward.9} parent=5 // pred_region
        %s493 = ssub.s32 %s10, 2
        // Predicated region
        $region90: #{transformer_lm_cnd_forward.9} parent=88 // pred_check
          %p494 = pneg %p147
        $region91: #{transformer_lm_cnd_forward.9} parent=88 // pred_check_branch
          %496 = sbr.rel (%p494) target = $region93
        $region92: #{transformer_lm_cnd_forward.9} parent=88 // pred_region
          %p497 = scmp.lt.s32.totalorder %s21, 1
          %s498 = scalar_select %p497, %s21, 1
          %p499 = scmp.lt.s32.totalorder %s22, 1
          %s500 = scalar_select %p499, %s22, 1
          %s501 = smul.addr %s498, 2
          %s502 = sadd.s32 %s500, %s501
          %s503 = smul.addr %s502, 8
          %s504 = scalar_lea.vmem %s4, %s503
        $region93: #{transformer_lm_cnd_forward.9} parent=88 // pred_fallthru
          _
      $region89: #{transformer_lm_cnd_forward.9} parent=5 // pred_fallthru
        _
    $region6: #{transformer_lm_cnd_forward.9} parent=1 // loop_footer
      %s14 = sadd.s32 1, %s10
    $region7: #{transformer_lm_cnd_forward.9} parent=1 // loop_footer_branch
      %9 = sbr.rel target = $region3
    $region8: #{transformer_lm_cnd_forward.9} parent=1 // loop_exit
      _

// kernel: transformer_lm_cnd_forward.6
$region0: #{transformer_lm_cnd_forward.6}
  #allocation0 [shape = 'u32[]', space=smem, size = 0x4, offset = 0x4, fixed_abs, tag = 'smem constant byte address 0x4 - core index']
  #allocation1 [shape = 'u32[144,128]{1,0:T(1,128)}', space=vmem, size = 0x12000, scoped, tag = 'internal scratch']
  #allocation2 [shape = 'bf16[8,128]{1,0:T(8,128)(2,1)}', space=vmem, size = 0x800, scoped, tag = 'scratch operand']
  %s0 = inlined_call_operand.vmem [shape: f32[16,128], index: 0, kind: input, shape index: {}]
  %s1 = inlined_call_operand.vmem [shape: f32[1,128], index: 1, kind: input, shape index: {}]
  %s2 = inlined_call_operand.vmem [shape: f32[1,128], index: 2, kind: input, shape index: {}]
  %s3 = inlined_call_operand.vmem [shape: bf16[128,256], index: 3, kind: input, shape index: {}]
  %s4 = inlined_call_operand.vmem [shape: bf16[128,256], index: 4, kind: input, shape index: {}]
  %s5 = inlined_call_operand.vmem [shape: bf16[256,128], index: 5, kind: input, shape index: {}]
  %s6 = inlined_call_operand.vmem [shape: f32[16,128], index: 6, kind: output, shape index: {}]
  %s7 = sld [smem:[#allocation0]]
  $region143: #{transformer_lm_cnd_forward.6} parent=0
    _
  %s9 = ssub.s32 1, %s7
  %s10 = scalar_select 0, %s9, %s7
  $region1: #{transformer_lm_cnd_forward.6} parent=0
    #allocation3 [shape = 'u8[65536]{0}', space=vmem, size = 0x10000, scoped, tag = 'input window, operand 3']
    #allocation4 [shape = 'u8[65536]{0}', space=vmem, size = 0x10000, scoped, tag = 'input window, operand 4']
    loop: start=0, step=1, limit=6
    $region2: #{transformer_lm_cnd_forward.6} parent=1 // loop_pre_header
      _
    $region3: #{transformer_lm_cnd_forward.6} parent=1 // loop_header
      %s12 = sphi 0, %s16
      %p13 = scmp.ge.s32.totalorder %s12, 6
      %s19 = sphi 0, %s31
      %s20 = sphi 0, %s27
      %s21 = sphi 0, %s19
      %s22 = sphi 0, %s20
      %s23 = sphi 0, %s21
      %s24 = sphi 0, %s22
      %s34 = sphi 0, %s36
      %s37 = sphi 0, %s34
      %s38 = sphi 0, %s37
      %s54 = sphi 0, %s38
      %s58 = sphi 0, %s58
      %s60 = sphi 0, %s58
      %s61 = sphi 0, %s60
      %s75 = sphi 0, %s61
      %s79 = sphi 0, %s79
      %s81 = sphi 0, %s79
      %s82 = sphi 0, %s81
      %s96 = sphi 0, %s82
      %s102 = sphi 0, %s104
      %s105 = sphi 0, %s102
      %s106 = sphi 0, %s105
      %s122 = sphi 0, %s106
      %s128 = sphi 0, %s130
      %s131 = sphi 0, %s128
      %s132 = sphi 0, %s131
      %s148 = sphi 0, %s132
      %s154 = sphi 0, %s156
      %s157 = sphi 0, %s154
      %s158 = sphi 0, %s157
      %s174 = sphi 0, %s158
      %s180 = sphi 0, %s182
      %s183 = sphi 0, %s180
      %s184 = sphi 0, %s183
      %s200 = sphi 0, %s184
    $region4: #{transformer_lm_cnd_forward.6} parent=1 // loop_header_branch
      %15 = sbr.rel (%p13) target = $region8
    $region5: #{transformer_lm_cnd_forward.6} parent=1 // loop_body
      %s17 = ssub.s32 %s12, 1
      %s18 = ssub.s32 %s12, 2
      %s25 = sadd.s32 1, %s20
      %p26 = scmp.ge.s32.totalorder %s25, 2
      %s27 = scalar_select %p26, 0, %s25
      %s28 = sadd.s32 1, %s19
      %s29 = scalar_select %p26, %s28, %s19
      %p30 = scmp.ge.s32.totalorder %s29, 2
      %s31 = scalar_select %p30, 0, %s29
      %s32 = ssub.s32 %s19, %s31
      %p33 = scmp.eq.s32.totalorder %s32, 0
      %s35 = sadd.s32 %s34, 1
      %s36 = scalar_select %p33, %s34, %s35
      %p39 = pneg %p33
      %p40 = scmp.eq.s32.totalorder %s12, 3
      %p41 = por %p39, %p40
      %p42 = scmp.ne.s32.totalorder %s34, %s37
      %p43 = scmp.eq.s32.totalorder %s12, 0
      %p44 = por %p42, %p43
      %p45 = scmp.ne.s32.totalorder %s34, %s37
      %p46 = scmp.eq.s32.totalorder %s17, 3
      %p47 = por %p45, %p46
      %p48 = scmp.ne.s32.totalorder %s37, %s38
      %p49 = scmp.eq.s32.totalorder %s17, 0
      %p50 = por %p48, %p49
      %p51 = scmp.ne.s32.totalorder %s37, %s38
      %p52 = scmp.eq.s32.totalorder %s18, 3
      %p53 = por %p51, %p52
      %p55 = scmp.ne.s32.totalorder %s38, %s54
      %p56 = scmp.eq.s32.totalorder %s18, 0
      %p57 = por %p55, %p56
      %s59 = sadd.s32 %s58, 1
      %p62 = scmp.eq.s32.totalorder %s12, 3
      %p63 = scmp.ne.s32.totalorder %s58, %s60
      %p64 = scmp.eq.s32.totalorder %s12, 0
      %p65 = por %p63, %p64
      %p66 = scmp.ne.s32.totalorder %s58, %s60
      %p67 = scmp.eq.s32.totalorder %s17, 3
      %p68 = por %p66, %p67
      %p69 = scmp.ne.s32.totalorder %s60, %s61
      %p70 = scmp.eq.s32.totalorder %s17, 0
      %p71 = por %p69, %p70
      %p72 = scmp.ne.s32.totalorder %s60, %s61
      %p73 = scmp.eq.s32.totalorder %s18, 3
      %p74 = por %p72, %p73
      %p76 = scmp.ne.s32.totalorder %s61, %s75
      %p77 = scmp.eq.s32.totalorder %s18, 0
      %p78 = por %p76, %p77
      %s80 = sadd.s32 %s79, 1
      %p83 = scmp.eq.s32.totalorder %s12, 3
      %p84 = scmp.ne.s32.totalorder %s79, %s81
      %p85 = scmp.eq.s32.totalorder %s12, 0
      %p86 = por %p84, %p85
      %p87 = scmp.ne.s32.totalorder %s79, %s81
      %p88 = scmp.eq.s32.totalorder %s17, 3
      %p89 = por %p87, %p88
      %p90 = scmp.ne.s32.totalorder %s81, %s82
      %p91 = scmp.eq.s32.totalorder %s17, 0
      %p92 = por %p90, %p91
      %p93 = scmp.ne.s32.totalorder %s81, %s82
      %p94 = scmp.eq.s32.totalorder %s18, 3
      %p95 = por %p93, %p94
      %p97 = scmp.ne.s32.totalorder %s82, %s96
      %p98 = scmp.eq.s32.totalorder %s18, 0
      %p99 = por %p97, %p98
      %s100 = ssub.s32 %s20, %s27
      %p101 = scmp.eq.s32.totalorder %s100, 0
      %s103 = sadd.s32 %s102, 1
      %s104 = scalar_select %p101, %s102, %s103
      %p107 = pneg %p101
      %p108 = scmp.eq.s32.totalorder %s12, 3
      %p109 = por %p107, %p108
      %p110 = scmp.ne.s32.totalorder %s102, %s105
      %p111 = scmp.eq.s32.totalorder %s12, 0
      %p112 = por %p110, %p111
      %p113 = scmp.ne.s32.totalorder %s102, %s105
      %p114 = scmp.eq.s32.totalorder %s17, 3
      %p115 = por %p113, %p114
      %p116 = scmp.ne.s32.totalorder %s105, %s106
      %p117 = scmp.eq.s32.totalorder %s17, 0
      %p118 = por %p116, %p117
      %p119 = scmp.ne.s32.totalorder %s105, %s106
      %p120 = scmp.eq.s32.totalorder %s18, 3
      %p121 = por %p119, %p120
      %p123 = scmp.ne.s32.totalorder %s106, %s122
      %p124 = scmp.eq.s32.totalorder %s18, 0
      %p125 = por %p123, %p124
      %s126 = ssub.s32 %s20, %s27
      %p127 = scmp.eq.s32.totalorder %s126, 0
      %s129 = sadd.s32 %s128, 1
      %s130 = scalar_select %p127, %s128, %s129
      %p133 = pneg %p127
      %p134 = scmp.eq.s32.totalorder %s12, 3
      %p135 = por %p133, %p134
      %p136 = scmp.ne.s32.totalorder %s128, %s131
      %p137 = scmp.eq.s32.totalorder %s12, 0
      %p138 = por %p136, %p137
      %p139 = scmp.ne.s32.totalorder %s128, %s131
      %p140 = scmp.eq.s32.totalorder %s17, 3
      %p141 = por %p139, %p140
      %p142 = scmp.ne.s32.totalorder %s131, %s132
      %p143 = scmp.eq.s32.totalorder %s17, 0
      %p144 = por %p142, %p143
      %p145 = scmp.ne.s32.totalorder %s131, %s132
      %p146 = scmp.eq.s32.totalorder %s18, 3
      %p147 = por %p145, %p146
      %p149 = scmp.ne.s32.totalorder %s132, %s148
      %p150 = scmp.eq.s32.totalorder %s18, 0
      %p151 = por %p149, %p150
      %s152 = ssub.s32 %s20, %s27
      %p153 = scmp.eq.s32.totalorder %s152, 0
      %s155 = sadd.s32 %s154, 1
      %s156 = scalar_select %p153, %s154, %s155
      %p159 = pneg %p153
      %p160 = scmp.eq.s32.totalorder %s12, 3
      %p161 = por %p159, %p160
      %p162 = scmp.ne.s32.totalorder %s154, %s157
      %p163 = scmp.eq.s32.totalorder %s12, 0
      %p164 = por %p162, %p163
      %p165 = scmp.ne.s32.totalorder %s154, %s157
      %p166 = scmp.eq.s32.totalorder %s17, 3
      %p167 = por %p165, %p166
      %p168 = scmp.ne.s32.totalorder %s157, %s158
      %p169 = scmp.eq.s32.totalorder %s17, 0
      %p170 = por %p168, %p169
      %p171 = scmp.ne.s32.totalorder %s157, %s158
      %p172 = scmp.eq.s32.totalorder %s18, 3
      %p173 = por %p171, %p172
      %p175 = scmp.ne.s32.totalorder %s158, %s174
      %p176 = scmp.eq.s32.totalorder %s18, 0
      %p177 = por %p175, %p176
      %s178 = ssub.s32 %s19, %s31
      %p179 = scmp.eq.s32.totalorder %s178, 0
      %s181 = sadd.s32 %s180, 1
      %s182 = scalar_select %p179, %s180, %s181
      %p185 = pneg %p179
      %p186 = scmp.eq.s32.totalorder %s12, 3
      %p187 = por %p185, %p186
      %p188 = scmp.ne.s32.totalorder %s180, %s183
      %p189 = scmp.eq.s32.totalorder %s12, 0
      %p190 = por %p188, %p189
      %p191 = scmp.ne.s32.totalorder %s180, %s183
      %p192 = scmp.eq.s32.totalorder %s17, 3
      %p193 = por %p191, %p192
      %p194 = scmp.ne.s32.totalorder %s183, %s184
      %p195 = scmp.eq.s32.totalorder %s17, 0
      %p196 = por %p194, %p195
      %p197 = scmp.ne.s32.totalorder %s183, %s184
      %p198 = scmp.eq.s32.totalorder %s18, 3
      %p199 = por %p197, %p198
      %p201 = scmp.ne.s32.totalorder %s184, %s200
      %p202 = scmp.eq.s32.totalorder %s18, 0
      %p203 = por %p201, %p202
      %p204 = scmp.le.s32.totalorder 1, %s12
      %p205 = scmp.lt.s32.totalorder %s12, 5
      %p206 = pnand %p204, %p205
      %p207 = pneg %p206
      // Predicated region
      $region9: #{transformer_lm_cnd_forward.6} parent=5 // pred_check
        _
      $region10: #{transformer_lm_cnd_forward.6} parent=5 // pred_check_branch
        %209 = sbr.rel (%p206) target = $region12
      $region11: #{transformer_lm_cnd_forward.6} parent=5 // pred_region
        %s210 = ssub.s32 %s12, 1
        // Predicated region
        $region13: #{transformer_lm_cnd_forward.6} parent=11 // pred_check
          %p211 = pneg %p71
        $region14: #{transformer_lm_cnd_forward.6} parent=11 // pred_check_branch
          %213 = sbr.rel (%p211) target = $region16
        $region15: #{transformer_lm_cnd_forward.6} parent=11 // pred_region
          _
        $region16: #{transformer_lm_cnd_forward.6} parent=11 // pred_fallthru
          _
        // Predicated region
        $region17: #{transformer_lm_cnd_forward.6} parent=11 // pred_check
          %p214 = pneg %p92
        $region18: #{transformer_lm_cnd_forward.6} parent=11 // pred_check_branch
          %216 = sbr.rel (%p214) target = $region20
        $region19: #{transformer_lm_cnd_forward.6} parent=11 // pred_region
          _
        $region20: #{transformer_lm_cnd_forward.6} parent=11 // pred_fallthru
          _
      $region12: #{transformer_lm_cnd_forward.6} parent=5 // pred_fallthru
        _
      %p217 = scmp.lt.s32.totalorder %s12, 4
      // Predicated region
      $region21: #{transformer_lm_cnd_forward.6} parent=5 // pred_check
        %p218 = pneg %p217
      $region22: #{transformer_lm_cnd_forward.6} parent=5 // pred_check_branch
        %220 = sbr.rel (%p218) target = $region24
      $region23: #{transformer_lm_cnd_forward.6} parent=5 // pred_region
        // Predicated region
        $region25: #{transformer_lm_cnd_forward.6} parent=23 // pred_check
          %p221 = pneg %p44
        $region26: #{transformer_lm_cnd_forward.6} parent=23 // pred_check_branch
          %223 = sbr.rel (%p221) target = $region28
        $region27: #{transformer_lm_cnd_forward.6} parent=23 // pred_region
          %p224 = scmp.lt.s32.totalorder %s19, 1
          %s225 = scalar_select %p224, %s19, 1
          %s226 = smul.addr %s225, 8
          %s227 = scalar_lea.vmem %s0, %s226
        $region28: #{transformer_lm_cnd_forward.6} parent=23 // pred_fallthru
          _
        // Predicated region
        $region29: #{transformer_lm_cnd_forward.6} parent=23 // pred_check
          %p228 = pneg %p112
        $region30: #{transformer_lm_cnd_forward.6} parent=23 // pred_check_branch
          %230 = sbr.rel (%p228) target = $region32
        $region31: #{transformer_lm_cnd_forward.6} parent=23 // pred_region
          %s231 = sand.u32 %s102, 1
          %s232 = sand.u32 %s102, 1
          %s233 = smul.addr %s232, 64
          %s234 = scalar_lea.vmem [#allocation3], %s233
          %s235 = smul.addr %s20, 4
          %s236 = scalar_lea.vmem %s3, %s235
          // Predicated region
          $region33: #{transformer_lm_cnd_forward.6} parent=31 // pred_check
            _
          $region34: #{transformer_lm_cnd_forward.6} parent=31 // pred_check_branch
            %238 = sbr.rel (0) target = $region36
          $region35: #{transformer_lm_cnd_forward.6} parent=31 // pred_region
            // Predicated region
            $region37: #{transformer_lm_cnd_forward.6} parent=35 // pred_check
              _
            $region38: #{transformer_lm_cnd_forward.6} parent=35 // pred_check_branch
              %240 = sbr.rel target = $region40
            $region39: #{transformer_lm_cnd_forward.6} parent=35 // pred_region
              // Predicated region
              $region52: #{transformer_lm_cnd_forward.6} parent=39 // pred_check
                _
              $region53: #{transformer_lm_cnd_forward.6} parent=39 // pred_check_branch
                %285 = sbr.rel (0) target = $region55
              $region54: #{transformer_lm_cnd_forward.6} parent=39 // pred_region
                loop: start=0, step=1, limit=1
                $region56: #{transformer_lm_cnd_forward.6} parent=54 // loop_pre_header
                  _
                $region57: #{transformer_lm_cnd_forward.6} parent=54 // loop_header
                  %s287 = sphi 0, %s291
                  %p288 = scmp.ge.s32.totalorder %s287, 1
                  %s292 = sphi %s236, %s236
                  %s293 = sphi %s234, %s234
                $region58: #{transformer_lm_cnd_forward.6} parent=54 // loop_header_branch
                  %290 = sbr.rel (%p288) target = $region62
                $region59: #{transformer_lm_cnd_forward.6} parent=54 // loop_body
                  _
                $region60: #{transformer_lm_cnd_forward.6} parent=54 // loop_footer
                  %s291 = sadd.s32 1, %s287
                $region61: #{transformer_lm_cnd_forward.6} parent=54 // loop_footer_branch
                  %286 = sbr.rel target = $region57
                $region62: #{transformer_lm_cnd_forward.6} parent=54 // loop_exit
                  _
                loop: start=0, step=1, limit=1
                $region63: #{transformer_lm_cnd_forward.6} parent=54 // loop_pre_header
                  _
                $region64: #{transformer_lm_cnd_forward.6} parent=54 // loop_header
                  %s296 = sphi 0, %s300
                  %p297 = scmp.ge.s32.totalorder %s296, 1
                  %s301 = sphi %s236, %s236
                  %s302 = sphi %s234, %s234
                $region65: #{transformer_lm_cnd_forward.6} parent=54 // loop_header_branch
                  %299 = sbr.rel (%p297) target = $region69
                $region66: #{transformer_lm_cnd_forward.6} parent=54 // loop_body
                  %v303 = vld [vmem:[%s301] sm:$0xf]
                  %304 = vst [vmem:[%s302] sm:$0xf] %v303
                  %v305 = vld [vmem:[%s301 + $0x8] sm:$0xf]
                  %306 = vst [vmem:[%s302 + $0x4] sm:$0xf] %v305
                  %v307 = vld [vmem:[%s301 + $0x10] sm:$0xf]
                  %308 = vst [vmem:[%s302 + $0x8] sm:$0xf] %v307
                  %v309 = vld [vmem:[%s301 + $0x18] sm:$0xf]
                  %310 = vst [vmem:[%s302 + $0xc] sm:$0xf] %v309
                  %v311 = vld [vmem:[%s301 + $0x20] sm:$0xf]
                  %312 = vst [vmem:[%s302 + $0x10] sm:$0xf] %v311
                  %v313 = vld [vmem:[%s301 + $0x28] sm:$0xf]
                  %314 = vst [vmem:[%s302 + $0x14] sm:$0xf] %v313
                  %v315 = vld [vmem:[%s301 + $0x30] sm:$0xf]
                  %316 = vst [vmem:[%s302 + $0x18] sm:$0xf] %v315
                  %v317 = vld [vmem:[%s301 + $0x38] sm:$0xf]
                  %318 = vst [vmem:[%s302 + $0x1c] sm:$0xf] %v317
                  %v319 = vld [vmem:[%s301 + $0x40] sm:$0xf]
                  %320 = vst [vmem:[%s302 + $0x20] sm:$0xf] %v319
                  %v321 = vld [vmem:[%s301 + $0x48] sm:$0xf]
                  %322 = vst [vmem:[%s302 + $0x24] sm:$0xf] %v321
                  %v323 = vld [vmem:[%s301 + $0x50] sm:$0xf]
                  %324 = vst [vmem:[%s302 + $0x28] sm:$0xf] %v323
                  %v325 = vld [vmem:[%s301 + $0x58] sm:$0xf]
                  %326 = vst [vmem:[%s302 + $0x2c] sm:$0xf] %v325
                  %v327 = vld [vmem:[%s301 + $0x60] sm:$0xf]
                  %328 = vst [vmem:[%s302 + $0x30] sm:$0xf] %v327
                  %v329 = vld [vmem:[%s301 + $0x68] sm:$0xf]
                  %330 = vst [vmem:[%s302 + $0x34] sm:$0xf] %v329
                  %v331 = vld [vmem:[%s301 + $0x70] sm:$0xf]
                  %332 = vst [vmem:[%s302 + $0x38] sm:$0xf] %v331
                  %v333 = vld [vmem:[%s301 + $0x78] sm:$0xf]
                  %334 = vst [vmem:[%s302 + $0x3c] sm:$0xf] %v333
                $region67: #{transformer_lm_cnd_forward.6} parent=54 // loop_footer
                  %s300 = sadd.s32 1, %s296
                $region68: #{transformer_lm_cnd_forward.6} parent=54 // loop_footer_branch
                  %295 = sbr.rel target = $region64
                $region69: #{transformer_lm_cnd_forward.6} parent=54 // loop_exit
                  _
              $region55: #{transformer_lm_cnd_forward.6} parent=39 // pred_fallthru
                _
            $region40: #{transformer_lm_cnd_forward.6} parent=35 // pred_fallthru
              _
            // Predicated region
            $region41: #{transformer_lm_cnd_forward.6} parent=35 // pred_check
              _
            $region42: #{transformer_lm_cnd_forward.6} parent=35 // pred_check_branch
              %242 = sbr.rel (0) target = $region44
            $region43: #{transformer_lm_cnd_forward.6} parent=35 // pred_region
              loop: start=0, step=1, limit=1
              $region45: #{transformer_lm_cnd_forward.6} parent=43 // loop_pre_header
                _
              $region46: #{transformer_lm_cnd_forward.6} parent=43 // loop_header
                %s245 = sphi 0, %s249
                %p246 = scmp.ge.s32.totalorder %s245, 1
                %s250 = sphi %s236, %s236
                %s251 = sphi %s234, %s234
              $region47: #{transformer_lm_cnd_forward.6} parent=43 // loop_header_branch
                %248 = sbr.rel (%p246) target = $region51
              $region48: #{transformer_lm_cnd_forward.6} parent=43 // loop_body
                %v252 = vld [vmem:[%s250] sm:$0xf]
                %253 = vst [vmem:[%s251] sm:$0xf] %v252
                %v254 = vld [vmem:[%s250 + $0x8] sm:$0xf]
                %255 = vst [vmem:[%s251 + $0x4] sm:$0xf] %v254
                %v256 = vld [vmem:[%s250 + $0x10] sm:$0xf]
                %257 = vst [vmem:[%s251 + $0x8] sm:$0xf] %v256
                %v258 = vld [vmem:[%s250 + $0x18] sm:$0xf]
                %259 = vst [vmem:[%s251 + $0xc] sm:$0xf] %v258
                %v260 = vld [vmem:[%s250 + $0x20] sm:$0xf]
                %261 = vst [vmem:[%s251 + $0x10] sm:$0xf] %v260
                %v262 = vld [vmem:[%s250 + $0x28] sm:$0xf]
                %263 = vst [vmem:[%s251 + $0x14] sm:$0xf] %v262
                %v264 = vld [vmem:[%s250 + $0x30] sm:$0xf]
                %265 = vst [vmem:[%s251 + $0x18] sm:$0xf] %v264
                %v266 = vld [vmem:[%s250 + $0x38] sm:$0xf]
                %267 = vst [vmem:[%s251 + $0x1c] sm:$0xf] %v266
                %v268 = vld [vmem:[%s250 + $0x40] sm:$0xf]
                %269 = vst [vmem:[%s251 + $0x20] sm:$0xf] %v268
                %v270 = vld [vmem:[%s250 + $0x48] sm:$0xf]
                %271 = vst [vmem:[%s251 + $0x24] sm:$0xf] %v270
                %v272 = vld [vmem:[%s250 + $0x50] sm:$0xf]
                %273 = vst [vmem:[%s251 + $0x28] sm:$0xf] %v272
                %v274 = vld [vmem:[%s250 + $0x58] sm:$0xf]
                %275 = vst [vmem:[%s251 + $0x2c] sm:$0xf] %v274
                %v276 = vld [vmem:[%s250 + $0x60] sm:$0xf]
                %277 = vst [vmem:[%s251 + $0x30] sm:$0xf] %v276
                %v278 = vld [vmem:[%s250 + $0x68] sm:$0xf]
                %279 = vst [vmem:[%s251 + $0x34] sm:$0xf] %v278
                %v280 = vld [vmem:[%s250 + $0x70] sm:$0xf]
                %281 = vst [vmem:[%s251 + $0x38] sm:$0xf] %v280
                %v282 = vld [vmem:[%s250 + $0x78] sm:$0xf]
                %283 = vst [vmem:[%s251 + $0x3c] sm:$0xf] %v282
              $region49: #{transformer_lm_cnd_forward.6} parent=43 // loop_footer
                %s249 = sadd.s32 1, %s245
              $region50: #{transformer_lm_cnd_forward.6} parent=43 // loop_footer_branch
                %244 = sbr.rel target = $region46
              $region51: #{transformer_lm_cnd_forward.6} parent=43 // loop_exit
                _
            $region44: #{transformer_lm_cnd_forward.6} parent=35 // pred_fallthru
              _
          $region36: #{transformer_lm_cnd_forward.6} parent=31 // pred_fallthru
            _
          %335 = vnop
        $region32: #{transformer_lm_cnd_forward.6} parent=23 // pred_fallthru
          _
        // Predicated region
        $region70: #{transformer_lm_cnd_forward.6} parent=23 // pred_check
          %p336 = pneg %p138
        $region71: #{transformer_lm_cnd_forward.6} parent=23 // pred_check_branch
          %338 = sbr.rel (%p336) target = $region73
        $region72: #{transformer_lm_cnd_forward.6} parent=23 // pred_region
          %s339 = sand.u32 %s128, 1
          %s340 = sand.u32 %s128, 1
          %s341 = smul.addr %s340, 64
          %s342 = scalar_lea.vmem [#allocation4], %s341
          %s343 = smul.addr %s20, 4
          %s344 = scalar_lea.vmem %s4, %s343
          // Predicated region
          $region74: #{transformer_lm_cnd_forward.6} parent=72 // pred_check
            _
          $region75: #{transformer_lm_cnd_forward.6} parent=72 // pred_check_branch
            %346 = sbr.rel (0) target = $region77
          $region76: #{transformer_lm_cnd_forward.6} parent=72 // pred_region
            // Predicated region
            $region78: #{transformer_lm_cnd_forward.6} parent=76 // pred_check
              _
            $region79: #{transformer_lm_cnd_forward.6} parent=76 // pred_check_branch
              %348 = sbr.rel target = $region81
            $region80: #{transformer_lm_cnd_forward.6} parent=76 // pred_region
              // Predicated region
              $region93: #{transformer_lm_cnd_forward.6} parent=80 // pred_check
                _
              $region94: #{transformer_lm_cnd_forward.6} parent=80 // pred_check_branch
                %393 = sbr.rel (0) target = $region96
              $region95: #{transformer_lm_cnd_forward.6} parent=80 // pred_region
                loop: start=0, step=1, limit=1
                $region97: #{transformer_lm_cnd_forward.6} parent=95 // loop_pre_header
                  _
                $region98: #{transformer_lm_cnd_forward.6} parent=95 // loop_header
                  %s395 = sphi 0, %s399
                  %p396 = scmp.ge.s32.totalorder %s395, 1
                  %s400 = sphi %s344, %s344
                  %s401 = sphi %s342, %s342
                $region99: #{transformer_lm_cnd_forward.6} parent=95 // loop_header_branch
                  %398 = sbr.rel (%p396) target = $region103
                $region100: #{transformer_lm_cnd_forward.6} parent=95 // loop_body
                  _
                $region101: #{transformer_lm_cnd_forward.6} parent=95 // loop_footer
                  %s399 = sadd.s32 1, %s395
                $region102: #{transformer_lm_cnd_forward.6} parent=95 // loop_footer_branch
                  %394 = sbr.rel target = $region98
                $region103: #{transformer_lm_cnd_forward.6} parent=95 // loop_exit
                  _
                loop: start=0, step=1, limit=1
                $region104: #{transformer_lm_cnd_forward.6} parent=95 // loop_pre_header
                  _
                $region105: #{transformer_lm_cnd_forward.6} parent=95 // loop_header
                  %s404 = sphi 0, %s408
                  %p405 = scmp.ge.s32.totalorder %s404, 1
                  %s409 = sphi %s344, %s344
                  %s410 = sphi %s342, %s342
                $region106: #{transformer_lm_cnd_forward.6} parent=95 // loop_header_branch
                  %407 = sbr.rel (%p405) target = $region110
                $region107: #{transformer_lm_cnd_forward.6} parent=95 // loop_body
                  %v411 = vld [vmem:[%s409] sm:$0xf]
                  %412 = vst [vmem:[%s410] sm:$0xf] %v411
                  %v413 = vld [vmem:[%s409 + $0x8] sm:$0xf]
                  %414 = vst [vmem:[%s410 + $0x4] sm:$0xf] %v413
                  %v415 = vld [vmem:[%s409 + $0x10] sm:$0xf]
                  %416 = vst [vmem:[%s410 + $0x8] sm:$0xf] %v415
                  %v417 = vld [vmem:[%s409 + $0x18] sm:$0xf]
                  %418 = vst [vmem:[%s410 + $0xc] sm:$0xf] %v417
                  %v419 = vld [vmem:[%s409 + $0x20] sm:$0xf]
                  %420 = vst [vmem:[%s410 + $0x10] sm:$0xf] %v419
                  %v421 = vld [vmem:[%s409 + $0x28] sm:$0xf]
                  %422 = vst [vmem:[%s410 + $0x14] sm:$0xf] %v421
                  %v423 = vld [vmem:[%s409 + $0x30] sm:$0xf]
                  %424 = vst [vmem:[%s410 + $0x18] sm:$0xf] %v423
                  %v425 = vld [vmem:[%s409 + $0x38] sm:$0xf]
                  %426 = vst [vmem:[%s410 + $0x1c] sm:$0xf] %v425
                  %v427 = vld [vmem:[%s409 + $0x40] sm:$0xf]
                  %428 = vst [vmem:[%s410 + $0x20] sm:$0xf] %v427
                  %v429 = vld [vmem:[%s409 + $0x48] sm:$0xf]
                  %430 = vst [vmem:[%s410 + $0x24] sm:$0xf] %v429
                  %v431 = vld [vmem:[%s409 + $0x50] sm:$0xf]
                  %432 = vst [vmem:[%s410 + $0x28] sm:$0xf] %v431
                  %v433 = vld [vmem:[%s409 + $0x58] sm:$0xf]
                  %434 = vst [vmem:[%s410 + $0x2c] sm:$0xf] %v433
                  %v435 = vld [vmem:[%s409 + $0x60] sm:$0xf]
                  %436 = vst [vmem:[%s410 + $0x30] sm:$0xf] %v435
                  %v437 = vld [vmem:[%s409 + $0x68] sm:$0xf]
                  %438 = vst [vmem:[%s410 + $0x34] sm:$0xf] %v437
                  %v439 = vld [vmem:[%s409 + $0x70] sm:$0xf]
                  %440 = vst [vmem:[%s410 + $0x38] sm:$0xf] %v439
                  %v441 = vld [vmem:[%s409 + $0x78] sm:$0xf]
                  %442 = vst [vmem:[%s410 + $0x3c] sm:$0xf] %v441
                $region108: #{transformer_lm_cnd_forward.6} parent=95 // loop_footer
                  %s408 = sadd.s32 1, %s404
                $region109: #{transformer_lm_cnd_forward.6} parent=95 // loop_footer_branch
                  %403 = sbr.rel target = $region105
                $region110: #{transformer_lm_cnd_forward.6} parent=95 // loop_exit
                  _
              $region96: #{transformer_lm_cnd_forward.6} parent=80 // pred_fallthru
                _
            $region81: #{transformer_lm_cnd_forward.6} parent=76 // pred_fallthru
              _
            // Predicated region
            $region82: #{transformer_lm_cnd_forward.6} parent=76 // pred_check
              _
            $region83: #{transformer_lm_cnd_forward.6} parent=76 // pred_check_branch
              %350 = sbr.rel (0) target = $region85
            $region84: #{transformer_lm_cnd_forward.6} parent=76 // pred_region
              loop: start=0, step=1, limit=1
              $region86: #{transformer_lm_cnd_forward.6} parent=84 // loop_pre_header
                _
              $region87: #{transformer_lm_cnd_forward.6} parent=84 // loop_header
                %s353 = sphi 0, %s357
                %p354 = scmp.ge.s32.totalorder %s353, 1
                %s358 = sphi %s344, %s344
                %s359 = sphi %s342, %s342
              $region88: #{transformer_lm_cnd_forward.6} parent=84 // loop_header_branch
                %356 = sbr.rel (%p354) target = $region92
              $region89: #{transformer_lm_cnd_forward.6} parent=84 // loop_body
                %v360 = vld [vmem:[%s358] sm:$0xf]
                %361 = vst [vmem:[%s359] sm:$0xf] %v360
                %v362 = vld [vmem:[%s358 + $0x8] sm:$0xf]
                %363 = vst [vmem:[%s359 + $0x4] sm:$0xf] %v362
                %v364 = vld [vmem:[%s358 + $0x10] sm:$0xf]
                %365 = vst [vmem:[%s359 + $0x8] sm:$0xf] %v364
                %v366 = vld [vmem:[%s358 + $0x18] sm:$0xf]
                %367 = vst [vmem:[%s359 + $0xc] sm:$0xf] %v366
                %v368 = vld [vmem:[%s358 + $0x20] sm:$0xf]
                %369 = vst [vmem:[%s359 + $0x10] sm:$0xf] %v368
                %v370 = vld [vmem:[%s358 + $0x28] sm:$0xf]
                %371 = vst [vmem:[%s359 + $0x14] sm:$0xf] %v370
                %v372 = vld [vmem:[%s358 + $0x30] sm:$0xf]
                %373 = vst [vmem:[%s359 + $0x18] sm:$0xf] %v372
                %v374 = vld [vmem:[%s358 + $0x38] sm:$0xf]
                %375 = vst [vmem:[%s359 + $0x1c] sm:$0xf] %v374
                %v376 = vld [vmem:[%s358 + $0x40] sm:$0xf]
                %377 = vst [vmem:[%s359 + $0x20] sm:$0xf] %v376
                %v378 = vld [vmem:[%s358 + $0x48] sm:$0xf]
                %379 = vst [vmem:[%s359 + $0x24] sm:$0xf] %v378
                %v380 = vld [vmem:[%s358 + $0x50] sm:$0xf]
                %381 = vst [vmem:[%s359 + $0x28] sm:$0xf] %v380
                %v382 = vld [vmem:[%s358 + $0x58] sm:$0xf]
                %383 = vst [vmem:[%s359 + $0x2c] sm:$0xf] %v382
                %v384 = vld [vmem:[%s358 + $0x60] sm:$0xf]
                %385 = vst [vmem:[%s359 + $0x30] sm:$0xf] %v384
                %v386 = vld [vmem:[%s358 + $0x68] sm:$0xf]
                %387 = vst [vmem:[%s359 + $0x34] sm:$0xf] %v386
                %v388 = vld [vmem:[%s358 + $0x70] sm:$0xf]
                %389 = vst [vmem:[%s359 + $0x38] sm:$0xf] %v388
                %v390 = vld [vmem:[%s358 + $0x78] sm:$0xf]
                %391 = vst [vmem:[%s359 + $0x3c] sm:$0xf] %v390
              $region90: #{transformer_lm_cnd_forward.6} parent=84 // loop_footer
                %s357 = sadd.s32 1, %s353
              $region91: #{transformer_lm_cnd_forward.6} parent=84 // loop_footer_branch
                %352 = sbr.rel target = $region87
              $region92: #{transformer_lm_cnd_forward.6} parent=84 // loop_exit
                _
            $region85: #{transformer_lm_cnd_forward.6} parent=76 // pred_fallthru
              _
          $region77: #{transformer_lm_cnd_forward.6} parent=72 // pred_fallthru
            _
          %443 = vnop
        $region73: #{transformer_lm_cnd_forward.6} parent=23 // pred_fallthru
          _
        // Predicated region
        $region111: #{transformer_lm_cnd_forward.6} parent=23 // pred_check
          %p444 = pneg %p164
        $region112: #{transformer_lm_cnd_forward.6} parent=23 // pred_check_branch
          %446 = sbr.rel (%p444) target = $region114
        $region113: #{transformer_lm_cnd_forward.6} parent=23 // pred_region
          %s447 = smul.u32 16, %s20
          %p448 = scmp.lt.s32.totalorder %s447, 31
          %s449 = scalar_select %p448, %s447, 31
          %s450 = smul.addr %s449, 4
          %s451 = scalar_lea.vmem %s5, %s450
          %s452 = smul.u32 16, %s20
        $region114: #{transformer_lm_cnd_forward.6} parent=23 // pred_fallthru
          _
      $region24: #{transformer_lm_cnd_forward.6} parent=5 // pred_fallthru
        _
      %p453 = scmp.le.s32.totalorder 1, %s12
      %p454 = scmp.lt.s32.totalorder %s12, 5
      %p455 = pnand %p453, %p454
      %p456 = pneg %p455
      // Predicated region
      $region115: #{transformer_lm_cnd_forward.6} parent=5 // pred_check
        _
      $region116: #{transformer_lm_cnd_forward.6} parent=5 // pred_check_branch
        %458 = sbr.rel (%p455) target = $region118
      $region117: #{transformer_lm_cnd_forward.6} parent=5 // pred_region
        %s459 = ssub.s32 %s12, 1
        %s460 = sand.u32 %s105, 1
        %s461 = sand.u32 %s105, 1
        %s462 = smul.addr %s461, 64
        %s463 = scalar_lea.vmem [#allocation3], %s462
        // Predicated region
        $region119: #{transformer_lm_cnd_forward.6} parent=117 // pred_check
          %p464 = pneg %p118
        $region120: #{transformer_lm_cnd_forward.6} parent=117 // pred_check_branch
          %466 = sbr.rel (%p464) target = $region122
        $region121: #{transformer_lm_cnd_forward.6} parent=117 // pred_region
          _
        $region122: #{transformer_lm_cnd_forward.6} parent=117 // pred_fallthru
          _
        %s467 = sand.u32 %s131, 1
        %s468 = sand.u32 %s131, 1
        %s469 = smul.addr %s468, 64
        %s470 = scalar_lea.vmem [#allocation4], %s469
        // Predicated region
        $region123: #{transformer_lm_cnd_forward.6} parent=117 // pred_check
          %p471 = pneg %p144
        $region124: #{transformer_lm_cnd_forward.6} parent=117 // pred_check_branch
          %473 = sbr.rel (%p471) target = $region126
        $region125: #{transformer_lm_cnd_forward.6} parent=117 // pred_region
          _
        $region126: #{transformer_lm_cnd_forward.6} parent=117 // pred_fallthru
          _
        %p474 = scmp.lt.s32.totalorder %s21, 1
        %s475 = scalar_select %p474, %s21, 1
        %s476 = smul.addr %s475, 8
        %s477 = scalar_lea.vmem %s0, %s476
        %p478 = pneg %p50
        %p479 = pneg %p47
        %p480 = pneg %p71
        %p481 = pneg %p68
        %p482 = pneg %p92
        %p483 = pneg %p89
        %s484 = sand.u32 %s105, 1
        %s485 = sand.u32 %s105, 1
        %s486 = smul.addr %s485, 64
        %s487 = scalar_lea.vmem [#allocation3], %s486
        %p488 = pneg %p118
        %p489 = pneg %p115
        %s490 = sand.u32 %s131, 1
        %s491 = sand.u32 %s131, 1
        %s492 = smul.addr %s491, 64
        %s493 = scalar_lea.vmem [#allocation4], %s492
        %p494 = pneg %p144
        %p495 = pneg %p141
        %s496 = smul.u32 16, %s22
        %p497 = scmp.lt.s32.totalorder %s496, 31
        %s498 = scalar_select %p497, %s496, 31
        %s499 = smul.addr %s498, 4
        %s500 = scalar_lea.vmem %s5, %s499
        %p501 = pneg %p170
        %p502 = pneg %p167
        %p503 = pneg %p196
        %p504 = pneg %p193
        %p505 = scmp.lt.s32.totalorder %s21, 1
        %s506 = scalar_select %p505, %s21, 1
        %s507 = smul.addr %s506, 8
        %s508 = scalar_lea.vmem %s6, %s507
        %p509 = scmp.lt.s32.totalorder %s21, 1
        %s510 = scalar_select %p509, %s21, 1
        %s511 = smul.addr %s510, 8
        %s512 = scalar_lea.vmem %s0, %s511
        %s513 = smul.u32 16, %s22
        %p514 = scmp.lt.s32.totalorder %s513, 31
        %s515 = scalar_select %p514, %s513, 31
        %s516 = smul.addr %s515, 4
        %s517 = scalar_lea.vmem %s5, %s516
        %s518 = smul.u32 16, %s22
        %p519 = scmp.lt.s32.totalorder %s21, 1
        %s520 = scalar_select %p519, %s21, 1
        %s521 = smul.addr %s520, 8
        %s522 = scalar_lea.vmem %s6, %s521
        %p524 = scmp.eq.s32.totalorder %s22, 0
        // Predicated region
        $region127: #{transformer_lm_cnd_forward.6} parent=117 // pred_check
          %p525 = pneg %p524
        $region128: #{transformer_lm_cnd_forward.6} parent=117 // pred_check_branch
          %527 = sbr.rel (%p525) target = $region130
        $region129: #{transformer_lm_cnd_forward.6} parent=117 // pred_region
          %v528 = vld [vmem:[%s512] sm:$0xff]
          %v529 = vld [vmem:[%s1] sm:$0x1]
          %v530 = vld [vmem:[%s2] sm:$0x1]
          %531 = vadd.xlane.f32.xlu0 %v528
          %v532 = vpop.xlane.xlu0 %531
          %v533 = vrcp.pop 128.0
          %v534 = vmul.f32 %v532, %v533
          %v535 = vsub.f32 %v528, %v534
          %v536 = vmul.f32 %v535, %v535
          %537 = vadd.xlane.f32.xlu0 %v536
          %v538 = vpop.xlane.xlu0 %537
          %v539 = vmul.f32 %v538, %v533
          %v540 = vadd.f32 %v539, 1e-05
          %v541 = vrsqrt.pop %v540
          %v542 = vmul.f32 %v535, %v541
          %v544 = vlaneseq
          %v545 = vshrl.u32 %v544, 7
          %v546 = vsub.s32 0, %v545
          %v547 = vrot.slane %v529, %v546
          %v549 = vmul.f32 %v542, %v547
          %v551 = vlaneseq
          %v552 = vshrl.u32 %v551, 7
          %v553 = vsub.s32 0, %v552
          %v554 = vrot.slane %v530, %v553
          %v556 = vadd.f32 %v549, %v554
          %v557 = vpack.c.bf16 %v556, %v556
          %558 = vst [vmem:[#allocation2] sm:$0xf] %v557
          %559 = vst [vmem:[%s522] sm:$0xff] %v528
        $region130: #{transformer_lm_cnd_forward.6} parent=117 // pred_fallthru
          _
        %v560 = vld [vmem:[#allocation2] sm:$0xf]
        %v561 = vld [vmem:[%s463] sm:$0xf]
        %v562 = vld [vmem:[%s463 + $0x4] sm:$0xf]
        %v563 = vld [vmem:[%s463 + $0x8] sm:$0xf]
        %v564 = vld [vmem:[%s463 + $0xc] sm:$0xf]
        %v565 = vld [vmem:[%s463 + $0x10] sm:$0xf]
        %v566 = vld [vmem:[%s463 + $0x14] sm:$0xf]
        %v567 = vld [vmem:[%s463 + $0x18] sm:$0xf]
        %v568 = vld [vmem:[%s463 + $0x1c] sm:$0xf]
        %v569 = vld [vmem:[%s463 + $0x20] sm:$0xf]
        %v570 = vld [vmem:[%s463 + $0x24] sm:$0xf]
        %v571 = vld [vmem:[%s463 + $0x28] sm:$0xf]
        %v572 = vld [vmem:[%s463 + $0x2c] sm:$0xf]
        %v573 = vld [vmem:[%s463 + $0x30] sm:$0xf]
        %v574 = vld [vmem:[%s463 + $0x34] sm:$0xf]
        %v575 = vld [vmem:[%s463 + $0x38] sm:$0xf]
        %v576 = vld [vmem:[%s463 + $0x3c] sm:$0xf]
        %v593 = vunpack.c.l.b16 %v561
        %v594 = vunpack.c.l.b16 %v562
        %v595 = vunpack.c.l.b16 %v563
        %v596 = vunpack.c.l.b16 %v564
        %v597 = vunpack.c.l.b16 %v565
        %v598 = vunpack.c.l.b16 %v566
        %v599 = vunpack.c.l.b16 %v567
        %v600 = vunpack.c.l.b16 %v568
        %v601 = vunpack.c.l.b16 %v569
        %v602 = vunpack.c.l.b16 %v570
        %v603 = vunpack.c.l.b16 %v571
        %v604 = vunpack.c.l.b16 %v572
        %v605 = vunpack.c.l.b16 %v573
        %v606 = vunpack.c.l.b16 %v574
        %v607 = vunpack.c.l.b16 %v575
        %v608 = vunpack.c.l.b16 %v576
        %v609 = vpack.c.b16 %v594, %v593
        %v610 = vpack.c.b16 %v596, %v595
        %v611 = vpack.c.b16 %v598, %v597
        %v612 = vpack.c.b16 %v600, %v599
        %v613 = vpack.c.b16 %v602, %v601
        %v614 = vpack.c.b16 %v604, %v603
        %v615 = vpack.c.b16 %v606, %v605
        %v616 = vpack.c.b16 %v608, %v607
        %625 = vmatprep.subr.bf16.mxu0 0
        %626 = vmatpush1.bf16.msra.mxu0 %v609
        %627 = vmatprep.subr.bf16.mxu0 0
        %628 = vmatpush1.bf16.msra.mxu0 %v610
        %629 = vmatprep.subr.bf16.mxu0 0
        %630 = vmatpush1.bf16.msra.mxu0 %v611
        %631 = vmatprep.subr.bf16.mxu0 0
        %632 = vmatpush1.bf16.msra.mxu0 %v612
        %633 = vmatprep.subr.bf16.mxu0 0
        %634 = vmatpush1.bf16.msra.mxu0 %v613
        %635 = vmatprep.subr.bf16.mxu0 0
        %636 = vmatpush1.bf16.msra.mxu0 %v614
        %637 = vmatprep.subr.bf16.mxu0 0
        %638 = vmatpush1.bf16.msra.mxu0 %v615
        %639 = vmatprep.subr.bf16.mxu0 0
        %640 = vmatpush1.bf16.msra.mxu0 %v616
        %641 = vmatprep.subr.bf16.mxu0 0
        %642 = vmatpush1.bf16.msra.mxu0 0
        %643 = vmatprep.subr.bf16.mxu0 0
        %644 = vmatpush1.bf16.msra.mxu0 0
        %645 = vmatprep.subr.bf16.mxu0 0
        %646 = vmatpush1.bf16.msra.mxu0 0
        %647 = vmatprep.subr.bf16.mxu0 0
        %648 = vmatpush1.bf16.msra.mxu0 0
        %649 = vmatprep.subr.bf16.mxu0 0
        %650 = vmatpush1.bf16.msra.mxu0 0
        %651 = vmatprep.subr.bf16.mxu0 0
        %652 = vmatpush1.bf16.msra.mxu0 0
        %653 = vmatprep.subr.bf16.mxu0 0
        %654 = vmatpush1.bf16.msra.mxu0 0
        %655 = vmatprep.subr.bf16.mxu0 0
        %656 = vmatpush1.bf16.msra.mxu0 0
        %657 = vmatprep.mubr.bf16.mxu0 0
        %658 = vmatmul.mubr.bf16.gmra.mrb[0].mxu0 %v560
        %v659 = vpop.f32.mrb[0].mxu0
        %v660 = vadd.f32 0.0, %v659
        %v661 = vpop.f32.mrb[0].mxu0
        %v662 = vpop.f32.mrb[0].mxu0
        %v663 = vpop.f32.mrb[0].mxu0
        %664 = vdwg.mxu0
        %v665 = vld [vmem:[%s470] sm:$0xf]
        %v666 = vld [vmem:[%s470 + $0x4] sm:$0xf]
        %v667 = vld [vmem:[%s470 + $0x8] sm:$0xf]
        %v668 = vld [vmem:[%s470 + $0xc] sm:$0xf]
        %v669 = vld [vmem:[%s470 + $0x10] sm:$0xf]
        %v670 = vld [vmem:[%s470 + $0x14] sm:$0xf]
        %v671 = vld [vmem:[%s470 + $0x18] sm:$0xf]
        %v672 = vld [vmem:[%s470 + $0x1c] sm:$0xf]
        %v673 = vld [vmem:[%s470 + $0x20] sm:$0xf]
        %v674 = vld [vmem:[%s470 + $0x24] sm:$0xf]
        %v675 = vld [vmem:[%s470 + $0x28] sm:$0xf]
        %v676 = vld [vmem:[%s470 + $0x2c] sm:$0xf]
        %v677 = vld [vmem:[%s470 + $0x30] sm:$0xf]
        %v678 = vld [vmem:[%s470 + $0x34] sm:$0xf]
        %v679 = vld [vmem:[%s470 + $0x38] sm:$0xf]
        %v680 = vld [vmem:[%s470 + $0x3c] sm:$0xf]
        %v697 = vunpack.c.l.b16 %v665
        %v698 = vunpack.c.l.b16 %v666
        %v699 = vunpack.c.l.b16 %v667
        %v700 = vunpack.c.l.b16 %v668
        %v701 = vunpack.c.l.b16 %v669
        %v702 = vunpack.c.l.b16 %v670
        %v703 = vunpack.c.l.b16 %v671
        %v704 = vunpack.c.l.b16 %v672
        %v705 = vunpack.c.l.b16 %v673
        %v706 = vunpack.c.l.b16 %v674
        %v707 = vunpack.c.l.b16 %v675
        %v708 = vunpack.c.l.b16 %v676
        %v709 = vunpack.c.l.b16 %v677
        %v710 = vunpack.c.l.b16 %v678
        %v711 = vunpack.c.l.b16 %v679
        %v712 = vunpack.c.l.b16 %v680
        %v713 = vpack.c.b16 %v698, %v697
        %v714 = vpack.c.b16 %v700, %v699
        %v715 = vpack.c.b16 %v702, %v701
        %v716 = vpack.c.b16 %v704, %v703
        %v717 = vpack.c.b16 %v706, %v705
        %v718 = vpack.c.b16 %v708, %v707
        %v719 = vpack.c.b16 %v710, %v709
        %v720 = vpack.c.b16 %v712, %v711
        %729 = vmatprep.subr.bf16.mxu0 0
        %730 = vmatpush1.bf16.msra.mxu0 %v713
        %731 = vmatprep.subr.bf16.mxu0 0
        %732 = vmatpush1.bf16.msra.mxu0 %v714
        %733 = vmatprep.subr.bf16.mxu0 0
        %734 = vmatpush1.bf16.msra.mxu0 %v715
        %735 = vmatprep.subr.bf16.mxu0 0
        %736 = vmatpush1.bf16.msra.mxu0 %v716
        %737 = vmatprep.subr.bf16.mxu0 0
        %738 = vmatpush1.bf16.msra.mxu0 %v717
        %739 = vmatprep.subr.bf16.mxu0 0
        %740 = vmatpush1.bf16.msra.mxu0 %v718
        %741 = vmatprep.subr.bf16.mxu0 0
        %742 = vmatpush1.bf16.msra.mxu0 %v719
        %743 = vmatprep.subr.bf16.mxu0 0
        %744 = vmatpush1.bf16.msra.mxu0 %v720
        %745 = vmatprep.subr.bf16.mxu0 0
        %746 = vmatpush1.bf16.msra.mxu0 0
        %747 = vmatprep.subr.bf16.mxu0 0
        %748 = vmatpush1.bf16.msra.mxu0 0
        %749 = vmatprep.subr.bf16.mxu0 0
        %750 = vmatpush1.bf16.msra.mxu0 0
        %751 = vmatprep.subr.bf16.mxu0 0
        %752 = vmatpush1.bf16.msra.mxu0 0
        %753 = vmatprep.subr.bf16.mxu0 0
        %754 = vmatpush1.bf16.msra.mxu0 0
        %755 = vmatprep.subr.bf16.mxu0 0
        %756 = vmatpush1.bf16.msra.mxu0 0
        %757 = vmatprep.subr.bf16.mxu0 0
        %758 = vmatpush1.bf16.msra.mxu0 0
        %759 = vmatprep.subr.bf16.mxu0 0
        %760 = vmatpush1.bf16.msra.mxu0 0
        %761 = vmatprep.mubr.bf16.mxu0 0
        %762 = vmatmul.mubr.bf16.gmra.mrb[0].mxu0 %v560
        %v763 = vpop.f32.mrb[0].mxu0
        %v764 = vadd.f32 0.0, %v763
        %v765 = vpop.f32.mrb[0].mxu0
        %v766 = vpop.f32.mrb[0].mxu0
        %v767 = vpop.f32.mrb[0].mxu0
        %768 = vdwg.mxu0
        %v769 = vsub.f32 0.0, %v660
        %v770 = vmul.f32 %v769, 1.442695
        %v771 = vpow.pop %v770
        %v772 = vadd.f32 %v771, 1.0
        %v773 = vrcp.pop %v772
        %v774 = vmul.f32 %v660, %v773
        %v775 = vld [vmem:[%s522] sm:$0xff]
        %v776 = vmul.f32 %v774, %v764
        %v777 = vpack.c.bf16 %v776, %v776
        %v778 = vld [vmem:[%s517] sm:$0xf]
        %v779 = vld [vmem:[%s517 + $0x4] sm:$0xf]
        %v780 = vld [vmem:[%s517 + $0x8] sm:$0xf]
        %v781 = vld [vmem:[%s517 + $0xc] sm:$0xf]
        %v782 = vld [vmem:[%s517 + $0x10] sm:$0xf]
        %v783 = vld [vmem:[%s517 + $0x14] sm:$0xf]
        %v784 = vld [vmem:[%s517 + $0x18] sm:$0xf]
        %v785 = vld [vmem:[%s517 + $0x1c] sm:$0xf]
        %v786 = vld [vmem:[%s517 + $0x20] sm:$0xf]
        %v787 = vld [vmem:[%s517 + $0x24] sm:$0xf]
        %v788 = vld [vmem:[%s517 + $0x28] sm:$0xf]
        %v789 = vld [vmem:[%s517 + $0x2c] sm:$0xf]
        %v790 = vld [vmem:[%s517 + $0x30] sm:$0xf]
        %v791 = vld [vmem:[%s517 + $0x34] sm:$0xf]
        %v792 = vld [vmem:[%s517 + $0x38] sm:$0xf]
        %v793 = vld [vmem:[%s517 + $0x3c] sm:$0xf]
        %v810 = vunpack.c.l.b16 %v778
        %v811 = vunpack.c.l.b16 %v779
        %v812 = vunpack.c.l.b16 %v780
        %v813 = vunpack.c.l.b16 %v781
        %v814 = vunpack.c.l.b16 %v782
        %v815 = vunpack.c.l.b16 %v783
        %v816 = vunpack.c.l.b16 %v784
        %v817 = vunpack.c.l.b16 %v785
        %v818 = vunpack.c.l.b16 %v786
        %v819 = vunpack.c.l.b16 %v787
        %v820 = vunpack.c.l.b16 %v788
        %v821 = vunpack.c.l.b16 %v789
        %v822 = vunpack.c.l.b16 %v790
        %v823 = vunpack.c.l.b16 %v791
        %v824 = vunpack.c.l.b16 %v792
        %v825 = vunpack.c.l.b16 %v793
        %v826 = vpack.c.b16 %v811, %v810
        %v827 = vpack.c.b16 %v813, %v812
        %v828 = vpack.c.b16 %v815, %v814
        %v829 = vpack.c.b16 %v817, %v816
        %v830 = vpack.c.b16 %v819, %v818
        %v831 = vpack.c.b16 %v821, %v820
        %v832 = vpack.c.b16 %v823, %v822
        %v833 = vpack.c.b16 %v825, %v824
        %842 = vmatprep.subr.bf16.mxu0 0
        %843 = vmatpush1.bf16.msra.mxu0 %v826
        %844 = vmatprep.subr.bf16.mxu0 0
        %845 = vmatpush1.bf16.msra.mxu0 %v827
        %846 = vmatprep.subr.bf16.mxu0 0
        %847 = vmatpush1.bf16.msra.mxu0 %v828
        %848 = vmatprep.subr.bf16.mxu0 0
        %849 = vmatpush1.bf16.msra.mxu0 %v829
        %850 = vmatprep.subr.bf16.mxu0 0
        %851 = vmatpush1.bf16.msra.mxu0 %v830
        %852 = vmatprep.subr.bf16.mxu0 0
        %853 = vmatpush1.bf16.msra.mxu0 %v831
        %854 = vmatprep.subr.bf16.mxu0 0
        %855 = vmatpush1.bf16.msra.mxu0 %v832
        %856 = vmatprep.subr.bf16.mxu0 0
        %857 = vmatpush1.bf16.msra.mxu0 %v833
        %858 = vmatprep.subr.bf16.mxu0 0
        %859 = vmatpush1.bf16.msra.mxu0 0
        %860 = vmatprep.subr.bf16.mxu0 0
        %861 = vmatpush1.bf16.msra.mxu0 0
        %862 = vmatprep.subr.bf16.mxu0 0
        %863 = vmatpush1.bf16.msra.mxu0 0
        %864 = vmatprep.subr.bf16.mxu0 0
        %865 = vmatpush1.bf16.msra.mxu0 0
        %866 = vmatprep.subr.bf16.mxu0 0
        %867 = vmatpush1.bf16.msra.mxu0 0
        %868 = vmatprep.subr.bf16.mxu0 0
        %869 = vmatpush1.bf16.msra.mxu0 0
        %870 = vmatprep.subr.bf16.mxu0 0
        %871 = vmatpush1.bf16.msra.mxu0 0
        %872 = vmatprep.subr.bf16.mxu0 0
        %873 = vmatpush1.bf16.msra.mxu0 0
        %874 = vmatprep.mubr.bf16.mxu0 0
        %875 = vmatmul.mubr.bf16.gmra.mrb[0].mxu0 %v777
        %v876 = vpop.f32.mrb[0].mxu0
        %v877 = vadd.f32 0.0, %v876
        %v878 = vpop.f32.mrb[0].mxu0
        %v879 = vpop.f32.mrb[0].mxu0
        %v880 = vpop.f32.mrb[0].mxu0
        %881 = vdwg.mxu0
        %v882 = vadd.f32 %v775, %v877
        %883 = vst [vmem:[%s522] sm:$0xff] %v882
        %p884 = scmp.lt.s32.totalorder %s21, 1
        %s885 = scalar_select %p884, %s21, 1
        %s886 = smul.addr %s885, 8
        %s887 = scalar_lea.vmem %s6, %s886
        // Predicated region
        $region131: #{transformer_lm_cnd_forward.6} parent=117 // pred_check
          %p888 = pneg %p193
        $region132: #{transformer_lm_cnd_forward.6} parent=117 // pred_check_branch
          %890 = sbr.rel (%p888) target = $region134
        $region133: #{transformer_lm_cnd_forward.6} parent=117 // pred_region
          _
        $region134: #{transformer_lm_cnd_forward.6} parent=117 // pred_fallthru
          _
      $region118: #{transformer_lm_cnd_forward.6} parent=5 // pred_fallthru
        _
      %p891 = scmp.le.s32.totalorder 2, %s12
      // Predicated region
      $region135: #{transformer_lm_cnd_forward.6} parent=5 // pred_check
        %p892 = pneg %p891
      $region136: #{transformer_lm_cnd_forward.6} parent=5 // pred_check_branch
        %894 = sbr.rel (%p892) target = $region138
      $region137: #{transformer_lm_cnd_forward.6} parent=5 // pred_region
        %s895 = ssub.s32 %s12, 2
        // Predicated region
        $region139: #{transformer_lm_cnd_forward.6} parent=137 // pred_check
          %p896 = pneg %p199
        $region140: #{transformer_lm_cnd_forward.6} parent=137 // pred_check_branch
          %898 = sbr.rel (%p896) target = $region142
        $region141: #{transformer_lm_cnd_forward.6} parent=137 // pred_region
          %p899 = scmp.lt.s32.totalorder %s23, 1
          %s900 = scalar_select %p899, %s23, 1
          %s901 = smul.addr %s900, 8
          %s902 = scalar_lea.vmem %s6, %s901
        $region142: #{transformer_lm_cnd_forward.6} parent=137 // pred_fallthru
          _
      $region138: #{transformer_lm_cnd_forward.6} parent=5 // pred_fallthru
        _
    $region6: #{transformer_lm_cnd_forward.6} parent=1 // loop_footer
      %s16 = sadd.s32 1, %s12
    $region7: #{transformer_lm_cnd_forward.6} parent=1 // loop_footer_branch
      %11 = sbr.rel target = $region3
    $region8: #{transformer_lm_cnd_forward.6} parent=1 // loop_exit
      _

// kernel: transformer_lm_cnd_forward.5
$region0: #{transformer_lm_cnd_forward.5}
  #allocation0 [shape = 'u32[]', space=smem, size = 0x4, offset = 0x4, fixed_abs, tag = 'smem constant byte address 0x4 - core index']
  #allocation1 [shape = 'u32[144,128]{1,0:T(1,128)}', space=vmem, size = 0x12000, scoped, tag = 'internal scratch']
  %s0 = inlined_call_operand.vmem [shape: f32[2,8,128], index: 0, kind: input, shape index: {}]
  %s1 = inlined_call_operand.vmem [shape: f32[8,128], index: 1, kind: input, shape index: {}]
  %s2 = inlined_call_operand.vmem [shape: f32[8,128], index: 2, kind: input, shape index: {}]
  %s3 = inlined_call_operand.vmem [shape: f32[8,128], index: 3, kind: input, shape index: {}]
  %s4 = inlined_call_operand.vmem [shape: bf16[128,384], index: 4, kind: input, shape index: {}]
  %s5 = inlined_call_operand.vmem [shape: bf16[128,128], index: 5, kind: input, shape index: {}]
  %s6 = inlined_call_operand.vmem [shape: f32[1,128], index: 6, kind: input, shape index: {}]
  %s7 = inlined_call_operand.vmem [shape: f32[1,128], index: 7, kind: input, shape index: {}]
  %s8 = inlined_call_operand.vmem [shape: f32[2,8,128], index: 8, kind: output, shape index: {}]
  %s9 = sld [smem:[#allocation0]]
  $region65: #{transformer_lm_cnd_forward.5} parent=0
    _
  %s11 = ssub.s32 1, %s9
  %s12 = scalar_select 0, %s11, %s9
  loop: start=0, step=1, limit=4
  $region2: #{transformer_lm_cnd_forward.5} parent=0 // loop_pre_header
    _
  $region3: #{transformer_lm_cnd_forward.5} parent=0 // loop_header
    %s14 = sphi 0, %s18
    %p15 = scmp.ge.s32.totalorder %s14, 4
    %s24 = sphi 0, %s26
    %s27 = sphi 0, %s24
    %s28 = sphi 0, %s27
    %s44 = sphi 0, %s28
    %s48 = sphi 0, %s48
    %s50 = sphi 0, %s48
    %s51 = sphi 0, %s50
    %s65 = sphi 0, %s51
    %s69 = sphi 0, %s69
    %s71 = sphi 0, %s69
    %s72 = sphi 0, %s71
    %s86 = sphi 0, %s72
    %s90 = sphi 0, %s90
    %s92 = sphi 0, %s90
    %s93 = sphi 0, %s92
    %s107 = sphi 0, %s93
    %s111 = sphi 0, %s111
    %s113 = sphi 0, %s111
    %s114 = sphi 0, %s113
    %s128 = sphi 0, %s114
    %s132 = sphi 0, %s132
    %s134 = sphi 0, %s132
    %s135 = sphi 0, %s134
    %s149 = sphi 0, %s135
    %s153 = sphi 0, %s153
    %s155 = sphi 0, %s153
    %s156 = sphi 0, %s155
    %s170 = sphi 0, %s156
    %s174 = sphi 0, %s174
    %s176 = sphi 0, %s174
    %s177 = sphi 0, %s176
    %s191 = sphi 0, %s177
    %s197 = sphi 0, %s199
    %s200 = sphi 0, %s197
    %s201 = sphi 0, %s200
    %s217 = sphi 0, %s201
  $region4: #{transformer_lm_cnd_forward.5} parent=0 // loop_header_branch
    %17 = sbr.rel (%p15) target = $region8
  $region5: #{transformer_lm_cnd_forward.5} parent=0 // loop_body
    %s19 = ssub.s32 %s14, 1
    %s20 = ssub.s32 %s14, 2
    %s21 = sadd.s32 %s14, 1
    %s22 = ssub.s32 %s14, %s21
    %p23 = scmp.eq.s32.totalorder %s22, 0
    %s25 = sadd.s32 %s24, 1
    %s26 = scalar_select %p23, %s24, %s25
    %p29 = pneg %p23
    %p30 = scmp.eq.s32.totalorder %s14, 1
    %p31 = por %p29, %p30
    %p32 = scmp.ne.s32.totalorder %s24, %s27
    %p33 = scmp.eq.s32.totalorder %s14, 0
    %p34 = por %p32, %p33
    %p35 = scmp.ne.s32.totalorder %s24, %s27
    %p36 = scmp.eq.s32.totalorder %s19, 1
    %p37 = por %p35, %p36
    %p38 = scmp.ne.s32.totalorder %s27, %s28
    %p39 = scmp.eq.s32.totalorder %s19, 0
    %p40 = por %p38, %p39
    %p41 = scmp.ne.s32.totalorder %s27, %s28
    %p42 = scmp.eq.s32.totalorder %s20, 1
    %p43 = por %p41, %p42
    %p45 = scmp.ne.s32.totalorder %s28, %s44
    %p46 = scmp.eq.s32.totalorder %s20, 0
    %p47 = por %p45, %p46
    %s49 = sadd.s32 %s48, 1
    %p52 = scmp.eq.s32.totalorder %s14, 1
    %p53 = scmp.ne.s32.totalorder %s48, %s50
    %p54 = scmp.eq.s32.totalorder %s14, 0
    %p55 = por %p53, %p54
    %p56 = scmp.ne.s32.totalorder %s48, %s50
    %p57 = scmp.eq.s32.totalorder %s19, 1
    %p58 = por %p56, %p57
    %p59 = scmp.ne.s32.totalorder %s50, %s51
    %p60 = scmp.eq.s32.totalorder %s19, 0
    %p61 = por %p59, %p60
    %p62 = scmp.ne.s32.totalorder %s50, %s51
    %p63 = scmp.eq.s32.totalorder %s20, 1
    %p64 = por %p62, %p63
    %p66 = scmp.ne.s32.totalorder %s51, %s65
    %p67 = scmp.eq.s32.totalorder %s20, 0
    %p68 = por %p66, %p67
    %s70 = sadd.s32 %s69, 1
    %p73 = scmp.eq.s32.totalorder %s14, 1
    %p74 = scmp.ne.s32.totalorder %s69, %s71
    %p75 = scmp.eq.s32.totalorder %s14, 0
    %p76 = por %p74, %p75
    %p77 = scmp.ne.s32.totalorder %s69, %s71
    %p78 = scmp.eq.s32.totalorder %s19, 1
    %p79 = por %p77, %p78
    %p80 = scmp.ne.s32.totalorder %s71, %s72
    %p81 = scmp.eq.s32.totalorder %s19, 0
    %p82 = por %p80, %p81
    %p83 = scmp.ne.s32.totalorder %s71, %s72
    %p84 = scmp.eq.s32.totalorder %s20, 1
    %p85 = por %p83, %p84
    %p87 = scmp.ne.s32.totalorder %s72, %s86
    %p88 = scmp.eq.s32.totalorder %s20, 0
    %p89 = por %p87, %p88
    %s91 = sadd.s32 %s90, 1
    %p94 = scmp.eq.s32.totalorder %s14, 1
    %p95 = scmp.ne.s32.totalorder %s90, %s92
    %p96 = scmp.eq.s32.totalorder %s14, 0
    %p97 = por %p95, %p96
    %p98 = scmp.ne.s32.totalorder %s90, %s92
    %p99 = scmp.eq.s32.totalorder %s19, 1
    %p100 = por %p98, %p99
    %p101 = scmp.ne.s32.totalorder %s92, %s93
    %p102 = scmp.eq.s32.totalorder %s19, 0
    %p103 = por %p101, %p102
    %p104 = scmp.ne.s32.totalorder %s92, %s93
    %p105 = scmp.eq.s32.totalorder %s20, 1
    %p106 = por %p104, %p105
    %p108 = scmp.ne.s32.totalorder %s93, %s107
    %p109 = scmp.eq.s32.totalorder %s20, 0
    %p110 = por %p108, %p109
    %s112 = sadd.s32 %s111, 1
    %p115 = scmp.eq.s32.totalorder %s14, 1
    %p116 = scmp.ne.s32.totalorder %s111, %s113
    %p117 = scmp.eq.s32.totalorder %s14, 0
    %p118 = por %p116, %p117
    %p119 = scmp.ne.s32.totalorder %s111, %s113
    %p120 = scmp.eq.s32.totalorder %s19, 1
    %p121 = por %p119, %p120
    %p122 = scmp.ne.s32.totalorder %s113, %s114
    %p123 = scmp.eq.s32.totalorder %s19, 0
    %p124 = por %p122, %p123
    %p125 = scmp.ne.s32.totalorder %s113, %s114
    %p126 = scmp.eq.s32.totalorder %s20, 1
    %p127 = por %p125, %p126
    %p129 = scmp.ne.s32.totalorder %s114, %s128
    %p130 = scmp.eq.s32.totalorder %s20, 0
    %p131 = por %p129, %p130
    %s133 = sadd.s32 %s132, 1
    %p136 = scmp.eq.s32.totalorder %s14, 1
    %p137 = scmp.ne.s32.totalorder %s132, %s134
    %p138 = scmp.eq.s32.totalorder %s14, 0
    %p139 = por %p137, %p138
    %p140 = scmp.ne.s32.totalorder %s132, %s134
    %p141 = scmp.eq.s32.totalorder %s19, 1
    %p142 = por %p140, %p141
    %p143 = scmp.ne.s32.totalorder %s134, %s135
    %p144 = scmp.eq.s32.totalorder %s19, 0
    %p145 = por %p143, %p144
    %p146 = scmp.ne.s32.totalorder %s134, %s135
    %p147 = scmp.eq.s32.totalorder %s20, 1
    %p148 = por %p146, %p147
    %p150 = scmp.ne.s32.totalorder %s135, %s149
    %p151 = scmp.eq.s32.totalorder %s20, 0
    %p152 = por %p150, %p151
    %s154 = sadd.s32 %s153, 1
    %p157 = scmp.eq.s32.totalorder %s14, 1
    %p158 = scmp.ne.s32.totalorder %s153, %s155
    %p159 = scmp.eq.s32.totalorder %s14, 0
    %p160 = por %p158, %p159
    %p161 = scmp.ne.s32.totalorder %s153, %s155
    %p162 = scmp.eq.s32.totalorder %s19, 1
    %p163 = por %p161, %p162
    %p164 = scmp.ne.s32.totalorder %s155, %s156
    %p165 = scmp.eq.s32.totalorder %s19, 0
    %p166 = por %p164, %p165
    %p167 = scmp.ne.s32.totalorder %s155, %s156
    %p168 = scmp.eq.s32.totalorder %s20, 1
    %p169 = por %p167, %p168
    %p171 = scmp.ne.s32.totalorder %s156, %s170
    %p172 = scmp.eq.s32.totalorder %s20, 0
    %p173 = por %p171, %p172
    %s175 = sadd.s32 %s174, 1
    %p178 = scmp.eq.s32.totalorder %s14, 1
    %p179 = scmp.ne.s32.totalorder %s174, %s176
    %p180 = scmp.eq.s32.totalorder %s14, 0
    %p181 = por %p179, %p180
    %p182 = scmp.ne.s32.totalorder %s174, %s176
    %p183 = scmp.eq.s32.totalorder %s19, 1
    %p184 = por %p182, %p183
    %p185 = scmp.ne.s32.totalorder %s176, %s177
    %p186 = scmp.eq.s32.totalorder %s19, 0
    %p187 = por %p185, %p186
    %p188 = scmp.ne.s32.totalorder %s176, %s177
    %p189 = scmp.eq.s32.totalorder %s20, 1
    %p190 = por %p188, %p189
    %p192 = scmp.ne.s32.totalorder %s177, %s191
    %p193 = scmp.eq.s32.totalorder %s20, 0
    %p194 = por %p192, %p193
    %s195 = ssub.s32 %s14, %s21
    %p196 = scmp.eq.s32.totalorder %s195, 0
    %s198 = sadd.s32 %s197, 1
    %s199 = scalar_select %p196, %s197, %s198
    %p202 = pneg %p196
    %p203 = scmp.eq.s32.totalorder %s14, 1
    %p204 = por %p202, %p203
    %p205 = scmp.ne.s32.totalorder %s197, %s200
    %p206 = scmp.eq.s32.totalorder %s14, 0
    %p207 = por %p205, %p206
    %p208 = scmp.ne.s32.totalorder %s197, %s200
    %p209 = scmp.eq.s32.totalorder %s19, 1
    %p210 = por %p208, %p209
    %p211 = scmp.ne.s32.totalorder %s200, %s201
    %p212 = scmp.eq.s32.totalorder %s19, 0
    %p213 = por %p211, %p212
    %p214 = scmp.ne.s32.totalorder %s200, %s201
    %p215 = scmp.eq.s32.totalorder %s20, 1
    %p216 = por %p214, %p215
    %p218 = scmp.ne.s32.totalorder %s201, %s217
    %p219 = scmp.eq.s32.totalorder %s20, 0
    %p220 = por %p218, %p219
    %p221 = scmp.le.s32.totalorder 1, %s14
    %p222 = scmp.lt.s32.totalorder %s14, 3
    %p223 = pnand %p221, %p222
    %p224 = pneg %p223
    // Predicated region
    $region9: #{transformer_lm_cnd_forward.5} parent=5 // pred_check
      _
    $region10: #{transformer_lm_cnd_forward.5} parent=5 // pred_check_branch
      %226 = sbr.rel (%p223) target = $region12
    $region11: #{transformer_lm_cnd_forward.5} parent=5 // pred_region
      %s227 = ssub.s32 %s14, 1
      // Predicated region
      $region13: #{transformer_lm_cnd_forward.5} parent=11 // pred_check
        %p228 = pneg %p61
      $region14: #{transformer_lm_cnd_forward.5} parent=11 // pred_check_branch
        %230 = sbr.rel (%p228) target = $region16
      $region15: #{transformer_lm_cnd_forward.5} parent=11 // pred_region
        _
      $region16: #{transformer_lm_cnd_forward.5} parent=11 // pred_fallthru
        _
      // Predicated region
      $region17: #{transformer_lm_cnd_forward.5} parent=11 // pred_check
        %p231 = pneg %p82
      $region18: #{transformer_lm_cnd_forward.5} parent=11 // pred_check_branch
        %233 = sbr.rel (%p231) target = $region20
      $region19: #{transformer_lm_cnd_forward.5} parent=11 // pred_region
        _
      $region20: #{transformer_lm_cnd_forward.5} parent=11 // pred_fallthru
        _
      // Predicated region
      $region21: #{transformer_lm_cnd_forward.5} parent=11 // pred_check
        %p234 = pneg %p103
      $region22: #{transformer_lm_cnd_forward.5} parent=11 // pred_check_branch
        %236 = sbr.rel (%p234) target = $region24
      $region23: #{transformer_lm_cnd_forward.5} parent=11 // pred_region
        _
      $region24: #{transformer_lm_cnd_forward.5} parent=11 // pred_fallthru
        _
      // Predicated region
      $region25: #{transformer_lm_cnd_forward.5} parent=11 // pred_check
        %p237 = pneg %p124
      $region26: #{transformer_lm_cnd_forward.5} parent=11 // pred_check_branch
        %239 = sbr.rel (%p237) target = $region28
      $region27: #{transformer_lm_cnd_forward.5} parent=11 // pred_region
        _
      $region28: #{transformer_lm_cnd_forward.5} parent=11 // pred_fallthru
        _
      // Predicated region
      $region29: #{transformer_lm_cnd_forward.5} parent=11 // pred_check
        %p240 = pneg %p145
      $region30: #{transformer_lm_cnd_forward.5} parent=11 // pred_check_branch
        %242 = sbr.rel (%p240) target = $region32
      $region31: #{transformer_lm_cnd_forward.5} parent=11 // pred_region
        _
      $region32: #{transformer_lm_cnd_forward.5} parent=11 // pred_fallthru
        _
      // Predicated region
      $region33: #{transformer_lm_cnd_forward.5} parent=11 // pred_check
        %p243 = pneg %p166
      $region34: #{transformer_lm_cnd_forward.5} parent=11 // pred_check_branch
        %245 = sbr.rel (%p243) target = $region36
      $region35: #{transformer_lm_cnd_forward.5} parent=11 // pred_region
        _
      $region36: #{transformer_lm_cnd_forward.5} parent=11 // pred_fallthru
        _
      // Predicated region
      $region37: #{transformer_lm_cnd_forward.5} parent=11 // pred_check
        %p246 = pneg %p187
      $region38: #{transformer_lm_cnd_forward.5} parent=11 // pred_check_branch
        %248 = sbr.rel (%p246) target = $region40
      $region39: #{transformer_lm_cnd_forward.5} parent=11 // pred_region
        _
      $region40: #{transformer_lm_cnd_forward.5} parent=11 // pred_fallthru
        _
    $region12: #{transformer_lm_cnd_forward.5} parent=5 // pred_fallthru
      _
    %p249 = scmp.lt.s32.totalorder %s14, 2
    // Predicated region
    $region41: #{transformer_lm_cnd_forward.5} parent=5 // pred_check
      %p250 = pneg %p249
    $region42: #{transformer_lm_cnd_forward.5} parent=5 // pred_check_branch
      %252 = sbr.rel (%p250) target = $region44
    $region43: #{transformer_lm_cnd_forward.5} parent=5 // pred_region
      // Predicated region
      $region45: #{transformer_lm_cnd_forward.5} parent=43 // pred_check
        %p253 = pneg %p34
      $region46: #{transformer_lm_cnd_forward.5} parent=43 // pred_check_branch
        %255 = sbr.rel (%p253) target = $region48
      $region47: #{transformer_lm_cnd_forward.5} parent=43 // pred_region
        %p256 = scmp.lt.s32.totalorder %s14, 1
        %s257 = scalar_select %p256, %s14, 1
        %s258 = smul.addr %s257, 8
        %s259 = scalar_lea.vmem %s0, %s258
      $region48: #{transformer_lm_cnd_forward.5} parent=43 // pred_fallthru
        _
    $region44: #{transformer_lm_cnd_forward.5} parent=5 // pred_fallthru
      _
    %p260 = scmp.le.s32.totalorder 1, %s14
    %p261 = scmp.lt.s32.totalorder %s14, 3
    %p262 = pnand %p260, %p261
    %p263 = pneg %p262
    // Predicated region
    $region49: #{transformer_lm_cnd_forward.5} parent=5 // pred_check
      _
    $region50: #{transformer_lm_cnd_forward.5} parent=5 // pred_check_branch
      %265 = sbr.rel (%p262) target = $region52
    $region51: #{transformer_lm_cnd_forward.5} parent=5 // pred_region
      %s266 = ssub.s32 %s14, 1
      %p267 = scmp.lt.s32.totalorder %s19, 1
      %s268 = scalar_select %p267, %s19, 1
      %s269 = smul.addr %s268, 8
      %s270 = scalar_lea.vmem %s0, %s269
      %p271 = pneg %p40
      %p272 = pneg %p37
      %p273 = pneg %p61
      %p274 = pneg %p58
      %p275 = pneg %p82
      %p276 = pneg %p79
      %p277 = pneg %p103
      %p278 = pneg %p100
      %p279 = pneg %p124
      %p280 = pneg %p121
      %p281 = pneg %p145
      %p282 = pneg %p142
      %p283 = pneg %p166
      %p284 = pneg %p163
      %p285 = pneg %p187
      %p286 = pneg %p184
      %p287 = pneg %p213
      %p288 = pneg %p210
      %p289 = scmp.lt.s32.totalorder %s19, 1
      %s290 = scalar_select %p289, %s19, 1
      %s291 = smul.addr %s290, 8
      %s292 = scalar_lea.vmem %s8, %s291
      %p293 = scmp.lt.s32.totalorder %s19, 1
      %s294 = scalar_select %p293, %s19, 1
      %s295 = smul.addr %s294, 8
      %s296 = scalar_lea.vmem %s0, %s295
      %p297 = scmp.lt.s32.totalorder %s19, 1
      %s298 = scalar_select %p297, %s19, 1
      %s299 = smul.addr %s298, 8
      %s300 = scalar_lea.vmem %s8, %s299
      %v302 = vld [vmem:[%s296] sm:$0xff]
      %v303 = vld [vmem:[%s6] sm:$0x1]
      %v304 = vld [vmem:[%s7] sm:$0x1]
      %305 = vadd.xlane.f32.xlu0 %v302
      %v306 = vpop.xlane.xlu0 %305
      %v307 = vrcp.pop 128.0
      %v308 = vmul.f32 %v306, %v307
      %v309 = vsub.f32 %v302, %v308
      %v310 = vmul.f32 %v309, %v309
      %311 = vadd.xlane.f32.xlu0 %v310
      %v312 = vpop.xlane.xlu0 %311
      %v313 = vmul.f32 %v312, %v307
      %v314 = vadd.f32 %v313, 1e-05
      %v315 = vrsqrt.pop %v314
      %v316 = vmul.f32 %v309, %v315
      %v318 = vlaneseq
      %v319 = vshrl.u32 %v318, 7
      %v320 = vsub.s32 0, %v319
      %v321 = vrot.slane %v303, %v320
      %v323 = vmul.f32 %v316, %v321
      %v325 = vlaneseq
      %v326 = vshrl.u32 %v325, 7
      %v327 = vsub.s32 0, %v326
      %v328 = vrot.slane %v304, %v327
      %v330 = vadd.f32 %v323, %v328
      %v331 = vpack.c.bf16 %v330, %v330
      %v332 = vld [vmem:[%s4] sm:$0xff]
      %v333 = vld [vmem:[%s4 + $0x8] sm:$0xf]
      %v334 = vld [vmem:[%s4 + $0xc] sm:$0xff]
      %v335 = vld [vmem:[%s4 + $0x14] sm:$0xf]
      %v336 = vld [vmem:[%s4 + $0x18] sm:$0xff]
      %v337 = vld [vmem:[%s4 + $0x20] sm:$0xf]
      %v338 = vld [vmem:[%s4 + $0x24] sm:$0xff]
      %v339 = vld [vmem:[%s4 + $0x2c] sm:$0xf]
      %v340 = vld [vmem:[%s4 + $0x30] sm:$0xff]
      %v341 = vld [vmem:[%s4 + $0x38] sm:$0xf]
      %v342 = vld [vmem:[%s4 + $0x3c] sm:$0xff]
      %v343 = vld [vmem:[%s4 + $0x44] sm:$0xf]
      %v344 = vld [vmem:[%s4 + $0x48] sm:$0xff]
      %v345 = vld [vmem:[%s4 + $0x50] sm:$0xf]
      %v346 = vld [vmem:[%s4 + $0x54] sm:$0xff]
      %v347 = vld [vmem:[%s4 + $0x5c] sm:$0xf]
      %v348 = vld [vmem:[%s4 + $0x60] sm:$0xff]
      %v349 = vld [vmem:[%s4 + $0x68] sm:$0xf]
      %v350 = vld [vmem:[%s4 + $0x6c] sm:$0xff]
      %v351 = vld [vmem:[%s4 + $0x74] sm:$0xf]
      %v352 = vld [vmem:[%s4 + $0x78] sm:$0xff]
      %v353 = vld [vmem:[%s4 + $0x80] sm:$0xf]
      %v354 = vld [vmem:[%s4 + $0x84] sm:$0xff]
      %v355 = vld [vmem:[%s4 + $0x8c] sm:$0xf]
      %v356 = vld [vmem:[%s4 + $0x90] sm:$0xff]
      %v357 = vld [vmem:[%s4 + $0x98] sm:$0xf]
      %v358 = vld [vmem:[%s4 + $0x9c] sm:$0xff]
      %v359 = vld [vmem:[%s4 + $0xa4] sm:$0xf]
      %v360 = vld [vmem:[%s4 + $0xa8] sm:$0xff]
      %v361 = vld [vmem:[%s4 + $0xb0] sm:$0xf]
      %v362 = vld [vmem:[%s4 + $0xb4] sm:$0xff]
      %v363 = vld [vmem:[%s4 + $0xbc] sm:$0xf]
      %v396 = vunpack.c.l.b16 %v332
      %v397 = vunpack.c.h.b16 %v332
      %v398 = vunpack.c.l.b16 %v333
      %v399 = vunpack.c.l.b16 %v334
      %v400 = vunpack.c.h.b16 %v334
      %v401 = vunpack.c.l.b16 %v335
      %v402 = vunpack.c.l.b16 %v336
      %v403 = vunpack.c.h.b16 %v336
      %v404 = vunpack.c.l.b16 %v337
      %v405 = vunpack.c.l.b16 %v338
      %v406 = vunpack.c.h.b16 %v338
      %v407 = vunpack.c.l.b16 %v339
      %v408 = vunpack.c.l.b16 %v340
      %v409 = vunpack.c.h.b16 %v340
      %v410 = vunpack.c.l.b16 %v341
      %v411 = vunpack.c.l.b16 %v342
      %v412 = vunpack.c.h.b16 %v342
      %v413 = vunpack.c.l.b16 %v343
      %v414 = vunpack.c.l.b16 %v344
      %v415 = vunpack.c.h.b16 %v344
      %v416 = vunpack.c.l.b16 %v345
      %v417 = vunpack.c.l.b16 %v346
      %v418 = vunpack.c.h.b16 %v346
      %v419 = vunpack.c.l.b16 %v347
      %v420 = vunpack.c.l.b16 %v348
      %v421 = vunpack.c.h.b16 %v348
      %v422 = vunpack.c.l.b16 %v349
      %v423 = vunpack.c.l.b16 %v350
      %v424 = vunpack.c.h.b16 %v350
      %v425 = vunpack.c.l.b16 %v351
      %v426 = vunpack.c.l.b16 %v352
      %v427 = vunpack.c.h.b16 %v352
      %v428 = vunpack.c.l.b16 %v353
      %v429 = vunpack.c.l.b16 %v354
      %v430 = vunpack.c.h.b16 %v354
      %v431 = vunpack.c.l.b16 %v355
      %v432 = vunpack.c.l.b16 %v356
      %v433 = vunpack.c.h.b16 %v356
      %v434 = vunpack.c.l.b16 %v357
      %v435 = vunpack.c.l.b16 %v358
      %v436 = vunpack.c.h.b16 %v358
      %v437 = vunpack.c.l.b16 %v359
      %v438 = vunpack.c.l.b16 %v360
      %v439 = vunpack.c.h.b16 %v360
      %v440 = vunpack.c.l.b16 %v361
      %v441 = vunpack.c.l.b16 %v362
      %v442 = vunpack.c.h.b16 %v362
      %v443 = vunpack.c.l.b16 %v363
      %v444 = vpack.c.b16 %v399, %v396
      %v445 = vpack.c.b16 %v400, %v397
      %v446 = vpack.c.b16 %v401, %v398
      %v447 = vpack.c.b16 %v405, %v402
      %v448 = vpack.c.b16 %v406, %v403
      %v449 = vpack.c.b16 %v407, %v404
      %v450 = vpack.c.b16 %v411, %v408
      %v451 = vpack.c.b16 %v412, %v409
      %v452 = vpack.c.b16 %v413, %v410
      %v453 = vpack.c.b16 %v417, %v414
      %v454 = vpack.c.b16 %v418, %v415
      %v455 = vpack.c.b16 %v419, %v416
      %v456 = vpack.c.b16 %v423, %v420
      %v457 = vpack.c.b16 %v424, %v421
      %v458 = vpack.c.b16 %v425, %v422
      %v459 = vpack.c.b16 %v429, %v426
      %v460 = vpack.c.b16 %v430, %v427
      %v461 = vpack.c.b16 %v431, %v428
      %v462 = vpack.c.b16 %v435, %v432
      %v463 = vpack.c.b16 %v436, %v433
      %v464 = vpack.c.b16 %v437, %v434
      %v465 = vpack.c.b16 %v441, %v438
      %v466 = vpack.c.b16 %v442, %v439
      %v467 = vpack.c.b16 %v443, %v440
      %492 = vmatprep.subr.bf16.mxu0 %v445
      %493 = vmatpush1.bf16.msra.mxu0 %v444
      %494 = vmatprep.subr.bf16.mxu0 %v448
      %495 = vmatpush1.bf16.msra.mxu0 %v447
      %496 = vmatprep.subr.bf16.mxu0 %v451
      %497 = vmatpush1.bf16.msra.mxu0 %v450
      %498 = vmatprep.subr.bf16.mxu0 %v454
      %499 = vmatpush1.bf16.msra.mxu0 %v453
      %500 = vmatprep.subr.bf16.mxu0 %v457
      %501 = vmatpush1.bf16.msra.mxu0 %v456
      %502 = vmatprep.subr.bf16.mxu0 %v460
      %503 = vmatpush1.bf16.msra.mxu0 %v459
      %504 = vmatprep.subr.bf16.mxu0 %v463
      %505 = vmatpush1.bf16.msra.mxu0 %v462
      %506 = vmatprep.subr.bf16.mxu0 %v466
      %507 = vmatpush1.bf16.msra.mxu0 %v465
      %508 = vmatprep.subr.bf16.mxu0 0
      %509 = vmatpush1.bf16.msra.mxu0 0
      %510 = vmatprep.subr.bf16.mxu0 0
      %511 = vmatpush1.bf16.msra.mxu0 0
      %512 = vmatprep.subr.bf16.mxu0 0
      %513 = vmatpush1.bf16.msra.mxu0 0
      %514 = vmatprep.subr.bf16.mxu0 0
      %515 = vmatpush1.bf16.msra.mxu0 0
      %516 = vmatprep.subr.bf16.mxu0 0
      %517 = vmatpush1.bf16.msra.mxu0 0
      %518 = vmatprep.subr.bf16.mxu0 0
      %519 = vmatpush1.bf16.msra.mxu0 0
      %520 = vmatprep.subr.bf16.mxu0 0
      %521 = vmatpush1.bf16.msra.mxu0 0
      %522 = vmatprep.subr.bf16.mxu0 0
      %523 = vmatpush1.bf16.msra.mxu0 0
      %524 = vmatprep.mubr.bf16.mxu0 0
      %525 = vmatmul.mubr.bf16.gmra.mrb[0].mxu0 %v331
      %v526 = vpop.f32.mrb[0].mxu0
      %v527 = vadd.f32 0.0, %v526
      %v528 = vpop.f32.mrb[0].mxu0
      %v529 = vadd.f32 0.0, %v528
      %v530 = vpop.f32.mrb[0].mxu0
      %v531 = vpop.f32.mrb[0].mxu0
      %532 = vdwg.mxu0
      %533 = vmatprep.subr.bf16.mxu0 0
      %534 = vmatpush1.bf16.msra.mxu0 %v446
      %535 = vmatprep.subr.bf16.mxu0 0
      %536 = vmatpush1.bf16.msra.mxu0 %v449
      %537 = vmatprep.subr.bf16.mxu0 0
      %538 = vmatpush1.bf16.msra.mxu0 %v452
      %539 = vmatprep.subr.bf16.mxu0 0
      %540 = vmatpush1.bf16.msra.mxu0 %v455
      %541 = vmatprep.subr.bf16.mxu0 0
      %542 = vmatpush1.bf16.msra.mxu0 %v458
      %543 = vmatprep.subr.bf16.mxu0 0
      %544 = vmatpush1.bf16.msra.mxu0 %v461
      %545 = vmatprep.subr.bf16.mxu0 0
      %546 = vmatpush1.bf16.msra.mxu0 %v464
      %547 = vmatprep.subr.bf16.mxu0 0
      %548 = vmatpush1.bf16.msra.mxu0 %v467
      %549 = vmatprep.subr.bf16.mxu0 0
      %550 = vmatpush1.bf16.msra.mxu0 0
      %551 = vmatprep.subr.bf16.mxu0 0
      %552 = vmatpush1.bf16.msra.mxu0 0
      %553 = vmatprep.subr.bf16.mxu0 0
      %554 = vmatpush1.bf16.msra.mxu0 0
      %555 = vmatprep.subr.bf16.mxu0 0
      %556 = vmatpush1.bf16.msra.mxu0 0
      %557 = vmatprep.subr.bf16.mxu0 0
      %558 = vmatpush1.bf16.msra.mxu0 0
      %559 = vmatprep.subr.bf16.mxu0 0
      %560 = vmatpush1.bf16.msra.mxu0 0
      %561 = vmatprep.subr.bf16.mxu0 0
      %562 = vmatpush1.bf16.msra.mxu0 0
      %563 = vmatprep.subr.bf16.mxu0 0
      %564 = vmatpush1.bf16.msra.mxu0 0
      %565 = vmatprep.mubr.bf16.mxu0 0
      %566 = vmatmul.mubr.bf16.gmra.mrb[0].mxu0 %v331
      %v567 = vpop.f32.mrb[0].mxu0
      %v568 = vadd.f32 0.0, %v567
      %v569 = vpop.f32.mrb[0].mxu0
      %v570 = vpop.f32.mrb[0].mxu0
      %v571 = vpop.f32.mrb[0].mxu0
      %572 = vdwg.mxu0
      %v573 = vld [vmem:[%s1] sm:$0xff]
      %v574 = vld [vmem:[%s2] sm:$0xff]
      %v575 = vld [vmem:[%s3] sm:$0xff]
      %v576 = vmul.f32 %v527, %v573
      %578 = vrot.lane.b32.xlu0 %v527, 16
      %v579 = vpop.permute.xlu0 %578
      %v581 = vmul.f32 %v579, %v574
      %v582 = vadd.f32 %v576, %v581
      %583 = vrot.lane.b32.xlu0 %v527, 112
      %v584 = vpop.permute.xlu0 %583
      %v586 = vmul.f32 %v584, %v575
      %v587 = vadd.f32 %v582, %v586
      %v588 = vpack.c.bf16 %v587, %v587
      %v589 = vmul.f32 %v529, %v573
      %591 = vrot.lane.b32.xlu0 %v529, 16
      %v592 = vpop.permute.xlu0 %591
      %v594 = vmul.f32 %v592, %v574
      %v595 = vadd.f32 %v589, %v594
      %596 = vrot.lane.b32.xlu0 %v529, 112
      %v597 = vpop.permute.xlu0 %596
      %v599 = vmul.f32 %v597, %v575
      %v600 = vadd.f32 %v595, %v599
      %v601 = vpack.c.bf16 %v600, %v600
      %v602 = vpack.c.bf16 %v568, %v568
      %v603 = vlaneseq
      %v604 = vshrl.u32 %v603, 7
      %v605 = vlaneseq
      %v606 = vand.u32 %v605, 127
      %vm607 = vcmp.le.s32.totalorder %v606, %v604
      %vm608 = vcmask 261120
      %v610 = vsel %vm608, %v588, 0
      %v613 = vsel %vm608, %v601, 0
      %615 = vmatprep.subr.bf16.mxu0 0
      %616 = vmatpush1.bf16.xpose.msra.mxu0 %v613
      %617 = vmatprep.subr.bf16.mxu0 0
      %618 = vmatpush1.bf16.xpose.msra.mxu0 0
      %619 = vmatprep.subr.bf16.mxu0 0
      %620 = vmatpush1.bf16.xpose.msra.mxu0 0
      %621 = vmatprep.subr.bf16.mxu0 0
      %622 = vmatpush1.bf16.xpose.msra.mxu0 0
      %623 = vmatprep.subr.bf16.mxu0 0
      %624 = vmatpush1.bf16.xpose.msra.mxu0 0
      %625 = vmatprep.subr.bf16.mxu0 0
      %626 = vmatpush1.bf16.xpose.msra.mxu0 0
      %627 = vmatprep.subr.bf16.mxu0 0
      %628 = vmatpush1.bf16.xpose.msra.mxu0 0
      %629 = vmatprep.subr.bf16.mxu0 0
      %630 = vmatpush1.bf16.xpose.msra.mxu0 0
      %631 = vmatprep.subr.bf16.mxu0 0
      %632 = vmatpush1.bf16.xpose.msra.mxu0 0
      %633 = vmatprep.subr.bf16.mxu0 0
      %634 = vmatpush1.bf16.xpose.msra.mxu0 0
      %635 = vmatprep.subr.bf16.mxu0 0
      %636 = vmatpush1.bf16.xpose.msra.mxu0 0
      %637 = vmatprep.subr.bf16.mxu0 0
      %638 = vmatpush1.bf16.xpose.msra.mxu0 0
      %639 = vmatprep.subr.bf16.mxu0 0
      %640 = vmatpush1.bf16.xpose.msra.mxu0 0
      %641 = vmatprep.subr.bf16.mxu0 0
      %642 = vmatpush1.bf16.xpose.msra.mxu0 0
      %643 = vmatprep.subr.bf16.mxu0 0
      %644 = vmatpush1.bf16.xpose.msra.mxu0 0
      %645 = vmatprep.subr.bf16.mxu0 0
      %646 = vmatpush1.bf16.xpose.msra.mxu0 0
      %647 = vmatprep.mubr.bf16.mxu0 0
      %648 = vmatmul.mubr.bf16.gmra.mrb[0].mxu0 %v610
      %v649 = vpop.f32.mrb[0].mxu0
      %v650 = vadd.f32 0.0, %v649
      %v651 = vpop.f32.mrb[0].mxu0
      %v652 = vpop.f32.mrb[0].mxu0
      %v653 = vpop.f32.mrb[0].mxu0
      %654 = vdwg.mxu0
      %v655 = vmul.f32 %v650, 0.17677669
      %v656 = vsel %vm607, %v655, -1e+30
      %vm657 = vcmask 64512
      %v658 = vsel %vm657, %v656, -inf
      %659 = vmax.xlane.f32.xlu0 %v658
      %v660 = vpop.xlane.xlu0 %659
      %v661 = vsub.f32 %v656, %v660
      %v662 = vmul.f32 %v661, 1.442695
      %v663 = vpow.pop %v662
      %v664 = vsel %vm657, %v663, 0.0
      %665 = vadd.xlane.f32.xlu0 %v664
      %v666 = vpop.xlane.xlu0 %665
      %v667 = vrcp.pop %v666
      %v668 = vmul.f32 %v663, %v667
      %v669 = vpack.c.bf16 %v668, %v668
      %v671 = vsel %vm657, %v669, 0
      %vm673 = vcmask 1043456
      %v675 = vsel %vm673, %v602, 0
      %677 = vmatprep.subr.bf16.mxu0 0
      %678 = vmatpush1.bf16.msra.mxu0 %v675
      %679 = vmatprep.subr.bf16.mxu0 0
      %680 = vmatpush1.bf16.msra.mxu0 0
      %681 = vmatprep.subr.bf16.mxu0 0
      %682 = vmatpush1.bf16.msra.mxu0 0
      %683 = vmatprep.subr.bf16.mxu0 0
      %684 = vmatpush1.bf16.msra.mxu0 0
      %685 = vmatprep.subr.bf16.mxu0 0
      %686 = vmatpush1.bf16.msra.mxu0 0
      %687 = vmatprep.subr.bf16.mxu0 0
      %688 = vmatpush1.bf16.msra.mxu0 0
      %689 = vmatprep.subr.bf16.mxu0 0
      %690 = vmatpush1.bf16.msra.mxu0 0
      %691 = vmatprep.subr.bf16.mxu0 0
      %692 = vmatpush1.bf16.msra.mxu0 0
      %693 = vmatprep.subr.bf16.mxu0 0
      %694 = vmatpush1.bf16.msra.mxu0 0
      %695 = vmatprep.subr.bf16.mxu0 0
      %696 = vmatpush1.bf16.msra.mxu0 0
      %697 = vmatprep.subr.bf16.mxu0 0
      %698 = vmatpush1.bf16.msra.mxu0 0
      %699 = vmatprep.subr.bf16.mxu0 0
      %700 = vmatpush1.bf16.msra.mxu0 0
      %701 = vmatprep.subr.bf16.mxu0 0
      %702 = vmatpush1.bf16.msra.mxu0 0
      %703 = vmatprep.subr.bf16.mxu0 0
      %704 = vmatpush1.bf16.msra.mxu0 0
      %705 = vmatprep.subr.bf16.mxu0 0
      %706 = vmatpush1.bf16.msra.mxu0 0
      %707 = vmatprep.subr.bf16.mxu0 0
      %708 = vmatpush1.bf16.msra.mxu0 0
      %709 = vmatprep.mubr.bf16.mxu0 0
      %710 = vmatmul.mubr.bf16.gmra.mrb[0].mxu0 %v671
      %v711 = vpop.f32.mrb[0].mxu0
      %v712 = vadd.f32 0.0, %v711
      %v713 = vpop.f32.mrb[0].mxu0
      %v714 = vpop.f32.mrb[0].mxu0
      %v715 = vpop.f32.mrb[0].mxu0
      %716 = vdwg.mxu0
      %718 = vrot.lane.b32.xlu0 %v588, 96
      %v719 = vpop.permute.xlu0 %718
      %721 = vrot.lane.b32.xlu0 %v601, 96
      %v722 = vpop.permute.xlu0 %721
      %v724 = vsel %vm608, %v719, 0
      %v727 = vsel %vm608, %v722, 0
      %729 = vmatprep.subr.bf16.mxu0 0
      %730 = vmatpush1.bf16.xpose.msra.mxu0 %v727
      %731 = vmatprep.subr.bf16.mxu0 0
      %732 = vmatpush1.bf16.xpose.msra.mxu0 0
      %733 = vmatprep.subr.bf16.mxu0 0
      %734 = vmatpush1.bf16.xpose.msra.mxu0 0
      %735 = vmatprep.subr.bf16.mxu0 0
      %736 = vmatpush1.bf16.xpose.msra.mxu0 0
      %737 = vmatprep.subr.bf16.mxu0 0
      %738 = vmatpush1.bf16.xpose.msra.mxu0 0
      %739 = vmatprep.subr.bf16.mxu0 0
      %740 = vmatpush1.bf16.xpose.msra.mxu0 0
      %741 = vmatprep.subr.bf16.mxu0 0
      %742 = vmatpush1.bf16.xpose.msra.mxu0 0
      %743 = vmatprep.subr.bf16.mxu0 0
      %744 = vmatpush1.bf16.xpose.msra.mxu0 0
      %745 = vmatprep.subr.bf16.mxu0 0
      %746 = vmatpush1.bf16.xpose.msra.mxu0 0
      %747 = vmatprep.subr.bf16.mxu0 0
      %748 = vmatpush1.bf16.xpose.msra.mxu0 0
      %749 = vmatprep.subr.bf16.mxu0 0
      %750 = vmatpush1.bf16.xpose.msra.mxu0 0
      %751 = vmatprep.subr.bf16.mxu0 0
      %752 = vmatpush1.bf16.xpose.msra.mxu0 0
      %753 = vmatprep.subr.bf16.mxu0 0
      %754 = vmatpush1.bf16.xpose.msra.mxu0 0
      %755 = vmatprep.subr.bf16.mxu0 0
      %756 = vmatpush1.bf16.xpose.msra.mxu0 0
      %757 = vmatprep.subr.bf16.mxu0 0
      %758 = vmatpush1.bf16.xpose.msra.mxu0 0
      %759 = vmatprep.subr.bf16.mxu0 0
      %760 = vmatpush1.bf16.xpose.msra.mxu0 0
      %761 = vmatprep.mubr.bf16.mxu0 0
      %762 = vmatmul.mubr.bf16.gmra.mrb[0].mxu0 %v724
      %v763 = vpop.f32.mrb[0].mxu0
      %v764 = vadd.f32 0.0, %v763
      %v765 = vpop.f32.mrb[0].mxu0
      %v766 = vpop.f32.mrb[0].mxu0
      %v767 = vpop.f32.mrb[0].mxu0
      %768 = vdwg.mxu0
      %v769 = vmul.f32 %v764, 0.17677669
      %v770 = vsel %vm607, %v769, -1e+30
      %v771 = vsel %vm657, %v770, -inf
      %772 = vmax.xlane.f32.xlu0 %v771
      %v773 = vpop.xlane.xlu0 %772
      %v774 = vsub.f32 %v770, %v773
      %v775 = vmul.f32 %v774, 1.442695
      %v776 = vpow.pop %v775
      %v777 = vsel %vm657, %v776, 0.0
      %778 = vadd.xlane.f32.xlu0 %v777
      %v779 = vpop.xlane.xlu0 %778
      %v780 = vrcp.pop %v779
      %v781 = vmul.f32 %v776, %v780
      %v782 = vpack.c.bf16 %v781, %v781
      %784 = vrot.lane.b32.xlu0 %v602, 96
      %v785 = vpop.permute.xlu0 %784
      %v787 = vsel %vm657, %v782, 0
      %v790 = vsel %vm673, %v785, 0
      %792 = vmatprep.subr.bf16.mxu0 0
      %793 = vmatpush1.bf16.msra.mxu0 %v790
      %794 = vmatprep.subr.bf16.mxu0 0
      %795 = vmatpush1.bf16.msra.mxu0 0
      %796 = vmatprep.subr.bf16.mxu0 0
      %797 = vmatpush1.bf16.msra.mxu0 0
      %798 = vmatprep.subr.bf16.mxu0 0
      %799 = vmatpush1.bf16.msra.mxu0 0
      %800 = vmatprep.subr.bf16.mxu0 0
      %801 = vmatpush1.bf16.msra.mxu0 0
      %802 = vmatprep.subr.bf16.mxu0 0
      %803 = vmatpush1.bf16.msra.mxu0 0
      %804 = vmatprep.subr.bf16.mxu0 0
      %805 = vmatpush1.bf16.msra.mxu0 0
      %806 = vmatprep.subr.bf16.mxu0 0
      %807 = vmatpush1.bf16.msra.mxu0 0
      %808 = vmatprep.subr.bf16.mxu0 0
      %809 = vmatpush1.bf16.msra.mxu0 0
      %810 = vmatprep.subr.bf16.mxu0 0
      %811 = vmatpush1.bf16.msra.mxu0 0
      %812 = vmatprep.subr.bf16.mxu0 0
      %813 = vmatpush1.bf16.msra.mxu0 0
      %814 = vmatprep.subr.bf16.mxu0 0
      %815 = vmatpush1.bf16.msra.mxu0 0
      %816 = vmatprep.subr.bf16.mxu0 0
      %817 = vmatpush1.bf16.msra.mxu0 0
      %818 = vmatprep.subr.bf16.mxu0 0
      %819 = vmatpush1.bf16.msra.mxu0 0
      %820 = vmatprep.subr.bf16.mxu0 0
      %821 = vmatpush1.bf16.msra.mxu0 0
      %822 = vmatprep.subr.bf16.mxu0 0
      %823 = vmatpush1.bf16.msra.mxu0 0
      %824 = vmatprep.mubr.bf16.mxu0 0
      %825 = vmatmul.mubr.bf16.gmra.mrb[0].mxu0 %v787
      %v826 = vpop.f32.mrb[0].mxu0
      %v827 = vadd.f32 0.0, %v826
      %v828 = vpop.f32.mrb[0].mxu0
      %v829 = vpop.f32.mrb[0].mxu0
      %v830 = vpop.f32.mrb[0].mxu0
      %831 = vdwg.mxu0
      %832 = vrot.lane.b32.xlu0 %v588, 64
      %v833 = vpop.permute.xlu0 %832
      %834 = vrot.lane.b32.xlu0 %v601, 64
      %v835 = vpop.permute.xlu0 %834
      %v837 = vsel %vm608, %v833, 0
      %v840 = vsel %vm608, %v835, 0
      %842 = vmatprep.subr.bf16.mxu0 0
      %843 = vmatpush1.bf16.xpose.msra.mxu0 %v840
      %844 = vmatprep.subr.bf16.mxu0 0
      %845 = vmatpush1.bf16.xpose.msra.mxu0 0
      %846 = vmatprep.subr.bf16.mxu0 0
      %847 = vmatpush1.bf16.xpose.msra.mxu0 0
      %848 = vmatprep.subr.bf16.mxu0 0
      %849 = vmatpush1.bf16.xpose.msra.mxu0 0
      %850 = vmatprep.subr.bf16.mxu0 0
      %851 = vmatpush1.bf16.xpose.msra.mxu0 0
      %852 = vmatprep.subr.bf16.mxu0 0
      %853 = vmatpush1.bf16.xpose.msra.mxu0 0
      %854 = vmatprep.subr.bf16.mxu0 0
      %855 = vmatpush1.bf16.xpose.msra.mxu0 0
      %856 = vmatprep.subr.bf16.mxu0 0
      %857 = vmatpush1.bf16.xpose.msra.mxu0 0
      %858 = vmatprep.subr.bf16.mxu0 0
      %859 = vmatpush1.bf16.xpose.msra.mxu0 0
      %860 = vmatprep.subr.bf16.mxu0 0
      %861 = vmatpush1.bf16.xpose.msra.mxu0 0
      %862 = vmatprep.subr.bf16.mxu0 0
      %863 = vmatpush1.bf16.xpose.msra.mxu0 0
      %864 = vmatprep.subr.bf16.mxu0 0
      %865 = vmatpush1.bf16.xpose.msra.mxu0 0
      %866 = vmatprep.subr.bf16.mxu0 0
      %867 = vmatpush1.bf16.xpose.msra.mxu0 0
      %868 = vmatprep.subr.bf16.mxu0 0
      %869 = vmatpush1.bf16.xpose.msra.mxu0 0
      %870 = vmatprep.subr.bf16.mxu0 0
      %871 = vmatpush1.bf16.xpose.msra.mxu0 0
      %872 = vmatprep.subr.bf16.mxu0 0
      %873 = vmatpush1.bf16.xpose.msra.mxu0 0
      %874 = vmatprep.mubr.bf16.mxu0 0
      %875 = vmatmul.mubr.bf16.gmra.mrb[0].mxu0 %v837
      %v876 = vpop.f32.mrb[0].mxu0
      %v877 = vadd.f32 0.0, %v876
      %v878 = vpop.f32.mrb[0].mxu0
      %v879 = vpop.f32.mrb[0].mxu0
      %v880 = vpop.f32.mrb[0].mxu0
      %881 = vdwg.mxu0
      %v882 = vmul.f32 %v877, 0.17677669
      %v883 = vsel %vm607, %v882, -1e+30
      %v884 = vsel %vm657, %v883, -inf
      %885 = vmax.xlane.f32.xlu0 %v884
      %v886 = vpop.xlane.xlu0 %885
      %v887 = vsub.f32 %v883, %v886
      %v888 = vmul.f32 %v887, 1.442695
      %v889 = vpow.pop %v888
      %v890 = vsel %vm657, %v889, 0.0
      %891 = vadd.xlane.f32.xlu0 %v890
      %v892 = vpop.xlane.xlu0 %891
      %v893 = vrcp.pop %v892
      %v894 = vmul.f32 %v889, %v893
      %v895 = vpack.c.bf16 %v894, %v894
      %896 = vrot.lane.b32.xlu0 %v602, 64
      %v897 = vpop.permute.xlu0 %896
      %v899 = vsel %vm657, %v895, 0
      %v902 = vsel %vm673, %v897, 0
      %904 = vmatprep.subr.bf16.mxu0 0
      %905 = vmatpush1.bf16.msra.mxu0 %v902
      %906 = vmatprep.subr.bf16.mxu0 0
      %907 = vmatpush1.bf16.msra.mxu0 0
      %908 = vmatprep.subr.bf16.mxu0 0
      %909 = vmatpush1.bf16.msra.mxu0 0
      %910 = vmatprep.subr.bf16.mxu0 0
      %911 = vmatpush1.bf16.msra.mxu0 0
      %912 = vmatprep.subr.bf16.mxu0 0
      %913 = vmatpush1.bf16.msra.mxu0 0
      %914 = vmatprep.subr.bf16.mxu0 0
      %915 = vmatpush1.bf16.msra.mxu0 0
      %916 = vmatprep.subr.bf16.mxu0 0
      %917 = vmatpush1.bf16.msra.mxu0 0
      %918 = vmatprep.subr.bf16.mxu0 0
      %919 = vmatpush1.bf16.msra.mxu0 0
      %920 = vmatprep.subr.bf16.mxu0 0
      %921 = vmatpush1.bf16.msra.mxu0 0
      %922 = vmatprep.subr.bf16.mxu0 0
      %923 = vmatpush1.bf16.msra.mxu0 0
      %924 = vmatprep.subr.bf16.mxu0 0
      %925 = vmatpush1.bf16.msra.mxu0 0
      %926 = vmatprep.subr.bf16.mxu0 0
      %927 = vmatpush1.bf16.msra.mxu0 0
      %928 = vmatprep.subr.bf16.mxu0 0
      %929 = vmatpush1.bf16.msra.mxu0 0
      %930 = vmatprep.subr.bf16.mxu0 0
      %931 = vmatpush1.bf16.msra.mxu0 0
      %932 = vmatprep.subr.bf16.mxu0 0
      %933 = vmatpush1.bf16.msra.mxu0 0
      %934 = vmatprep.subr.bf16.mxu0 0
      %935 = vmatpush1.bf16.msra.mxu0 0
      %936 = vmatprep.mubr.bf16.mxu0 0
      %937 = vmatmul.mubr.bf16.gmra.mrb[0].mxu0 %v899
      %v938 = vpop.f32.mrb[0].mxu0
      %v939 = vadd.f32 0.0, %v938
      %v940 = vpop.f32.mrb[0].mxu0
      %v941 = vpop.f32.mrb[0].mxu0
      %v942 = vpop.f32.mrb[0].mxu0
      %943 = vdwg.mxu0
      %944 = vrot.lane.b32.xlu0 %v588, 32
      %v945 = vpop.permute.xlu0 %944
      %946 = vrot.lane.b32.xlu0 %v601, 32
      %v947 = vpop.permute.xlu0 %946
      %v949 = vsel %vm608, %v945, 0
      %v952 = vsel %vm608, %v947, 0
      %954 = vmatprep.subr.bf16.mxu0 0
      %955 = vmatpush1.bf16.xpose.msra.mxu0 %v952
      %956 = vmatprep.subr.bf16.mxu0 0
      %957 = vmatpush1.bf16.xpose.msra.mxu0 0
      %958 = vmatprep.subr.bf16.mxu0 0
      %959 = vmatpush1.bf16.xpose.msra.mxu0 0
      %960 = vmatprep.subr.bf16.mxu0 0
      %961 = vmatpush1.bf16.xpose.msra.mxu0 0
      %962 = vmatprep.subr.bf16.mxu0 0
      %963 = vmatpush1.bf16.xpose.msra.mxu0 0
      %964 = vmatprep.subr.bf16.mxu0 0
      %965 = vmatpush1.bf16.xpose.msra.mxu0 0
      %966 = vmatprep.subr.bf16.mxu0 0
      %967 = vmatpush1.bf16.xpose.msra.mxu0 0
      %968 = vmatprep.subr.bf16.mxu0 0
      %969 = vmatpush1.bf16.xpose.msra.mxu0 0
      %970 = vmatprep.subr.bf16.mxu0 0
      %971 = vmatpush1.bf16.xpose.msra.mxu0 0
      %972 = vmatprep.subr.bf16.mxu0 0
      %973 = vmatpush1.bf16.xpose.msra.mxu0 0
      %974 = vmatprep.subr.bf16.mxu0 0
      %975 = vmatpush1.bf16.xpose.msra.mxu0 0
      %976 = vmatprep.subr.bf16.mxu0 0
      %977 = vmatpush1.bf16.xpose.msra.mxu0 0
      %978 = vmatprep.subr.bf16.mxu0 0
      %979 = vmatpush1.bf16.xpose.msra.mxu0 0
      %980 = vmatprep.subr.bf16.mxu0 0
      %981 = vmatpush1.bf16.xpose.msra.mxu0 0
      %982 = vmatprep.subr.bf16.mxu0 0
      %983 = vmatpush1.bf16.xpose.msra.mxu0 0
      %984 = vmatprep.subr.bf16.mxu0 0
      %985 = vmatpush1.bf16.xpose.msra.mxu0 0
      %986 = vmatprep.mubr.bf16.mxu0 0
      %987 = vmatmul.mubr.bf16.gmra.mrb[0].mxu0 %v949
      %v988 = vpop.f32.mrb[0].mxu0
      %v989 = vadd.f32 0.0, %v988
      %v990 = vpop.f32.mrb[0].mxu0
      %v991 = vpop.f32.mrb[0].mxu0
      %v992 = vpop.f32.mrb[0].mxu0
      %993 = vdwg.mxu0
      %v994 = vmul.f32 %v989, 0.17677669
      %v995 = vsel %vm607, %v994, -1e+30
      %v996 = vsel %vm657, %v995, -inf
      %997 = vmax.xlane.f32.xlu0 %v996
      %v998 = vpop.xlane.xlu0 %997
      %v999 = vsub.f32 %v995, %v998
      %v1000 = vmul.f32 %v999, 1.442695
      %v1001 = vpow.pop %v1000
      %v1002 = vsel %vm657, %v1001, 0.0
      %1003 = vadd.xlane.f32.xlu0 %v1002
      %v1004 = vpop.xlane.xlu0 %1003
      %v1005 = vrcp.pop %v1004
      %v1006 = vmul.f32 %v1001, %v1005
      %v1007 = vpack.c.bf16 %v1006, %v1006
      %1008 = vrot.lane.b32.xlu0 %v602, 32
      %v1009 = vpop.permute.xlu0 %1008
      %v1011 = vsel %vm657, %v1007, 0
      %v1014 = vsel %vm673, %v1009, 0
      %1016 = vmatprep.subr.bf16.mxu0 0
      %1017 = vmatpush1.bf16.msra.mxu0 %v1014
      %1018 = vmatprep.subr.bf16.mxu0 0
      %1019 = vmatpush1.bf16.msra.mxu0 0
      %1020 = vmatprep.subr.bf16.mxu0 0
      %1021 = vmatpush1.bf16.msra.mxu0 0
      %1022 = vmatprep.subr.bf16.mxu0 0
      %1023 = vmatpush1.bf16.msra.mxu0 0
      %1024 = vmatprep.subr.bf16.mxu0 0
      %1025 = vmatpush1.bf16.msra.mxu0 0
      %1026 = vmatprep.subr.bf16.mxu0 0
      %1027 = vmatpush1.bf16.msra.mxu0 0
      %1028 = vmatprep.subr.bf16.mxu0 0
      %1029 = vmatpush1.bf16.msra.mxu0 0
      %1030 = vmatprep.subr.bf16.mxu0 0
      %1031 = vmatpush1.bf16.msra.mxu0 0
      %1032 = vmatprep.subr.bf16.mxu0 0
      %1033 = vmatpush1.bf16.msra.mxu0 0
      %1034 = vmatprep.subr.bf16.mxu0 0
      %1035 = vmatpush1.bf16.msra.mxu0 0
      %1036 = vmatprep.subr.bf16.mxu0 0
      %1037 = vmatpush1.bf16.msra.mxu0 0
      %1038 = vmatprep.subr.bf16.mxu0 0
      %1039 = vmatpush1.bf16.msra.mxu0 0
      %1040 = vmatprep.subr.bf16.mxu0 0
      %1041 = vmatpush1.bf16.msra.mxu0 0
      %1042 = vmatprep.subr.bf16.mxu0 0
      %1043 = vmatpush1.bf16.msra.mxu0 0
      %1044 = vmatprep.subr.bf16.mxu0 0
      %1045 = vmatpush1.bf16.msra.mxu0 0
      %1046 = vmatprep.subr.bf16.mxu0 0
      %1047 = vmatpush1.bf16.msra.mxu0 0
      %1048 = vmatprep.mubr.bf16.mxu0 0
      %1049 = vmatmul.mubr.bf16.gmra.mrb[0].mxu0 %v1011
      %v1050 = vpop.f32.mrb[0].mxu0
      %v1051 = vadd.f32 0.0, %v1050
      %v1052 = vpop.f32.mrb[0].mxu0
      %v1053 = vpop.f32.mrb[0].mxu0
      %v1054 = vpop.f32.mrb[0].mxu0
      %1055 = vdwg.mxu0
      %1057 = vrot.lane.b32.xlu0 %v827, 32
      %v1058 = vpop.permute.xlu0 %1057
      %1061 = vrot.lane.b32.xlu0 %v939, 64
      %v1062 = vpop.permute.xlu0 %1061
      %1065 = vrot.lane.b32.xlu0 %v1051, 96
      %v1066 = vpop.permute.xlu0 %1065
      %v1068 = vsel %vm608, %v712, %v1058
      %vm1069 = vcmask 523264
      %v1070 = vsel %vm1069, %v1068, %v1062
      %vm1071 = vcmask 785408
      %v1072 = vsel %vm1071, %v1070, %v1066
      %v1073 = vpack.c.bf16 %v1072, %v1072
      %v1074 = vld [vmem:[%s5] sm:$0xf]
      %v1075 = vld [vmem:[%s5 + $0x4] sm:$0xf]
      %v1076 = vld [vmem:[%s5 + $0x8] sm:$0xf]
      %v1077 = vld [vmem:[%s5 + $0xc] sm:$0xf]
      %v1078 = vld [vmem:[%s5 + $0x10] sm:$0xf]
      %v1079 = vld [vmem:[%s5 + $0x14] sm:$0xf]
      %v1080 = vld [vmem:[%s5 + $0x18] sm:$0xf]
      %v1081 = vld [vmem:[%s5 + $0x1c] sm:$0xf]
      %v1082 = vld [vmem:[%s5 + $0x20] sm:$0xf]
      %v1083 = vld [vmem:[%s5 + $0x24] sm:$0xf]
      %v1084 = vld [vmem:[%s5 + $0x28] sm:$0xf]
      %v1085 = vld [vmem:[%s5 + $0x2c] sm:$0xf]
      %v1086 = vld [vmem:[%s5 + $0x30] sm:$0xf]
      %v1087 = vld [vmem:[%s5 + $0x34] sm:$0xf]
      %v1088 = vld [vmem:[%s5 + $0x38] sm:$0xf]
      %v1089 = vld [vmem:[%s5 + $0x3c] sm:$0xf]
      %v1106 = vunpack.c.l.b16 %v1074
      %v1107 = vunpack.c.l.b16 %v1075
      %v1108 = vunpack.c.l.b16 %v1076
      %v1109 = vunpack.c.l.b16 %v1077
      %v1110 = vunpack.c.l.b16 %v1078
      %v1111 = vunpack.c.l.b16 %v1079
      %v1112 = vunpack.c.l.b16 %v1080
      %v1113 = vunpack.c.l.b16 %v1081
      %v1114 = vunpack.c.l.b16 %v1082
      %v1115 = vunpack.c.l.b16 %v1083
      %v1116 = vunpack.c.l.b16 %v1084
      %v1117 = vunpack.c.l.b16 %v1085
      %v1118 = vunpack.c.l.b16 %v1086
      %v1119 = vunpack.c.l.b16 %v1087
      %v1120 = vunpack.c.l.b16 %v1088
      %v1121 = vunpack.c.l.b16 %v1089
      %v1122 = vpack.c.b16 %v1107, %v1106
      %v1123 = vpack.c.b16 %v1109, %v1108
      %v1124 = vpack.c.b16 %v1111, %v1110
      %v1125 = vpack.c.b16 %v1113, %v1112
      %v1126 = vpack.c.b16 %v1115, %v1114
      %v1127 = vpack.c.b16 %v1117, %v1116
      %v1128 = vpack.c.b16 %v1119, %v1118
      %v1129 = vpack.c.b16 %v1121, %v1120
      %1138 = vmatprep.subr.bf16.mxu0 0
      %1139 = vmatpush1.bf16.msra.mxu0 %v1122
      %1140 = vmatprep.subr.bf16.mxu0 0
      %1141 = vmatpush1.bf16.msra.mxu0 %v1123
      %1142 = vmatprep.subr.bf16.mxu0 0
      %1143 = vmatpush1.bf16.msra.mxu0 %v1124
      %1144 = vmatprep.subr.bf16.mxu0 0
      %1145 = vmatpush1.bf16.msra.mxu0 %v1125
      %1146 = vmatprep.subr.bf16.mxu0 0
      %1147 = vmatpush1.bf16.msra.mxu0 %v1126
      %1148 = vmatprep.subr.bf16.mxu0 0
      %1149 = vmatpush1.bf16.msra.mxu0 %v1127
      %1150 = vmatprep.subr.bf16.mxu0 0
      %1151 = vmatpush1.bf16.msra.mxu0 %v1128
      %1152 = vmatprep.subr.bf16.mxu0 0
      %1153 = vmatpush1.bf16.msra.mxu0 %v1129
      %1154 = vmatprep.subr.bf16.mxu0 0
      %1155 = vmatpush1.bf16.msra.mxu0 0
      %1156 = vmatprep.subr.bf16.mxu0 0
      %1157 = vmatpush1.bf16.msra.mxu0 0
      %1158 = vmatprep.subr.bf16.mxu0 0
      %1159 = vmatpush1.bf16.msra.mxu0 0
      %1160 = vmatprep.subr.bf16.mxu0 0
      %1161 = vmatpush1.bf16.msra.mxu0 0
      %1162 = vmatprep.subr.bf16.mxu0 0
      %1163 = vmatpush1.bf16.msra.mxu0 0
      %1164 = vmatprep.subr.bf16.mxu0 0
      %1165 = vmatpush1.bf16.msra.mxu0 0
      %1166 = vmatprep.subr.bf16.mxu0 0
      %1167 = vmatpush1.bf16.msra.mxu0 0
      %1168 = vmatprep.subr.bf16.mxu0 0
      %1169 = vmatpush1.bf16.msra.mxu0 0
      %1170 = vmatprep.mubr.bf16.mxu0 0
      %1171 = vmatmul.mubr.bf16.gmra.mrb[0].mxu0 %v1073
      %v1172 = vpop.f32.mrb[0].mxu0
      %v1173 = vadd.f32 0.0, %v1172
      %v1174 = vpop.f32.mrb[0].mxu0
      %v1175 = vpop.f32.mrb[0].mxu0
      %v1176 = vpop.f32.mrb[0].mxu0
      %1177 = vdwg.mxu0
      %v1178 = vadd.f32 %v302, %v1173
      %1179 = vst [vmem:[%s300] sm:$0xff] %v1178
      %p1180 = scmp.lt.s32.totalorder %s19, 1
      %s1181 = scalar_select %p1180, %s19, 1
      %s1182 = smul.addr %s1181, 8
      %s1183 = scalar_lea.vmem %s8, %s1182
      // Predicated region
      $region53: #{transformer_lm_cnd_forward.5} parent=51 // pred_check
        %p1184 = pneg %p210
      $region54: #{transformer_lm_cnd_forward.5} parent=51 // pred_check_branch
        %1186 = sbr.rel (%p1184) target = $region56
      $region55: #{transformer_lm_cnd_forward.5} parent=51 // pred_region
        _
      $region56: #{transformer_lm_cnd_forward.5} parent=51 // pred_fallthru
        _
    $region52: #{transformer_lm_cnd_forward.5} parent=5 // pred_fallthru
      _
    %p1187 = scmp.le.s32.totalorder 2, %s14
    // Predicated region
    $region57: #{transformer_lm_cnd_forward.5} parent=5 // pred_check
      %p1188 = pneg %p1187
    $region58: #{transformer_lm_cnd_forward.5} parent=5 // pred_check_branch
      %1190 = sbr.rel (%p1188) target = $region60
    $region59: #{transformer_lm_cnd_forward.5} parent=5 // pred_region
      %s1191 = ssub.s32 %s14, 2
      // Predicated region
      $region61: #{transformer_lm_cnd_forward.5} parent=59 // pred_check
        %p1192 = pneg %p216
      $region62: #{transformer_lm_cnd_forward.5} parent=59 // pred_check_branch
        %1194 = sbr.rel (%p1192) target = $region64
      $region63: #{transformer_lm_cnd_forward.5} parent=59 // pred_region
        %p1195 = scmp.lt.s32.totalorder %s20, 1
        %s1196 = scalar_select %p1195, %s20, 1
        %s1197 = smul.addr %s1196, 8
        %s1198 = scalar_lea.vmem %s8, %s1197
      $region64: #{transformer_lm_cnd_forward.5} parent=59 // pred_fallthru
        _
    $region60: #{transformer_lm_cnd_forward.5} parent=5 // pred_fallthru
      _
  $region6: #{transformer_lm_cnd_forward.5} parent=0 // loop_footer
    %s18 = sadd.s32 1, %s14
  $region7: #{transformer_lm_cnd_forward.5} parent=0 // loop_footer_branch
    %13 = sbr.rel target = $region3
  $region8: #{transformer_lm_cnd_forward.5} parent=0 // loop_exit
    _

</llo_original>
